<compile_context>
chip_gen: v7x
topology: tpu7x:2x2x1
jax: 0.10.0
libtpu: 0.0.40
codegen_flags: <defaults>
</compile_context>

<pallas_src>
import functools

import jax
import jax.numpy as jnp
from jax import lax
from jax.experimental import pallas as pl
from jax.experimental.pallas import tpu as pltpu

# ----------------------------- tiny Camembert config -----------------------------
VOCAB = 100
HIDDEN = 128          # text_ft_dim
N_HEADS = 2
HEAD_DIM = HIDDEN // N_HEADS
FFN = 256
N_LAYERS = 2
MAX_POS = 40
PAD_IDX = 1
NUM_CLASSES = 4
CLS_PAD = 128         # lane-dense padded classifier output width
LN_EPS = 1e-5
GELU_C = 0.7978845608028654  # sqrt(2/pi)
NEG_INF = -1e9


# ----------------------------- fused Pallas kernel -----------------------------
def _fused_forward_kernel(
    ids_ref,                                # scalar-prefetch: (B*S,) int32, SMEM
    mask2_ref,                              # (B*S, B*S) f32 additive attention mask
    wemb_ref, pemb_ref, temb_ref,           # embedding tables, VMEM resident
    emb_g_ref, emb_b_ref,
    qkv_w_ref, qkv_b_ref, o_w_ref, o_b_ref, ln1_g_ref, ln1_b_ref,
    i_w_ref, i_b_ref, out_w_ref, out_b_ref, ln2_g_ref, ln2_b_ref,
    pool_w_ref, pool_b_ref, cls_w_ref,
    logits_ref, *, batch, seq,
):
    def layernorm(x, g, b):
        mu = jnp.mean(x, axis=-1, keepdims=True)
        var = jnp.mean((x - mu) ** 2, axis=-1, keepdims=True)
        return (x - mu) * lax.rsqrt(var + LN_EPS) * g + b

    def matmul(x_f32, w_bf16):
        # bf16 MXU inputs, f32 accumulation.
        return jnp.dot(x_f32.astype(jnp.bfloat16), w_bf16,
                       preferred_element_type=jnp.float32)

    # ---- embedding gather + RoBERTa position ids, fully in-kernel ----
    type_row = temb_ref[...]                               # (1, H); token_type_ids == 0
    rows = []
    for b in range(batch):
        count = 0                                          # per-sequence cumsum
        for s in range(seq):
            tid = ids_ref[b * seq + s]
            nonpad = (tid != PAD_IDX).astype(jnp.int32)
            count = count + nonpad
            pid = count * nonpad + PAD_IDX                 # pads stay at PAD_IDX
            rows.append(wemb_ref[tid] + pemb_ref[pid] + type_row)   # (1, H)
    h = jnp.concatenate(rows, axis=0)                      # (B*S, H) f32
    h = layernorm(h, emb_g_ref[...], emb_b_ref[...])

    mask2 = mask2_ref[...]                                 # (B*S, B*S) f32

    for layer in range(N_LAYERS):
        # ---- fused Q/K/V projection (1/sqrt(d) baked into the Q third) ----
        qkv = matmul(h, qkv_w_ref[layer]) + qkv_b_ref[layer]       # (B*S, 3H) f32
        qkv_bf = qkv.astype(jnp.bfloat16)                          # one cast / layer
        ow = o_w_ref[layer]                                        # (H, H) bf16

        # ---- block-diagonal attention over all batches at once, per head;
        #      head concat folded into the output projection ----
        attn_parts = []
        for hd in range(N_HEADS):
            c0 = hd * HEAD_DIM
            qh = qkv_bf[:, c0:c0 + HEAD_DIM]
            kh = qkv_bf[:, HIDDEN + c0:HIDDEN + c0 + HEAD_DIM]
            vh = qkv_bf[:, 2 * HIDDEN + c0:2 * HIDDEN + c0 + HEAD_DIM]
            # q @ k^T via contracting dims -> no explicit transpose.
            s = lax.dot_general(qh, kh, (((1,), (1,)), ((), ())),
                                preferred_element_type=jnp.float32)  # (BS, BS)
            s = s + mask2
            s = s - jnp.max(s, axis=-1, keepdims=True)
            p = jnp.exp(s)
            p = p * pl.reciprocal(jnp.sum(p, axis=-1, keepdims=True), approx=True)
            ctx = jnp.dot(p.astype(jnp.bfloat16), vh,
                          preferred_element_type=jnp.float32)        # (BS, D)
            attn_parts.append(
                jnp.dot(ctx.astype(jnp.bfloat16), ow[c0:c0 + HEAD_DIM, :],
                        preferred_element_type=jnp.float32))
        attn_out = sum(attn_parts) + o_b_ref[layer]
        h = layernorm(attn_out + h, ln1_g_ref[layer], ln1_b_ref[layer])

        # ---- FFN (GELU) + residual + LayerNorm; intermediate never leaves VMEM ----
        inter = matmul(h, i_w_ref[layer]) + i_b_ref[layer]           # (B*S, FFN) f32
        # TODO(synk): HF Camembert uses exact erf GELU; tanh approximation used here.
        inter = 0.5 * inter * (1.0 + jnp.tanh(
            GELU_C * (inter + 0.044715 * inter * inter * inter)))
        ffn_out = matmul(inter, out_w_ref[layer]) + out_b_ref[layer]
        h = layernorm(ffn_out + h, ln2_g_ref[layer], ln2_b_ref[layer])

    # ---- pooler over ALL rows (one MXU pass), then bias-free classifier.
    #      CLS rows are picked outside; output stays lane-dense (128 lanes). ----
    pooled = jnp.tanh(matmul(h, pool_w_ref[...]) + pool_b_ref[...])
    logits_ref[...] = matmul(pooled, cls_w_ref[...]).astype(logits_ref.dtype)


# ----------------------------- wrapper -----------------------------
def text_only_forward(kp, input_ids, attention_mask):
    B, S = input_ids.shape
    BS = B * S

    # Combined additive mask: key padding + cross-batch block-diagonal.
    ext = (1.0 - attention_mask.astype(jnp.float32)) * NEG_INF          # (B, S)
    bid = jnp.arange(BS, dtype=jnp.int32) // S
    same = bid[:, None] == bid[None, :]
    mask2 = jnp.where(same, jnp.broadcast_to(ext.reshape(1, BS), (BS, BS)), NEG_INF)

    args = (
        mask2,
        kp["word_emb"], kp["pos_emb"], kp["type_emb0"],
        kp["emb_ln_g"], kp["emb_ln_b"],
        kp["qkv_w"], kp["qkv_b"], kp["o_w"], kp["o_b"],
        kp["ln1_g"], kp["ln1_b"],
        kp["i_w"], kp["i_b"], kp["out_w"], kp["out_b"],
        kp["ln2_g"], kp["ln2_b"],
        kp["pooler_w"], kp["pooler_b"], kp["cls_w"],
    )

    def spec(a):
        zeros = (0,) * a.ndim
        return pl.BlockSpec(a.shape, lambda i, ids, _z=zeros: _z)

    kernel = functools.partial(_fused_forward_kernel, batch=B, seq=S)
    out = pl.pallas_call(
        kernel,
        out_shape=jax.ShapeDtypeStruct((BS, CLS_PAD), jnp.float32),
        grid_spec=pltpu.PrefetchScalarGridSpec(
            num_scalar_prefetch=1,
            grid=(1,),
            in_specs=[spec(a) for a in args],
            out_specs=pl.BlockSpec((BS, CLS_PAD), lambda i, ids: (0, 0)),
        ),
        compiler_params=pltpu.CompilerParams(
            dimension_semantics=("arbitrary",)),
    )(input_ids.reshape(-1).astype(jnp.int32), *args)

    # CLS row of each sequence, then the real classifier columns.
    return out[::S, :NUM_CLASSES]


# ----------------------------- params -----------------------------
def init_params(key):
    def nrm(k, shape):
        return 0.02 * jax.random.normal(k, shape, dtype=jnp.float32)

    n_keys = 5 + 6 * N_LAYERS           # 3 emb tables + pooler + cls + 6 per layer
    ki = iter(jax.random.split(key, n_keys))
    p = {
        "word_emb": nrm(next(ki), (VOCAB, HIDDEN)),
        "pos_emb": nrm(next(ki), (MAX_POS, HIDDEN)),
        "type_emb": nrm(next(ki), (2, HIDDEN)),
        "emb_ln_g": jnp.ones((1, HIDDEN), jnp.float32),
        "emb_ln_b": jnp.zeros((1, HIDDEN), jnp.float32),
        "pooler_w": nrm(next(ki), (HIDDEN, HIDDEN)),
        "pooler_b": jnp.zeros((1, HIDDEN), jnp.float32),
        "cls_w": nrm(next(ki), (HIDDEN, NUM_CLASSES)),
    }

    qkv_w, o_w, i_w, out_w = [], [], [], []
    for _ in range(N_LAYERS):
        q = nrm(next(ki), (HIDDEN, HIDDEN))
        k = nrm(next(ki), (HIDDEN, HIDDEN))
        v = nrm(next(ki), (HIDDEN, HIDDEN))
        qkv_w.append(jnp.concatenate([q, k, v], axis=1))   # fused [H, 3H]
        o_w.append(nrm(next(ki), (HIDDEN, HIDDEN)))
        i_w.append(nrm(next(ki), (HIDDEN, FFN)))
        out_w.append(nrm(next(ki), (FFN, HIDDEN)))

    p["qkv_w"] = jnp.stack(qkv_w)                                       # (L, H, 3H)
    p["qkv_b"] = jnp.zeros((N_LAYERS, 1, 3 * HIDDEN), jnp.float32)
    p["o_w"] = jnp.stack(o_w)                                           # (L, H, H)
    p["o_b"] = jnp.zeros((N_LAYERS, 1, HIDDEN), jnp.float32)
    p["ln1_g"] = jnp.ones((N_LAYERS, 1, HIDDEN), jnp.float32)
    p["ln1_b"] = jnp.zeros((N_LAYERS, 1, HIDDEN), jnp.float32)
    p["i_w"] = jnp.stack(i_w)                                           # (L, H, FFN)
    p["i_b"] = jnp.zeros((N_LAYERS, 1, FFN), jnp.float32)
    p["out_w"] = jnp.stack(out_w)                                       # (L, FFN, H)
    p["out_b"] = jnp.zeros((N_LAYERS, 1, HIDDEN), jnp.float32)
    p["ln2_g"] = jnp.ones((N_LAYERS, 1, HIDDEN), jnp.float32)
    p["ln2_b"] = jnp.zeros((N_LAYERS, 1, HIDDEN), jnp.float32)
    return p


def prepare_params(p):
    """One-time conversion of model params into kernel-ready arrays (outside jit)."""
    scale = 1.0 / (HEAD_DIM ** 0.5)
    bf16 = lambda a: a.astype(jnp.bfloat16)
    # Bake 1/sqrt(d) into the Q third of the fused QKV weight + bias.
    qkv_w = p["qkv_w"].at[:, :, :HIDDEN].multiply(scale)
    qkv_b = p["qkv_b"].at[:, :, :HIDDEN].multiply(scale)
    cls_pad = (jnp.zeros((HIDDEN, CLS_PAD), jnp.float32)
               .at[:, :NUM_CLASSES].set(p["cls_w"]))
    return {
        # 3-D embedding tables: dynamic row index lands on a leading dim.
        "word_emb": p["word_emb"].reshape(VOCAB, 1, HIDDEN),
        "pos_emb": p["pos_emb"].reshape(MAX_POS, 1, HIDDEN),
        "type_emb0": p["type_emb"][0:1],                    # token_type_ids == 0
        "emb_ln_g": p["emb_ln_g"], "emb_ln_b": p["emb_ln_b"],
        "qkv_w": bf16(qkv_w), "qkv_b": qkv_b,
        "o_w": bf16(p["o_w"]), "o_b": p["o_b"],
        "ln1_g": p["ln1_g"], "ln1_b": p["ln1_b"],
        "i_w": bf16(p["i_w"]), "i_b": p["i_b"],
        "out_w": bf16(p["out_w"]), "out_b": p["out_b"],
        "ln2_g": p["ln2_g"], "ln2_b": p["ln2_b"],
        "pooler_w": bf16(p["pooler_w"]), "pooler_b": p["pooler_b"],
        "cls_w": bf16(cls_pad),
    }


# ----------------------------- main -----------------------------
if __name__ == "__main__":
    key = jax.random.PRNGKey(0)
    pkey, dkey = jax.random.split(key)
    params = init_params(pkey)
    kparams = prepare_params(params)

    B, S = 2, 8
    input_ids = jax.random.randint(dkey, (B, S), 2, VOCAB, dtype=jnp.int32)
    attention_mask = jnp.ones((B, S), dtype=jnp.int32)
    # pad out last two tokens of second sequence
    input_ids = input_ids.at[1, 6:].set(PAD_IDX)
    attention_mask = attention_mask.at[1, 6:].set(0)

    logits = jax.jit(text_only_forward)(kparams, input_ids, attention_mask)
    jax.block_until_ready(logits)
    assert logits.shape == (B, NUM_CLASSES)
    print("KERNEL_OK")
</pallas_src>

<mosaic_0001>
module attributes {stable_mosaic.version = 11 : i64} {
  func.func @_fused_forward_kernel(%arg0: i32, %arg1: memref<16xi32, #tpu.memory_space<smem>>, %arg2: memref<16x16xf32, #tpu.memory_space<vmem>>, %arg3: memref<100x1x128xf32, #tpu.memory_space<vmem>>, %arg4: memref<40x1x128xf32, #tpu.memory_space<vmem>>, %arg5: memref<1x128xf32, #tpu.memory_space<vmem>>, %arg6: memref<1x128xf32, #tpu.memory_space<vmem>>, %arg7: memref<1x128xf32, #tpu.memory_space<vmem>>, %arg8: memref<2x128x384xbf16, #tpu.memory_space<vmem>>, %arg9: memref<2x1x384xf32, #tpu.memory_space<vmem>>, %arg10: memref<2x128x128xbf16, #tpu.memory_space<vmem>>, %arg11: memref<2x1x128xf32, #tpu.memory_space<vmem>>, %arg12: memref<2x1x128xf32, #tpu.memory_space<vmem>>, %arg13: memref<2x1x128xf32, #tpu.memory_space<vmem>>, %arg14: memref<2x128x256xbf16, #tpu.memory_space<vmem>>, %arg15: memref<2x1x256xf32, #tpu.memory_space<vmem>>, %arg16: memref<2x256x128xbf16, #tpu.memory_space<vmem>>, %arg17: memref<2x1x128xf32, #tpu.memory_space<vmem>>, %arg18: memref<2x1x128xf32, #tpu.memory_space<vmem>>, %arg19: memref<2x1x128xf32, #tpu.memory_space<vmem>>, %arg20: memref<128x128xbf16, #tpu.memory_space<vmem>>, %arg21: memref<1x128xf32, #tpu.memory_space<vmem>>, %arg22: memref<128x128xbf16, #tpu.memory_space<vmem>>, %arg23: memref<16x128xf32, #tpu.memory_space<vmem>>) attributes {dimension_semantics = [#tpu.dimension_semantics<arbitrary>], iteration_bounds = array<i64: 1>, scalar_prefetch = 1 : i64, scratch_operands = 0 : i64, tpu.core_type = #tpu.core_type<tc>, window_params = [{pipeline_mode = #tpu.pipeline_mode<synchronous>, transform_indices = @transform_0, window_bounds = array<i64: 16, 16>}, {pipeline_mode = #tpu.pipeline_mode<synchronous>, transform_indices = @transform_1, window_bounds = array<i64: 100, 1, 128>}, {pipeline_mode = #tpu.pipeline_mode<synchronous>, transform_indices = @transform_2, window_bounds = array<i64: 40, 1, 128>}, {pipeline_mode = #tpu.pipeline_mode<synchronous>, transform_indices = @transform_3, window_bounds = array<i64: 1, 128>}, {pipeline_mode = #tpu.pipeline_mode<synchronous>, transform_indices = @transform_4, window_bounds = array<i64: 1, 128>}, {pipeline_mode = #tpu.pipeline_mode<synchronous>, transform_indices = @transform_5, window_bounds = array<i64: 1, 128>}, {pipeline_mode = #tpu.pipeline_mode<synchronous>, transform_indices = @transform_6, window_bounds = array<i64: 2, 128, 384>}, {pipeline_mode = #tpu.pipeline_mode<synchronous>, transform_indices = @transform_7, window_bounds = array<i64: 2, 1, 384>}, {pipeline_mode = #tpu.pipeline_mode<synchronous>, transform_indices = @transform_8, window_bounds = array<i64: 2, 128, 128>}, {pipeline_mode = #tpu.pipeline_mode<synchronous>, transform_indices = @transform_9, window_bounds = array<i64: 2, 1, 128>}, {pipeline_mode = #tpu.pipeline_mode<synchronous>, transform_indices = @transform_10, window_bounds = array<i64: 2, 1, 128>}, {pipeline_mode = #tpu.pipeline_mode<synchronous>, transform_indices = @transform_11, window_bounds = array<i64: 2, 1, 128>}, {pipeline_mode = #tpu.pipeline_mode<synchronous>, transform_indices = @transform_12, window_bounds = array<i64: 2, 128, 256>}, {pipeline_mode = #tpu.pipeline_mode<synchronous>, transform_indices = @transform_13, window_bounds = array<i64: 2, 1, 256>}, {pipeline_mode = #tpu.pipeline_mode<synchronous>, transform_indices = @transform_14, window_bounds = array<i64: 2, 256, 128>}, {pipeline_mode = #tpu.pipeline_mode<synchronous>, transform_indices = @transform_15, window_bounds = array<i64: 2, 1, 128>}, {pipeline_mode = #tpu.pipeline_mode<synchronous>, transform_indices = @transform_16, window_bounds = array<i64: 2, 1, 128>}, {pipeline_mode = #tpu.pipeline_mode<synchronous>, transform_indices = @transform_17, window_bounds = array<i64: 2, 1, 128>}, {pipeline_mode = #tpu.pipeline_mode<synchronous>, transform_indices = @transform_18, window_bounds = array<i64: 128, 128>}, {pipeline_mode = #tpu.pipeline_mode<synchronous>, transform_indices = @transform_19, window_bounds = array<i64: 1, 128>}, {pipeline_mode = #tpu.pipeline_mode<synchronous>, transform_indices = @transform_20, window_bounds = array<i64: 128, 128>}, {pipeline_mode = #tpu.pipeline_mode<synchronous>, transform_indices = @transform_21, window_bounds = array<i64: 16, 128>}]} {
    %c0 = arith.constant 0 : index
    %c0_0 = arith.constant 0 : index
    %0 = vector.load %arg5[%c0, %c0_0] : memref<1x128xf32, #tpu.memory_space<vmem>>, vector<1x128xf32>
    %c0_1 = arith.constant 0 : index
    %1 = memref.load %arg1[%c0_1] : memref<16xi32, #tpu.memory_space<smem>>
    %c1_i32 = arith.constant 1 : i32
    %2 = arith.cmpi ne, %1, %c1_i32 : i32
    %3 = arith.extui %2 : i1 to i32
    %c0_i32 = arith.constant 0 : i32
    %4 = arith.addi %c0_i32, %3 : i32
    %5 = arith.muli %4, %3 : i32
    %c1_i32_2 = arith.constant 1 : i32
    %6 = arith.addi %5, %c1_i32_2 : i32
    %7 = arith.index_cast %1 : i32 to index
    %c0_3 = arith.constant 0 : index
    %c0_4 = arith.constant 0 : index
    %8 = vector.load %arg3[%7, %c0_3, %c0_4] : memref<100x1x128xf32, #tpu.memory_space<vmem>>, vector<1x1x128xf32>
    %9 = vector.shape_cast %8 : vector<1x1x128xf32> to vector<1x128xf32>
    %10 = arith.index_cast %6 : i32 to index
    %c0_5 = arith.constant 0 : index
    %c0_6 = arith.constant 0 : index
    %11 = vector.load %arg4[%10, %c0_5, %c0_6] : memref<40x1x128xf32, #tpu.memory_space<vmem>>, vector<1x1x128xf32>
    %12 = vector.shape_cast %11 : vector<1x1x128xf32> to vector<1x128xf32>
    %13 = arith.addf %9, %12 : vector<1x128xf32>
    %14 = arith.addf %13, %0 : vector<1x128xf32>
    %c1 = arith.constant 1 : index
    %15 = memref.load %arg1[%c1] : memref<16xi32, #tpu.memory_space<smem>>
    %c1_i32_7 = arith.constant 1 : i32
    %16 = arith.cmpi ne, %15, %c1_i32_7 : i32
    %17 = arith.extui %16 : i1 to i32
    %18 = arith.addi %4, %17 : i32
    %19 = arith.muli %18, %17 : i32
    %c1_i32_8 = arith.constant 1 : i32
    %20 = arith.addi %19, %c1_i32_8 : i32
    %21 = arith.index_cast %15 : i32 to index
    %c0_9 = arith.constant 0 : index
    %c0_10 = arith.constant 0 : index
    %22 = vector.load %arg3[%21, %c0_9, %c0_10] : memref<100x1x128xf32, #tpu.memory_space<vmem>>, vector<1x1x128xf32>
    %23 = vector.shape_cast %22 : vector<1x1x128xf32> to vector<1x128xf32>
    %24 = arith.index_cast %20 : i32 to index
    %c0_11 = arith.constant 0 : index
    %c0_12 = arith.constant 0 : index
    %25 = vector.load %arg4[%24, %c0_11, %c0_12] : memref<40x1x128xf32, #tpu.memory_space<vmem>>, vector<1x1x128xf32>
    %26 = vector.shape_cast %25 : vector<1x1x128xf32> to vector<1x128xf32>
    %27 = arith.addf %23, %26 : vector<1x128xf32>
    %28 = arith.addf %27, %0 : vector<1x128xf32>
    %c2 = arith.constant 2 : index
    %29 = memref.load %arg1[%c2] : memref<16xi32, #tpu.memory_space<smem>>
    %c1_i32_13 = arith.constant 1 : i32
    %30 = arith.cmpi ne, %29, %c1_i32_13 : i32
    %31 = arith.extui %30 : i1 to i32
    %32 = arith.addi %18, %31 : i32
    %33 = arith.muli %32, %31 : i32
    %c1_i32_14 = arith.constant 1 : i32
    %34 = arith.addi %33, %c1_i32_14 : i32
    %35 = arith.index_cast %29 : i32 to index
    %c0_15 = arith.constant 0 : index
    %c0_16 = arith.constant 0 : index
    %36 = vector.load %arg3[%35, %c0_15, %c0_16] : memref<100x1x128xf32, #tpu.memory_space<vmem>>, vector<1x1x128xf32>
    %37 = vector.shape_cast %36 : vector<1x1x128xf32> to vector<1x128xf32>
    %38 = arith.index_cast %34 : i32 to index
    %c0_17 = arith.constant 0 : index
    %c0_18 = arith.constant 0 : index
    %39 = vector.load %arg4[%38, %c0_17, %c0_18] : memref<40x1x128xf32, #tpu.memory_space<vmem>>, vector<1x1x128xf32>
    %40 = vector.shape_cast %39 : vector<1x1x128xf32> to vector<1x128xf32>
    %41 = arith.addf %37, %40 : vector<1x128xf32>
    %42 = arith.addf %41, %0 : vector<1x128xf32>
    %c3 = arith.constant 3 : index
    %43 = memref.load %arg1[%c3] : memref<16xi32, #tpu.memory_space<smem>>
    %c1_i32_19 = arith.constant 1 : i32
    %44 = arith.cmpi ne, %43, %c1_i32_19 : i32
    %45 = arith.extui %44 : i1 to i32
    %46 = arith.addi %32, %45 : i32
    %47 = arith.muli %46, %45 : i32
    %c1_i32_20 = arith.constant 1 : i32
    %48 = arith.addi %47, %c1_i32_20 : i32
    %49 = arith.index_cast %43 : i32 to index
    %c0_21 = arith.constant 0 : index
    %c0_22 = arith.constant 0 : index
    %50 = vector.load %arg3[%49, %c0_21, %c0_22] : memref<100x1x128xf32, #tpu.memory_space<vmem>>, vector<1x1x128xf32>
    %51 = vector.shape_cast %50 : vector<1x1x128xf32> to vector<1x128xf32>
    %52 = arith.index_cast %48 : i32 to index
    %c0_23 = arith.constant 0 : index
    %c0_24 = arith.constant 0 : index
    %53 = vector.load %arg4[%52, %c0_23, %c0_24] : memref<40x1x128xf32, #tpu.memory_space<vmem>>, vector<1x1x128xf32>
    %54 = vector.shape_cast %53 : vector<1x1x128xf32> to vector<1x128xf32>
    %55 = arith.addf %51, %54 : vector<1x128xf32>
    %56 = arith.addf %55, %0 : vector<1x128xf32>
    %c4 = arith.constant 4 : index
    %57 = memref.load %arg1[%c4] : memref<16xi32, #tpu.memory_space<smem>>
    %c1_i32_25 = arith.constant 1 : i32
    %58 = arith.cmpi ne, %57, %c1_i32_25 : i32
    %59 = arith.extui %58 : i1 to i32
    %60 = arith.addi %46, %59 : i32
    %61 = arith.muli %60, %59 : i32
    %c1_i32_26 = arith.constant 1 : i32
    %62 = arith.addi %61, %c1_i32_26 : i32
    %63 = arith.index_cast %57 : i32 to index
    %c0_27 = arith.constant 0 : index
    %c0_28 = arith.constant 0 : index
    %64 = vector.load %arg3[%63, %c0_27, %c0_28] : memref<100x1x128xf32, #tpu.memory_space<vmem>>, vector<1x1x128xf32>
    %65 = vector.shape_cast %64 : vector<1x1x128xf32> to vector<1x128xf32>
    %66 = arith.index_cast %62 : i32 to index
    %c0_29 = arith.constant 0 : index
    %c0_30 = arith.constant 0 : index
    %67 = vector.load %arg4[%66, %c0_29, %c0_30] : memref<40x1x128xf32, #tpu.memory_space<vmem>>, vector<1x1x128xf32>
    %68 = vector.shape_cast %67 : vector<1x1x128xf32> to vector<1x128xf32>
    %69 = arith.addf %65, %68 : vector<1x128xf32>
    %70 = arith.addf %69, %0 : vector<1x128xf32>
    %c5 = arith.constant 5 : index
    %71 = memref.load %arg1[%c5] : memref<16xi32, #tpu.memory_space<smem>>
    %c1_i32_31 = arith.constant 1 : i32
    %72 = arith.cmpi ne, %71, %c1_i32_31 : i32
    %73 = arith.extui %72 : i1 to i32
    %74 = arith.addi %60, %73 : i32
    %75 = arith.muli %74, %73 : i32
    %c1_i32_32 = arith.constant 1 : i32
    %76 = arith.addi %75, %c1_i32_32 : i32
    %77 = arith.index_cast %71 : i32 to index
    %c0_33 = arith.constant 0 : index
    %c0_34 = arith.constant 0 : index
    %78 = vector.load %arg3[%77, %c0_33, %c0_34] : memref<100x1x128xf32, #tpu.memory_space<vmem>>, vector<1x1x128xf32>
    %79 = vector.shape_cast %78 : vector<1x1x128xf32> to vector<1x128xf32>
    %80 = arith.index_cast %76 : i32 to index
    %c0_35 = arith.constant 0 : index
    %c0_36 = arith.constant 0 : index
    %81 = vector.load %arg4[%80, %c0_35, %c0_36] : memref<40x1x128xf32, #tpu.memory_space<vmem>>, vector<1x1x128xf32>
    %82 = vector.shape_cast %81 : vector<1x1x128xf32> to vector<1x128xf32>
    %83 = arith.addf %79, %82 : vector<1x128xf32>
    %84 = arith.addf %83, %0 : vector<1x128xf32>
    %c6 = arith.constant 6 : index
    %85 = memref.load %arg1[%c6] : memref<16xi32, #tpu.memory_space<smem>>
    %c1_i32_37 = arith.constant 1 : i32
    %86 = arith.cmpi ne, %85, %c1_i32_37 : i32
    %87 = arith.extui %86 : i1 to i32
    %88 = arith.addi %74, %87 : i32
    %89 = arith.muli %88, %87 : i32
    %c1_i32_38 = arith.constant 1 : i32
    %90 = arith.addi %89, %c1_i32_38 : i32
    %91 = arith.index_cast %85 : i32 to index
    %c0_39 = arith.constant 0 : index
    %c0_40 = arith.constant 0 : index
    %92 = vector.load %arg3[%91, %c0_39, %c0_40] : memref<100x1x128xf32, #tpu.memory_space<vmem>>, vector<1x1x128xf32>
    %93 = vector.shape_cast %92 : vector<1x1x128xf32> to vector<1x128xf32>
    %94 = arith.index_cast %90 : i32 to index
    %c0_41 = arith.constant 0 : index
    %c0_42 = arith.constant 0 : index
    %95 = vector.load %arg4[%94, %c0_41, %c0_42] : memref<40x1x128xf32, #tpu.memory_space<vmem>>, vector<1x1x128xf32>
    %96 = vector.shape_cast %95 : vector<1x1x128xf32> to vector<1x128xf32>
    %97 = arith.addf %93, %96 : vector<1x128xf32>
    %98 = arith.addf %97, %0 : vector<1x128xf32>
    %c7 = arith.constant 7 : index
    %99 = memref.load %arg1[%c7] : memref<16xi32, #tpu.memory_space<smem>>
    %c1_i32_43 = arith.constant 1 : i32
    %100 = arith.cmpi ne, %99, %c1_i32_43 : i32
    %101 = arith.extui %100 : i1 to i32
    %102 = arith.addi %88, %101 : i32
    %103 = arith.muli %102, %101 : i32
    %c1_i32_44 = arith.constant 1 : i32
    %104 = arith.addi %103, %c1_i32_44 : i32
    %105 = arith.index_cast %99 : i32 to index
    %c0_45 = arith.constant 0 : index
    %c0_46 = arith.constant 0 : index
    %106 = vector.load %arg3[%105, %c0_45, %c0_46] : memref<100x1x128xf32, #tpu.memory_space<vmem>>, vector<1x1x128xf32>
    %107 = vector.shape_cast %106 : vector<1x1x128xf32> to vector<1x128xf32>
    %108 = arith.index_cast %104 : i32 to index
    %c0_47 = arith.constant 0 : index
    %c0_48 = arith.constant 0 : index
    %109 = vector.load %arg4[%108, %c0_47, %c0_48] : memref<40x1x128xf32, #tpu.memory_space<vmem>>, vector<1x1x128xf32>
    %110 = vector.shape_cast %109 : vector<1x1x128xf32> to vector<1x128xf32>
    %111 = arith.addf %107, %110 : vector<1x128xf32>
    %112 = arith.addf %111, %0 : vector<1x128xf32>
    %c8 = arith.constant 8 : index
    %113 = memref.load %arg1[%c8] : memref<16xi32, #tpu.memory_space<smem>>
    %c1_i32_49 = arith.constant 1 : i32
    %114 = arith.cmpi ne, %113, %c1_i32_49 : i32
    %115 = arith.extui %114 : i1 to i32
    %c0_i32_50 = arith.constant 0 : i32
    %116 = arith.addi %c0_i32_50, %115 : i32
    %117 = arith.muli %116, %115 : i32
    %c1_i32_51 = arith.constant 1 : i32
    %118 = arith.addi %117, %c1_i32_51 : i32
    %119 = arith.index_cast %113 : i32 to index
    %c0_52 = arith.constant 0 : index
    %c0_53 = arith.constant 0 : index
    %120 = vector.load %arg3[%119, %c0_52, %c0_53] : memref<100x1x128xf32, #tpu.memory_space<vmem>>, vector<1x1x128xf32>
    %121 = vector.shape_cast %120 : vector<1x1x128xf32> to vector<1x128xf32>
    %122 = arith.index_cast %118 : i32 to index
    %c0_54 = arith.constant 0 : index
    %c0_55 = arith.constant 0 : index
    %123 = vector.load %arg4[%122, %c0_54, %c0_55] : memref<40x1x128xf32, #tpu.memory_space<vmem>>, vector<1x1x128xf32>
    %124 = vector.shape_cast %123 : vector<1x1x128xf32> to vector<1x128xf32>
    %125 = arith.addf %121, %124 : vector<1x128xf32>
    %126 = arith.addf %125, %0 : vector<1x128xf32>
    %c9 = arith.constant 9 : index
    %127 = memref.load %arg1[%c9] : memref<16xi32, #tpu.memory_space<smem>>
    %c1_i32_56 = arith.constant 1 : i32
    %128 = arith.cmpi ne, %127, %c1_i32_56 : i32
    %129 = arith.extui %128 : i1 to i32
    %130 = arith.addi %116, %129 : i32
    %131 = arith.muli %130, %129 : i32
    %c1_i32_57 = arith.constant 1 : i32
    %132 = arith.addi %131, %c1_i32_57 : i32
    %133 = arith.index_cast %127 : i32 to index
    %c0_58 = arith.constant 0 : index
    %c0_59 = arith.constant 0 : index
    %134 = vector.load %arg3[%133, %c0_58, %c0_59] : memref<100x1x128xf32, #tpu.memory_space<vmem>>, vector<1x1x128xf32>
    %135 = vector.shape_cast %134 : vector<1x1x128xf32> to vector<1x128xf32>
    %136 = arith.index_cast %132 : i32 to index
    %c0_60 = arith.constant 0 : index
    %c0_61 = arith.constant 0 : index
    %137 = vector.load %arg4[%136, %c0_60, %c0_61] : memref<40x1x128xf32, #tpu.memory_space<vmem>>, vector<1x1x128xf32>
    %138 = vector.shape_cast %137 : vector<1x1x128xf32> to vector<1x128xf32>
    %139 = arith.addf %135, %138 : vector<1x128xf32>
    %140 = arith.addf %139, %0 : vector<1x128xf32>
    %c10 = arith.constant 10 : index
    %141 = memref.load %arg1[%c10] : memref<16xi32, #tpu.memory_space<smem>>
    %c1_i32_62 = arith.constant 1 : i32
    %142 = arith.cmpi ne, %141, %c1_i32_62 : i32
    %143 = arith.extui %142 : i1 to i32
    %144 = arith.addi %130, %143 : i32
    %145 = arith.muli %144, %143 : i32
    %c1_i32_63 = arith.constant 1 : i32
    %146 = arith.addi %145, %c1_i32_63 : i32
    %147 = arith.index_cast %141 : i32 to index
    %c0_64 = arith.constant 0 : index
    %c0_65 = arith.constant 0 : index
    %148 = vector.load %arg3[%147, %c0_64, %c0_65] : memref<100x1x128xf32, #tpu.memory_space<vmem>>, vector<1x1x128xf32>
    %149 = vector.shape_cast %148 : vector<1x1x128xf32> to vector<1x128xf32>
    %150 = arith.index_cast %146 : i32 to index
    %c0_66 = arith.constant 0 : index
    %c0_67 = arith.constant 0 : index
    %151 = vector.load %arg4[%150, %c0_66, %c0_67] : memref<40x1x128xf32, #tpu.memory_space<vmem>>, vector<1x1x128xf32>
    %152 = vector.shape_cast %151 : vector<1x1x128xf32> to vector<1x128xf32>
    %153 = arith.addf %149, %152 : vector<1x128xf32>
    %154 = arith.addf %153, %0 : vector<1x128xf32>
    %c11 = arith.constant 11 : index
    %155 = memref.load %arg1[%c11] : memref<16xi32, #tpu.memory_space<smem>>
    %c1_i32_68 = arith.constant 1 : i32
    %156 = arith.cmpi ne, %155, %c1_i32_68 : i32
    %157 = arith.extui %156 : i1 to i32
    %158 = arith.addi %144, %157 : i32
    %159 = arith.muli %158, %157 : i32
    %c1_i32_69 = arith.constant 1 : i32
    %160 = arith.addi %159, %c1_i32_69 : i32
    %161 = arith.index_cast %155 : i32 to index
    %c0_70 = arith.constant 0 : index
    %c0_71 = arith.constant 0 : index
    %162 = vector.load %arg3[%161, %c0_70, %c0_71] : memref<100x1x128xf32, #tpu.memory_space<vmem>>, vector<1x1x128xf32>
    %163 = vector.shape_cast %162 : vector<1x1x128xf32> to vector<1x128xf32>
    %164 = arith.index_cast %160 : i32 to index
    %c0_72 = arith.constant 0 : index
    %c0_73 = arith.constant 0 : index
    %165 = vector.load %arg4[%164, %c0_72, %c0_73] : memref<40x1x128xf32, #tpu.memory_space<vmem>>, vector<1x1x128xf32>
    %166 = vector.shape_cast %165 : vector<1x1x128xf32> to vector<1x128xf32>
    %167 = arith.addf %163, %166 : vector<1x128xf32>
    %168 = arith.addf %167, %0 : vector<1x128xf32>
    %c12 = arith.constant 12 : index
    %169 = memref.load %arg1[%c12] : memref<16xi32, #tpu.memory_space<smem>>
    %c1_i32_74 = arith.constant 1 : i32
    %170 = arith.cmpi ne, %169, %c1_i32_74 : i32
    %171 = arith.extui %170 : i1 to i32
    %172 = arith.addi %158, %171 : i32
    %173 = arith.muli %172, %171 : i32
    %c1_i32_75 = arith.constant 1 : i32
    %174 = arith.addi %173, %c1_i32_75 : i32
    %175 = arith.index_cast %169 : i32 to index
    %c0_76 = arith.constant 0 : index
    %c0_77 = arith.constant 0 : index
    %176 = vector.load %arg3[%175, %c0_76, %c0_77] : memref<100x1x128xf32, #tpu.memory_space<vmem>>, vector<1x1x128xf32>
    %177 = vector.shape_cast %176 : vector<1x1x128xf32> to vector<1x128xf32>
    %178 = arith.index_cast %174 : i32 to index
    %c0_78 = arith.constant 0 : index
    %c0_79 = arith.constant 0 : index
    %179 = vector.load %arg4[%178, %c0_78, %c0_79] : memref<40x1x128xf32, #tpu.memory_space<vmem>>, vector<1x1x128xf32>
    %180 = vector.shape_cast %179 : vector<1x1x128xf32> to vector<1x128xf32>
    %181 = arith.addf %177, %180 : vector<1x128xf32>
    %182 = arith.addf %181, %0 : vector<1x128xf32>
    %c13 = arith.constant 13 : index
    %183 = memref.load %arg1[%c13] : memref<16xi32, #tpu.memory_space<smem>>
    %c1_i32_80 = arith.constant 1 : i32
    %184 = arith.cmpi ne, %183, %c1_i32_80 : i32
    %185 = arith.extui %184 : i1 to i32
    %186 = arith.addi %172, %185 : i32
    %187 = arith.muli %186, %185 : i32
    %c1_i32_81 = arith.constant 1 : i32
    %188 = arith.addi %187, %c1_i32_81 : i32
    %189 = arith.index_cast %183 : i32 to index
    %c0_82 = arith.constant 0 : index
    %c0_83 = arith.constant 0 : index
    %190 = vector.load %arg3[%189, %c0_82, %c0_83] : memref<100x1x128xf32, #tpu.memory_space<vmem>>, vector<1x1x128xf32>
    %191 = vector.shape_cast %190 : vector<1x1x128xf32> to vector<1x128xf32>
    %192 = arith.index_cast %188 : i32 to index
    %c0_84 = arith.constant 0 : index
    %c0_85 = arith.constant 0 : index
    %193 = vector.load %arg4[%192, %c0_84, %c0_85] : memref<40x1x128xf32, #tpu.memory_space<vmem>>, vector<1x1x128xf32>
    %194 = vector.shape_cast %193 : vector<1x1x128xf32> to vector<1x128xf32>
    %195 = arith.addf %191, %194 : vector<1x128xf32>
    %196 = arith.addf %195, %0 : vector<1x128xf32>
    %c14 = arith.constant 14 : index
    %197 = memref.load %arg1[%c14] : memref<16xi32, #tpu.memory_space<smem>>
    %c1_i32_86 = arith.constant 1 : i32
    %198 = arith.cmpi ne, %197, %c1_i32_86 : i32
    %199 = arith.extui %198 : i1 to i32
    %200 = arith.addi %186, %199 : i32
    %201 = arith.muli %200, %199 : i32
    %c1_i32_87 = arith.constant 1 : i32
    %202 = arith.addi %201, %c1_i32_87 : i32
    %203 = arith.index_cast %197 : i32 to index
    %c0_88 = arith.constant 0 : index
    %c0_89 = arith.constant 0 : index
    %204 = vector.load %arg3[%203, %c0_88, %c0_89] : memref<100x1x128xf32, #tpu.memory_space<vmem>>, vector<1x1x128xf32>
    %205 = vector.shape_cast %204 : vector<1x1x128xf32> to vector<1x128xf32>
    %206 = arith.index_cast %202 : i32 to index
    %c0_90 = arith.constant 0 : index
    %c0_91 = arith.constant 0 : index
    %207 = vector.load %arg4[%206, %c0_90, %c0_91] : memref<40x1x128xf32, #tpu.memory_space<vmem>>, vector<1x1x128xf32>
    %208 = vector.shape_cast %207 : vector<1x1x128xf32> to vector<1x128xf32>
    %209 = arith.addf %205, %208 : vector<1x128xf32>
    %210 = arith.addf %209, %0 : vector<1x128xf32>
    %c15 = arith.constant 15 : index
    %211 = memref.load %arg1[%c15] : memref<16xi32, #tpu.memory_space<smem>>
    %c1_i32_92 = arith.constant 1 : i32
    %212 = arith.cmpi ne, %211, %c1_i32_92 : i32
    %213 = arith.extui %212 : i1 to i32
    %214 = arith.addi %200, %213 : i32
    %215 = arith.muli %214, %213 : i32
    %c1_i32_93 = arith.constant 1 : i32
    %216 = arith.addi %215, %c1_i32_93 : i32
    %217 = arith.index_cast %211 : i32 to index
    %c0_94 = arith.constant 0 : index
    %c0_95 = arith.constant 0 : index
    %218 = vector.load %arg3[%217, %c0_94, %c0_95] : memref<100x1x128xf32, #tpu.memory_space<vmem>>, vector<1x1x128xf32>
    %219 = vector.shape_cast %218 : vector<1x1x128xf32> to vector<1x128xf32>
    %220 = arith.index_cast %216 : i32 to index
    %c0_96 = arith.constant 0 : index
    %c0_97 = arith.constant 0 : index
    %221 = vector.load %arg4[%220, %c0_96, %c0_97] : memref<40x1x128xf32, #tpu.memory_space<vmem>>, vector<1x1x128xf32>
    %222 = vector.shape_cast %221 : vector<1x1x128xf32> to vector<1x128xf32>
    %223 = arith.addf %219, %222 : vector<1x128xf32>
    %224 = arith.addf %223, %0 : vector<1x128xf32>
    %225 = tpu.concatenate %14, %28, %42, %56, %70, %84, %98, %112, %126, %140, %154, %168, %182, %196, %210, %224 in 0 : vector<1x128xf32>, vector<1x128xf32>, vector<1x128xf32>, vector<1x128xf32>, vector<1x128xf32>, vector<1x128xf32>, vector<1x128xf32>, vector<1x128xf32>, vector<1x128xf32>, vector<1x128xf32>, vector<1x128xf32>, vector<1x128xf32>, vector<1x128xf32>, vector<1x128xf32>, vector<1x128xf32>, vector<1x128xf32> -> vector<16x128xf32>
    %c0_98 = arith.constant 0 : index
    %c0_99 = arith.constant 0 : index
    %226 = vector.load %arg6[%c0_98, %c0_99] : memref<1x128xf32, #tpu.memory_space<vmem>>, vector<1x128xf32>
    %c0_100 = arith.constant 0 : index
    %c0_101 = arith.constant 0 : index
    %227 = vector.load %arg7[%c0_100, %c0_101] : memref<1x128xf32, #tpu.memory_space<vmem>>, vector<1x128xf32>
    %cst = arith.constant dense<0.000000e+00> : vector<16xf32>
    %228 = vector.multi_reduction <add>, %225, %cst [1] : vector<16x128xf32> to vector<16xf32>
    %229 = vector.shape_cast %228 : vector<16xf32> to vector<16x1xf32>
    %cst_102 = arith.constant 1.280000e+02 : f32
    %230 = vector.broadcast %cst_102 : f32 to vector<16x1xf32>
    %231 = arith.divf %229, %230 : vector<16x1xf32>
    %232 = vector.broadcast %231 : vector<16x1xf32> to vector<16x128xf32>
    %233 = arith.subf %225, %232 : vector<16x128xf32>
    %234 = arith.mulf %233, %233 : vector<16x128xf32>
    %cst_103 = arith.constant dense<0.000000e+00> : vector<16xf32>
    %235 = vector.multi_reduction <add>, %234, %cst_103 [1] : vector<16x128xf32> to vector<16xf32>
    %236 = vector.shape_cast %235 : vector<16xf32> to vector<16x1xf32>
    %cst_104 = arith.constant 1.280000e+02 : f32
    %237 = vector.broadcast %cst_104 : f32 to vector<16x1xf32>
    %238 = arith.divf %236, %237 : vector<16x1xf32>
    %239 = vector.broadcast %231 : vector<16x1xf32> to vector<16x128xf32>
    %240 = arith.subf %225, %239 : vector<16x128xf32>
    %cst_105 = arith.constant 9.99999974E-6 : f32
    %241 = vector.broadcast %cst_105 : f32 to vector<16x1xf32>
    %242 = arith.addf %238, %241 : vector<16x1xf32>
    %243 = math.rsqrt %242 : vector<16x1xf32>
    %244 = vector.broadcast %243 : vector<16x1xf32> to vector<16x128xf32>
    %245 = arith.mulf %240, %244 : vector<16x128xf32>
    %246 = vector.broadcast %226 : vector<1x128xf32> to vector<16x128xf32>
    %247 = arith.mulf %245, %246 : vector<16x128xf32>
    %248 = vector.broadcast %227 : vector<1x128xf32> to vector<16x128xf32>
    %249 = arith.addf %247, %248 : vector<16x128xf32>
    %c0_106 = arith.constant 0 : index
    %c0_107 = arith.constant 0 : index
    %250 = vector.load %arg2[%c0_106, %c0_107] : memref<16x16xf32, #tpu.memory_space<vmem>>, vector<16x16xf32>
    %c0_108 = arith.constant 0 : index
    %c0_109 = arith.constant 0 : index
    %c0_110 = arith.constant 0 : index
    %251 = vector.load %arg8[%c0_108, %c0_109, %c0_110] : memref<2x128x384xbf16, #tpu.memory_space<vmem>>, vector<1x128x384xbf16>
    %252 = vector.shape_cast %251 : vector<1x128x384xbf16> to vector<128x384xbf16>
    %253 = arith.truncf %249 : vector<16x128xf32> to vector<16x128xbf16>
    %cst_111 = arith.constant dense<0.000000e+00> : vector<16x384xf32>
    %254 = tpu.matmul %253, %252, %cst_111 {dimension_numbers = #tpu.dot_dimension_numbers<[1], [0], [0], [1], [0, 0, 1, 1], [], []>} : vector<16x128xbf16>, vector<128x384xbf16>, vector<16x384xf32> -> vector<16x384xf32>
    %c0_112 = arith.constant 0 : index
    %c0_113 = arith.constant 0 : index
    %c0_114 = arith.constant 0 : index
    %255 = vector.load %arg9[%c0_112, %c0_113, %c0_114] : memref<2x1x384xf32, #tpu.memory_space<vmem>>, vector<1x1x384xf32>
    %256 = vector.shape_cast %255 : vector<1x1x384xf32> to vector<1x384xf32>
    %257 = vector.broadcast %256 : vector<1x384xf32> to vector<16x384xf32>
    %258 = arith.addf %254, %257 : vector<16x384xf32>
    %259 = arith.truncf %258 : vector<16x384xf32> to vector<16x384xbf16>
    %c0_115 = arith.constant 0 : index
    %c0_116 = arith.constant 0 : index
    %c0_117 = arith.constant 0 : index
    %260 = vector.load %arg10[%c0_115, %c0_116, %c0_117] : memref<2x128x128xbf16, #tpu.memory_space<vmem>>, vector<1x128x128xbf16>
    %261 = vector.shape_cast %260 : vector<1x128x128xbf16> to vector<128x128xbf16>
    %262 = vector.extract_strided_slice %259 {offsets = [0, 0], sizes = [16, 64], strides = [1, 1]} : vector<16x384xbf16> to vector<16x64xbf16>
    %263 = vector.extract_strided_slice %259 {offsets = [0, 128], sizes = [16, 64], strides = [1, 1]} : vector<16x384xbf16> to vector<16x64xbf16>
    %264 = vector.extract_strided_slice %259 {offsets = [0, 256], sizes = [16, 64], strides = [1, 1]} : vector<16x384xbf16> to vector<16x64xbf16>
    %cst_118 = arith.constant dense<0.000000e+00> : vector<16x16xf32>
    %265 = tpu.matmul %262, %263, %cst_118 {dimension_numbers = #tpu.dot_dimension_numbers<[1], [1], [0], [0], [0, 0, 1, 0], [], []>} : vector<16x64xbf16>, vector<16x64xbf16>, vector<16x16xf32> -> vector<16x16xf32>
    %266 = arith.addf %265, %250 : vector<16x16xf32>
    %cst_119 = arith.constant dense<0xFF800000> : vector<16xf32>
    %267 = vector.multi_reduction <maximumf>, %266, %cst_119 [1] : vector<16x16xf32> to vector<16xf32>
    %268 = vector.shape_cast %267 : vector<16xf32> to vector<16x1xf32>
    %269 = vector.broadcast %268 : vector<16x1xf32> to vector<16x16xf32>
    %270 = arith.subf %266, %269 : vector<16x16xf32>
    %271 = math.exp %270 : vector<16x16xf32>
    %cst_120 = arith.constant dense<0.000000e+00> : vector<16xf32>
    %272 = vector.multi_reduction <add>, %271, %cst_120 [1] : vector<16x16xf32> to vector<16xf32>
    %273 = vector.shape_cast %272 : vector<16xf32> to vector<16x1xf32>
    %274 = tpu.reciprocal %273 {approx = true} : vector<16x1xf32> -> vector<16x1xf32>
    %275 = vector.broadcast %274 : vector<16x1xf32> to vector<16x16xf32>
    %276 = arith.mulf %271, %275 : vector<16x16xf32>
    %277 = arith.truncf %276 : vector<16x16xf32> to vector<16x16xbf16>
    %cst_121 = arith.constant dense<0.000000e+00> : vector<16x64xf32>
    %278 = tpu.matmul %277, %264, %cst_121 {dimension_numbers = #tpu.dot_dimension_numbers<[1], [0], [0], [1], [0, 0, 1, 1], [], []>} : vector<16x16xbf16>, vector<16x64xbf16>, vector<16x64xf32> -> vector<16x64xf32>
    %279 = arith.truncf %278 : vector<16x64xf32> to vector<16x64xbf16>
    %280 = vector.extract_strided_slice %261 {offsets = [0, 0], sizes = [64, 128], strides = [1, 1]} : vector<128x128xbf16> to vector<64x128xbf16>
    %cst_122 = arith.constant dense<0.000000e+00> : vector<16x128xf32>
    %281 = tpu.matmul %279, %280, %cst_122 {dimension_numbers = #tpu.dot_dimension_numbers<[1], [0], [0], [1], [0, 0, 1, 1], [], []>} : vector<16x64xbf16>, vector<64x128xbf16>, vector<16x128xf32> -> vector<16x128xf32>
    %282 = vector.extract_strided_slice %259 {offsets = [0, 64], sizes = [16, 64], strides = [1, 1]} : vector<16x384xbf16> to vector<16x64xbf16>
    %283 = vector.extract_strided_slice %259 {offsets = [0, 192], sizes = [16, 64], strides = [1, 1]} : vector<16x384xbf16> to vector<16x64xbf16>
    %284 = vector.extract_strided_slice %259 {offsets = [0, 320], sizes = [16, 64], strides = [1, 1]} : vector<16x384xbf16> to vector<16x64xbf16>
    %cst_123 = arith.constant dense<0.000000e+00> : vector<16x16xf32>
    %285 = tpu.matmul %282, %283, %cst_123 {dimension_numbers = #tpu.dot_dimension_numbers<[1], [1], [0], [0], [0, 0, 1, 0], [], []>} : vector<16x64xbf16>, vector<16x64xbf16>, vector<16x16xf32> -> vector<16x16xf32>
    %286 = arith.addf %285, %250 : vector<16x16xf32>
    %cst_124 = arith.constant dense<0xFF800000> : vector<16xf32>
    %287 = vector.multi_reduction <maximumf>, %286, %cst_124 [1] : vector<16x16xf32> to vector<16xf32>
    %288 = vector.shape_cast %287 : vector<16xf32> to vector<16x1xf32>
    %289 = vector.broadcast %288 : vector<16x1xf32> to vector<16x16xf32>
    %290 = arith.subf %286, %289 : vector<16x16xf32>
    %291 = math.exp %290 : vector<16x16xf32>
    %cst_125 = arith.constant dense<0.000000e+00> : vector<16xf32>
    %292 = vector.multi_reduction <add>, %291, %cst_125 [1] : vector<16x16xf32> to vector<16xf32>
    %293 = vector.shape_cast %292 : vector<16xf32> to vector<16x1xf32>
    %294 = tpu.reciprocal %293 {approx = true} : vector<16x1xf32> -> vector<16x1xf32>
    %295 = vector.broadcast %294 : vector<16x1xf32> to vector<16x16xf32>
    %296 = arith.mulf %291, %295 : vector<16x16xf32>
    %297 = arith.truncf %296 : vector<16x16xf32> to vector<16x16xbf16>
    %cst_126 = arith.constant dense<0.000000e+00> : vector<16x64xf32>
    %298 = tpu.matmul %297, %284, %cst_126 {dimension_numbers = #tpu.dot_dimension_numbers<[1], [0], [0], [1], [0, 0, 1, 1], [], []>} : vector<16x16xbf16>, vector<16x64xbf16>, vector<16x64xf32> -> vector<16x64xf32>
    %299 = arith.truncf %298 : vector<16x64xf32> to vector<16x64xbf16>
    %300 = vector.extract_strided_slice %261 {offsets = [64, 0], sizes = [64, 128], strides = [1, 1]} : vector<128x128xbf16> to vector<64x128xbf16>
    %cst_127 = arith.constant dense<0.000000e+00> : vector<16x128xf32>
    %301 = tpu.matmul %299, %300, %cst_127 {dimension_numbers = #tpu.dot_dimension_numbers<[1], [0], [0], [1], [0, 0, 1, 1], [], []>} : vector<16x64xbf16>, vector<64x128xbf16>, vector<16x128xf32> -> vector<16x128xf32>
    %cst_128 = arith.constant 0.000000e+00 : f32
    %302 = vector.broadcast %cst_128 : f32 to vector<16x128xf32>
    %303 = arith.addf %302, %281 : vector<16x128xf32>
    %304 = arith.addf %303, %301 : vector<16x128xf32>
    %c0_129 = arith.constant 0 : index
    %c0_130 = arith.constant 0 : index
    %c0_131 = arith.constant 0 : index
    %305 = vector.load %arg11[%c0_129, %c0_130, %c0_131] : memref<2x1x128xf32, #tpu.memory_space<vmem>>, vector<1x1x128xf32>
    %306 = vector.shape_cast %305 : vector<1x1x128xf32> to vector<1x128xf32>
    %307 = vector.broadcast %306 : vector<1x128xf32> to vector<16x128xf32>
    %308 = arith.addf %304, %307 : vector<16x128xf32>
    %309 = arith.addf %308, %249 : vector<16x128xf32>
    %c0_132 = arith.constant 0 : index
    %c0_133 = arith.constant 0 : index
    %c0_134 = arith.constant 0 : index
    %310 = vector.load %arg12[%c0_132, %c0_133, %c0_134] : memref<2x1x128xf32, #tpu.memory_space<vmem>>, vector<1x1x128xf32>
    %311 = vector.shape_cast %310 : vector<1x1x128xf32> to vector<1x128xf32>
    %c0_135 = arith.constant 0 : index
    %c0_136 = arith.constant 0 : index
    %c0_137 = arith.constant 0 : index
    %312 = vector.load %arg13[%c0_135, %c0_136, %c0_137] : memref<2x1x128xf32, #tpu.memory_space<vmem>>, vector<1x1x128xf32>
    %313 = vector.shape_cast %312 : vector<1x1x128xf32> to vector<1x128xf32>
    %cst_138 = arith.constant dense<0.000000e+00> : vector<16xf32>
    %314 = vector.multi_reduction <add>, %309, %cst_138 [1] : vector<16x128xf32> to vector<16xf32>
    %315 = vector.shape_cast %314 : vector<16xf32> to vector<16x1xf32>
    %cst_139 = arith.constant 1.280000e+02 : f32
    %316 = vector.broadcast %cst_139 : f32 to vector<16x1xf32>
    %317 = arith.divf %315, %316 : vector<16x1xf32>
    %318 = vector.broadcast %317 : vector<16x1xf32> to vector<16x128xf32>
    %319 = arith.subf %309, %318 : vector<16x128xf32>
    %320 = arith.mulf %319, %319 : vector<16x128xf32>
    %cst_140 = arith.constant dense<0.000000e+00> : vector<16xf32>
    %321 = vector.multi_reduction <add>, %320, %cst_140 [1] : vector<16x128xf32> to vector<16xf32>
    %322 = vector.shape_cast %321 : vector<16xf32> to vector<16x1xf32>
    %cst_141 = arith.constant 1.280000e+02 : f32
    %323 = vector.broadcast %cst_141 : f32 to vector<16x1xf32>
    %324 = arith.divf %322, %323 : vector<16x1xf32>
    %325 = vector.broadcast %317 : vector<16x1xf32> to vector<16x128xf32>
    %326 = arith.subf %309, %325 : vector<16x128xf32>
    %cst_142 = arith.constant 9.99999974E-6 : f32
    %327 = vector.broadcast %cst_142 : f32 to vector<16x1xf32>
    %328 = arith.addf %324, %327 : vector<16x1xf32>
    %329 = math.rsqrt %328 : vector<16x1xf32>
    %330 = vector.broadcast %329 : vector<16x1xf32> to vector<16x128xf32>
    %331 = arith.mulf %326, %330 : vector<16x128xf32>
    %332 = vector.broadcast %311 : vector<1x128xf32> to vector<16x128xf32>
    %333 = arith.mulf %331, %332 : vector<16x128xf32>
    %334 = vector.broadcast %313 : vector<1x128xf32> to vector<16x128xf32>
    %335 = arith.addf %333, %334 : vector<16x128xf32>
    %c0_143 = arith.constant 0 : index
    %c0_144 = arith.constant 0 : index
    %c0_145 = arith.constant 0 : index
    %336 = vector.load %arg14[%c0_143, %c0_144, %c0_145] : memref<2x128x256xbf16, #tpu.memory_space<vmem>>, vector<1x128x256xbf16>
    %337 = vector.shape_cast %336 : vector<1x128x256xbf16> to vector<128x256xbf16>
    %338 = arith.truncf %335 : vector<16x128xf32> to vector<16x128xbf16>
    %cst_146 = arith.constant dense<0.000000e+00> : vector<16x256xf32>
    %339 = tpu.matmul %338, %337, %cst_146 {dimension_numbers = #tpu.dot_dimension_numbers<[1], [0], [0], [1], [0, 0, 1, 1], [], []>} : vector<16x128xbf16>, vector<128x256xbf16>, vector<16x256xf32> -> vector<16x256xf32>
    %c0_147 = arith.constant 0 : index
    %c0_148 = arith.constant 0 : index
    %c0_149 = arith.constant 0 : index
    %340 = vector.load %arg15[%c0_147, %c0_148, %c0_149] : memref<2x1x256xf32, #tpu.memory_space<vmem>>, vector<1x1x256xf32>
    %341 = vector.shape_cast %340 : vector<1x1x256xf32> to vector<1x256xf32>
    %342 = vector.broadcast %341 : vector<1x256xf32> to vector<16x256xf32>
    %343 = arith.addf %339, %342 : vector<16x256xf32>
    %cst_150 = arith.constant 5.000000e-01 : f32
    %344 = vector.broadcast %cst_150 : f32 to vector<16x256xf32>
    %345 = arith.mulf %344, %343 : vector<16x256xf32>
    %cst_151 = arith.constant 4.471500e-02 : f32
    %346 = vector.broadcast %cst_151 : f32 to vector<16x256xf32>
    %347 = arith.mulf %346, %343 : vector<16x256xf32>
    %348 = arith.mulf %347, %343 : vector<16x256xf32>
    %349 = arith.mulf %348, %343 : vector<16x256xf32>
    %350 = arith.addf %343, %349 : vector<16x256xf32>
    %cst_152 = arith.constant 0.797884583 : f32
    %351 = vector.broadcast %cst_152 : f32 to vector<16x256xf32>
    %352 = arith.mulf %351, %350 : vector<16x256xf32>
    %353 = math.tanh %352 : vector<16x256xf32>
    %cst_153 = arith.constant 1.000000e+00 : f32
    %354 = vector.broadcast %cst_153 : f32 to vector<16x256xf32>
    %355 = arith.addf %354, %353 : vector<16x256xf32>
    %356 = arith.mulf %345, %355 : vector<16x256xf32>
    %c0_154 = arith.constant 0 : index
    %c0_155 = arith.constant 0 : index
    %c0_156 = arith.constant 0 : index
    %357 = vector.load %arg16[%c0_154, %c0_155, %c0_156] : memref<2x256x128xbf16, #tpu.memory_space<vmem>>, vector<1x256x128xbf16>
    %358 = vector.shape_cast %357 : vector<1x256x128xbf16> to vector<256x128xbf16>
    %359 = arith.truncf %356 : vector<16x256xf32> to vector<16x256xbf16>
    %cst_157 = arith.constant dense<0.000000e+00> : vector<16x128xf32>
    %360 = tpu.matmul %359, %358, %cst_157 {dimension_numbers = #tpu.dot_dimension_numbers<[1], [0], [0], [1], [0, 0, 1, 1], [], []>} : vector<16x256xbf16>, vector<256x128xbf16>, vector<16x128xf32> -> vector<16x128xf32>
    %c0_158 = arith.constant 0 : index
    %c0_159 = arith.constant 0 : index
    %c0_160 = arith.constant 0 : index
    %361 = vector.load %arg17[%c0_158, %c0_159, %c0_160] : memref<2x1x128xf32, #tpu.memory_space<vmem>>, vector<1x1x128xf32>
    %362 = vector.shape_cast %361 : vector<1x1x128xf32> to vector<1x128xf32>
    %363 = vector.broadcast %362 : vector<1x128xf32> to vector<16x128xf32>
    %364 = arith.addf %360, %363 : vector<16x128xf32>
    %365 = arith.addf %364, %335 : vector<16x128xf32>
    %c0_161 = arith.constant 0 : index
    %c0_162 = arith.constant 0 : index
    %c0_163 = arith.constant 0 : index
    %366 = vector.load %arg18[%c0_161, %c0_162, %c0_163] : memref<2x1x128xf32, #tpu.memory_space<vmem>>, vector<1x1x128xf32>
    %367 = vector.shape_cast %366 : vector<1x1x128xf32> to vector<1x128xf32>
    %c0_164 = arith.constant 0 : index
    %c0_165 = arith.constant 0 : index
    %c0_166 = arith.constant 0 : index
    %368 = vector.load %arg19[%c0_164, %c0_165, %c0_166] : memref<2x1x128xf32, #tpu.memory_space<vmem>>, vector<1x1x128xf32>
    %369 = vector.shape_cast %368 : vector<1x1x128xf32> to vector<1x128xf32>
    %cst_167 = arith.constant dense<0.000000e+00> : vector<16xf32>
    %370 = vector.multi_reduction <add>, %365, %cst_167 [1] : vector<16x128xf32> to vector<16xf32>
    %371 = vector.shape_cast %370 : vector<16xf32> to vector<16x1xf32>
    %cst_168 = arith.constant 1.280000e+02 : f32
    %372 = vector.broadcast %cst_168 : f32 to vector<16x1xf32>
    %373 = arith.divf %371, %372 : vector<16x1xf32>
    %374 = vector.broadcast %373 : vector<16x1xf32> to vector<16x128xf32>
    %375 = arith.subf %365, %374 : vector<16x128xf32>
    %376 = arith.mulf %375, %375 : vector<16x128xf32>
    %cst_169 = arith.constant dense<0.000000e+00> : vector<16xf32>
    %377 = vector.multi_reduction <add>, %376, %cst_169 [1] : vector<16x128xf32> to vector<16xf32>
    %378 = vector.shape_cast %377 : vector<16xf32> to vector<16x1xf32>
    %cst_170 = arith.constant 1.280000e+02 : f32
    %379 = vector.broadcast %cst_170 : f32 to vector<16x1xf32>
    %380 = arith.divf %378, %379 : vector<16x1xf32>
    %381 = vector.broadcast %373 : vector<16x1xf32> to vector<16x128xf32>
    %382 = arith.subf %365, %381 : vector<16x128xf32>
    %cst_171 = arith.constant 9.99999974E-6 : f32
    %383 = vector.broadcast %cst_171 : f32 to vector<16x1xf32>
    %384 = arith.addf %380, %383 : vector<16x1xf32>
    %385 = math.rsqrt %384 : vector<16x1xf32>
    %386 = vector.broadcast %385 : vector<16x1xf32> to vector<16x128xf32>
    %387 = arith.mulf %382, %386 : vector<16x128xf32>
    %388 = vector.broadcast %367 : vector<1x128xf32> to vector<16x128xf32>
    %389 = arith.mulf %387, %388 : vector<16x128xf32>
    %390 = vector.broadcast %369 : vector<1x128xf32> to vector<16x128xf32>
    %391 = arith.addf %389, %390 : vector<16x128xf32>
    %c1_172 = arith.constant 1 : index
    %c0_173 = arith.constant 0 : index
    %c0_174 = arith.constant 0 : index
    %392 = vector.load %arg8[%c1_172, %c0_173, %c0_174] : memref<2x128x384xbf16, #tpu.memory_space<vmem>>, vector<1x128x384xbf16>
    %393 = vector.shape_cast %392 : vector<1x128x384xbf16> to vector<128x384xbf16>
    %394 = arith.truncf %391 : vector<16x128xf32> to vector<16x128xbf16>
    %cst_175 = arith.constant dense<0.000000e+00> : vector<16x384xf32>
    %395 = tpu.matmul %394, %393, %cst_175 {dimension_numbers = #tpu.dot_dimension_numbers<[1], [0], [0], [1], [0, 0, 1, 1], [], []>} : vector<16x128xbf16>, vector<128x384xbf16>, vector<16x384xf32> -> vector<16x384xf32>
    %c1_176 = arith.constant 1 : index
    %c0_177 = arith.constant 0 : index
    %c0_178 = arith.constant 0 : index
    %396 = vector.load %arg9[%c1_176, %c0_177, %c0_178] : memref<2x1x384xf32, #tpu.memory_space<vmem>>, vector<1x1x384xf32>
    %397 = vector.shape_cast %396 : vector<1x1x384xf32> to vector<1x384xf32>
    %398 = vector.broadcast %397 : vector<1x384xf32> to vector<16x384xf32>
    %399 = arith.addf %395, %398 : vector<16x384xf32>
    %400 = arith.truncf %399 : vector<16x384xf32> to vector<16x384xbf16>
    %c1_179 = arith.constant 1 : index
    %c0_180 = arith.constant 0 : index
    %c0_181 = arith.constant 0 : index
    %401 = vector.load %arg10[%c1_179, %c0_180, %c0_181] : memref<2x128x128xbf16, #tpu.memory_space<vmem>>, vector<1x128x128xbf16>
    %402 = vector.shape_cast %401 : vector<1x128x128xbf16> to vector<128x128xbf16>
    %403 = vector.extract_strided_slice %400 {offsets = [0, 0], sizes = [16, 64], strides = [1, 1]} : vector<16x384xbf16> to vector<16x64xbf16>
    %404 = vector.extract_strided_slice %400 {offsets = [0, 128], sizes = [16, 64], strides = [1, 1]} : vector<16x384xbf16> to vector<16x64xbf16>
    %405 = vector.extract_strided_slice %400 {offsets = [0, 256], sizes = [16, 64], strides = [1, 1]} : vector<16x384xbf16> to vector<16x64xbf16>
    %cst_182 = arith.constant dense<0.000000e+00> : vector<16x16xf32>
    %406 = tpu.matmul %403, %404, %cst_182 {dimension_numbers = #tpu.dot_dimension_numbers<[1], [1], [0], [0], [0, 0, 1, 0], [], []>} : vector<16x64xbf16>, vector<16x64xbf16>, vector<16x16xf32> -> vector<16x16xf32>
    %407 = arith.addf %406, %250 : vector<16x16xf32>
    %cst_183 = arith.constant dense<0xFF800000> : vector<16xf32>
    %408 = vector.multi_reduction <maximumf>, %407, %cst_183 [1] : vector<16x16xf32> to vector<16xf32>
    %409 = vector.shape_cast %408 : vector<16xf32> to vector<16x1xf32>
    %410 = vector.broadcast %409 : vector<16x1xf32> to vector<16x16xf32>
    %411 = arith.subf %407, %410 : vector<16x16xf32>
    %412 = math.exp %411 : vector<16x16xf32>
    %cst_184 = arith.constant dense<0.000000e+00> : vector<16xf32>
    %413 = vector.multi_reduction <add>, %412, %cst_184 [1] : vector<16x16xf32> to vector<16xf32>
    %414 = vector.shape_cast %413 : vector<16xf32> to vector<16x1xf32>
    %415 = tpu.reciprocal %414 {approx = true} : vector<16x1xf32> -> vector<16x1xf32>
    %416 = vector.broadcast %415 : vector<16x1xf32> to vector<16x16xf32>
    %417 = arith.mulf %412, %416 : vector<16x16xf32>
    %418 = arith.truncf %417 : vector<16x16xf32> to vector<16x16xbf16>
    %cst_185 = arith.constant dense<0.000000e+00> : vector<16x64xf32>
    %419 = tpu.matmul %418, %405, %cst_185 {dimension_numbers = #tpu.dot_dimension_numbers<[1], [0], [0], [1], [0, 0, 1, 1], [], []>} : vector<16x16xbf16>, vector<16x64xbf16>, vector<16x64xf32> -> vector<16x64xf32>
    %420 = arith.truncf %419 : vector<16x64xf32> to vector<16x64xbf16>
    %421 = vector.extract_strided_slice %402 {offsets = [0, 0], sizes = [64, 128], strides = [1, 1]} : vector<128x128xbf16> to vector<64x128xbf16>
    %cst_186 = arith.constant dense<0.000000e+00> : vector<16x128xf32>
    %422 = tpu.matmul %420, %421, %cst_186 {dimension_numbers = #tpu.dot_dimension_numbers<[1], [0], [0], [1], [0, 0, 1, 1], [], []>} : vector<16x64xbf16>, vector<64x128xbf16>, vector<16x128xf32> -> vector<16x128xf32>
    %423 = vector.extract_strided_slice %400 {offsets = [0, 64], sizes = [16, 64], strides = [1, 1]} : vector<16x384xbf16> to vector<16x64xbf16>
    %424 = vector.extract_strided_slice %400 {offsets = [0, 192], sizes = [16, 64], strides = [1, 1]} : vector<16x384xbf16> to vector<16x64xbf16>
    %425 = vector.extract_strided_slice %400 {offsets = [0, 320], sizes = [16, 64], strides = [1, 1]} : vector<16x384xbf16> to vector<16x64xbf16>
    %cst_187 = arith.constant dense<0.000000e+00> : vector<16x16xf32>
    %426 = tpu.matmul %423, %424, %cst_187 {dimension_numbers = #tpu.dot_dimension_numbers<[1], [1], [0], [0], [0, 0, 1, 0], [], []>} : vector<16x64xbf16>, vector<16x64xbf16>, vector<16x16xf32> -> vector<16x16xf32>
    %427 = arith.addf %426, %250 : vector<16x16xf32>
    %cst_188 = arith.constant dense<0xFF800000> : vector<16xf32>
    %428 = vector.multi_reduction <maximumf>, %427, %cst_188 [1] : vector<16x16xf32> to vector<16xf32>
    %429 = vector.shape_cast %428 : vector<16xf32> to vector<16x1xf32>
    %430 = vector.broadcast %429 : vector<16x1xf32> to vector<16x16xf32>
    %431 = arith.subf %427, %430 : vector<16x16xf32>
    %432 = math.exp %431 : vector<16x16xf32>
    %cst_189 = arith.constant dense<0.000000e+00> : vector<16xf32>
    %433 = vector.multi_reduction <add>, %432, %cst_189 [1] : vector<16x16xf32> to vector<16xf32>
    %434 = vector.shape_cast %433 : vector<16xf32> to vector<16x1xf32>
    %435 = tpu.reciprocal %434 {approx = true} : vector<16x1xf32> -> vector<16x1xf32>
    %436 = vector.broadcast %435 : vector<16x1xf32> to vector<16x16xf32>
    %437 = arith.mulf %432, %436 : vector<16x16xf32>
    %438 = arith.truncf %437 : vector<16x16xf32> to vector<16x16xbf16>
    %cst_190 = arith.constant dense<0.000000e+00> : vector<16x64xf32>
    %439 = tpu.matmul %438, %425, %cst_190 {dimension_numbers = #tpu.dot_dimension_numbers<[1], [0], [0], [1], [0, 0, 1, 1], [], []>} : vector<16x16xbf16>, vector<16x64xbf16>, vector<16x64xf32> -> vector<16x64xf32>
    %440 = arith.truncf %439 : vector<16x64xf32> to vector<16x64xbf16>
    %441 = vector.extract_strided_slice %402 {offsets = [64, 0], sizes = [64, 128], strides = [1, 1]} : vector<128x128xbf16> to vector<64x128xbf16>
    %cst_191 = arith.constant dense<0.000000e+00> : vector<16x128xf32>
    %442 = tpu.matmul %440, %441, %cst_191 {dimension_numbers = #tpu.dot_dimension_numbers<[1], [0], [0], [1], [0, 0, 1, 1], [], []>} : vector<16x64xbf16>, vector<64x128xbf16>, vector<16x128xf32> -> vector<16x128xf32>
    %cst_192 = arith.constant 0.000000e+00 : f32
    %443 = vector.broadcast %cst_192 : f32 to vector<16x128xf32>
    %444 = arith.addf %443, %422 : vector<16x128xf32>
    %445 = arith.addf %444, %442 : vector<16x128xf32>
    %c1_193 = arith.constant 1 : index
    %c0_194 = arith.constant 0 : index
    %c0_195 = arith.constant 0 : index
    %446 = vector.load %arg11[%c1_193, %c0_194, %c0_195] : memref<2x1x128xf32, #tpu.memory_space<vmem>>, vector<1x1x128xf32>
    %447 = vector.shape_cast %446 : vector<1x1x128xf32> to vector<1x128xf32>
    %448 = vector.broadcast %447 : vector<1x128xf32> to vector<16x128xf32>
    %449 = arith.addf %445, %448 : vector<16x128xf32>
    %450 = arith.addf %449, %391 : vector<16x128xf32>
    %c1_196 = arith.constant 1 : index
    %c0_197 = arith.constant 0 : index
    %c0_198 = arith.constant 0 : index
    %451 = vector.load %arg12[%c1_196, %c0_197, %c0_198] : memref<2x1x128xf32, #tpu.memory_space<vmem>>, vector<1x1x128xf32>
    %452 = vector.shape_cast %451 : vector<1x1x128xf32> to vector<1x128xf32>
    %c1_199 = arith.constant 1 : index
    %c0_200 = arith.constant 0 : index
    %c0_201 = arith.constant 0 : index
    %453 = vector.load %arg13[%c1_199, %c0_200, %c0_201] : memref<2x1x128xf32, #tpu.memory_space<vmem>>, vector<1x1x128xf32>
    %454 = vector.shape_cast %453 : vector<1x1x128xf32> to vector<1x128xf32>
    %cst_202 = arith.constant dense<0.000000e+00> : vector<16xf32>
    %455 = vector.multi_reduction <add>, %450, %cst_202 [1] : vector<16x128xf32> to vector<16xf32>
    %456 = vector.shape_cast %455 : vector<16xf32> to vector<16x1xf32>
    %cst_203 = arith.constant 1.280000e+02 : f32
    %457 = vector.broadcast %cst_203 : f32 to vector<16x1xf32>
    %458 = arith.divf %456, %457 : vector<16x1xf32>
    %459 = vector.broadcast %458 : vector<16x1xf32> to vector<16x128xf32>
    %460 = arith.subf %450, %459 : vector<16x128xf32>
    %461 = arith.mulf %460, %460 : vector<16x128xf32>
    %cst_204 = arith.constant dense<0.000000e+00> : vector<16xf32>
    %462 = vector.multi_reduction <add>, %461, %cst_204 [1] : vector<16x128xf32> to vector<16xf32>
    %463 = vector.shape_cast %462 : vector<16xf32> to vector<16x1xf32>
    %cst_205 = arith.constant 1.280000e+02 : f32
    %464 = vector.broadcast %cst_205 : f32 to vector<16x1xf32>
    %465 = arith.divf %463, %464 : vector<16x1xf32>
    %466 = vector.broadcast %458 : vector<16x1xf32> to vector<16x128xf32>
    %467 = arith.subf %450, %466 : vector<16x128xf32>
    %cst_206 = arith.constant 9.99999974E-6 : f32
    %468 = vector.broadcast %cst_206 : f32 to vector<16x1xf32>
    %469 = arith.addf %465, %468 : vector<16x1xf32>
    %470 = math.rsqrt %469 : vector<16x1xf32>
    %471 = vector.broadcast %470 : vector<16x1xf32> to vector<16x128xf32>
    %472 = arith.mulf %467, %471 : vector<16x128xf32>
    %473 = vector.broadcast %452 : vector<1x128xf32> to vector<16x128xf32>
    %474 = arith.mulf %472, %473 : vector<16x128xf32>
    %475 = vector.broadcast %454 : vector<1x128xf32> to vector<16x128xf32>
    %476 = arith.addf %474, %475 : vector<16x128xf32>
    %c1_207 = arith.constant 1 : index
    %c0_208 = arith.constant 0 : index
    %c0_209 = arith.constant 0 : index
    %477 = vector.load %arg14[%c1_207, %c0_208, %c0_209] : memref<2x128x256xbf16, #tpu.memory_space<vmem>>, vector<1x128x256xbf16>
    %478 = vector.shape_cast %477 : vector<1x128x256xbf16> to vector<128x256xbf16>
    %479 = arith.truncf %476 : vector<16x128xf32> to vector<16x128xbf16>
    %cst_210 = arith.constant dense<0.000000e+00> : vector<16x256xf32>
    %480 = tpu.matmul %479, %478, %cst_210 {dimension_numbers = #tpu.dot_dimension_numbers<[1], [0], [0], [1], [0, 0, 1, 1], [], []>} : vector<16x128xbf16>, vector<128x256xbf16>, vector<16x256xf32> -> vector<16x256xf32>
    %c1_211 = arith.constant 1 : index
    %c0_212 = arith.constant 0 : index
    %c0_213 = arith.constant 0 : index
    %481 = vector.load %arg15[%c1_211, %c0_212, %c0_213] : memref<2x1x256xf32, #tpu.memory_space<vmem>>, vector<1x1x256xf32>
    %482 = vector.shape_cast %481 : vector<1x1x256xf32> to vector<1x256xf32>
    %483 = vector.broadcast %482 : vector<1x256xf32> to vector<16x256xf32>
    %484 = arith.addf %480, %483 : vector<16x256xf32>
    %cst_214 = arith.constant 5.000000e-01 : f32
    %485 = vector.broadcast %cst_214 : f32 to vector<16x256xf32>
    %486 = arith.mulf %485, %484 : vector<16x256xf32>
    %cst_215 = arith.constant 4.471500e-02 : f32
    %487 = vector.broadcast %cst_215 : f32 to vector<16x256xf32>
    %488 = arith.mulf %487, %484 : vector<16x256xf32>
    %489 = arith.mulf %488, %484 : vector<16x256xf32>
    %490 = arith.mulf %489, %484 : vector<16x256xf32>
    %491 = arith.addf %484, %490 : vector<16x256xf32>
    %cst_216 = arith.constant 0.797884583 : f32
    %492 = vector.broadcast %cst_216 : f32 to vector<16x256xf32>
    %493 = arith.mulf %492, %491 : vector<16x256xf32>
    %494 = math.tanh %493 : vector<16x256xf32>
    %cst_217 = arith.constant 1.000000e+00 : f32
    %495 = vector.broadcast %cst_217 : f32 to vector<16x256xf32>
    %496 = arith.addf %495, %494 : vector<16x256xf32>
    %497 = arith.mulf %486, %496 : vector<16x256xf32>
    %c1_218 = arith.constant 1 : index
    %c0_219 = arith.constant 0 : index
    %c0_220 = arith.constant 0 : index
    %498 = vector.load %arg16[%c1_218, %c0_219, %c0_220] : memref<2x256x128xbf16, #tpu.memory_space<vmem>>, vector<1x256x128xbf16>
    %499 = vector.shape_cast %498 : vector<1x256x128xbf16> to vector<256x128xbf16>
    %500 = arith.truncf %497 : vector<16x256xf32> to vector<16x256xbf16>
    %cst_221 = arith.constant dense<0.000000e+00> : vector<16x128xf32>
    %501 = tpu.matmul %500, %499, %cst_221 {dimension_numbers = #tpu.dot_dimension_numbers<[1], [0], [0], [1], [0, 0, 1, 1], [], []>} : vector<16x256xbf16>, vector<256x128xbf16>, vector<16x128xf32> -> vector<16x128xf32>
    %c1_222 = arith.constant 1 : index
    %c0_223 = arith.constant 0 : index
    %c0_224 = arith.constant 0 : index
    %502 = vector.load %arg17[%c1_222, %c0_223, %c0_224] : memref<2x1x128xf32, #tpu.memory_space<vmem>>, vector<1x1x128xf32>
    %503 = vector.shape_cast %502 : vector<1x1x128xf32> to vector<1x128xf32>
    %504 = vector.broadcast %503 : vector<1x128xf32> to vector<16x128xf32>
    %505 = arith.addf %501, %504 : vector<16x128xf32>
    %506 = arith.addf %505, %476 : vector<16x128xf32>
    %c1_225 = arith.constant 1 : index
    %c0_226 = arith.constant 0 : index
    %c0_227 = arith.constant 0 : index
    %507 = vector.load %arg18[%c1_225, %c0_226, %c0_227] : memref<2x1x128xf32, #tpu.memory_space<vmem>>, vector<1x1x128xf32>
    %508 = vector.shape_cast %507 : vector<1x1x128xf32> to vector<1x128xf32>
    %c1_228 = arith.constant 1 : index
    %c0_229 = arith.constant 0 : index
    %c0_230 = arith.constant 0 : index
    %509 = vector.load %arg19[%c1_228, %c0_229, %c0_230] : memref<2x1x128xf32, #tpu.memory_space<vmem>>, vector<1x1x128xf32>
    %510 = vector.shape_cast %509 : vector<1x1x128xf32> to vector<1x128xf32>
    %cst_231 = arith.constant dense<0.000000e+00> : vector<16xf32>
    %511 = vector.multi_reduction <add>, %506, %cst_231 [1] : vector<16x128xf32> to vector<16xf32>
    %512 = vector.shape_cast %511 : vector<16xf32> to vector<16x1xf32>
    %cst_232 = arith.constant 1.280000e+02 : f32
    %513 = vector.broadcast %cst_232 : f32 to vector<16x1xf32>
    %514 = arith.divf %512, %513 : vector<16x1xf32>
    %515 = vector.broadcast %514 : vector<16x1xf32> to vector<16x128xf32>
    %516 = arith.subf %506, %515 : vector<16x128xf32>
    %517 = arith.mulf %516, %516 : vector<16x128xf32>
    %cst_233 = arith.constant dense<0.000000e+00> : vector<16xf32>
    %518 = vector.multi_reduction <add>, %517, %cst_233 [1] : vector<16x128xf32> to vector<16xf32>
    %519 = vector.shape_cast %518 : vector<16xf32> to vector<16x1xf32>
    %cst_234 = arith.constant 1.280000e+02 : f32
    %520 = vector.broadcast %cst_234 : f32 to vector<16x1xf32>
    %521 = arith.divf %519, %520 : vector<16x1xf32>
    %522 = vector.broadcast %514 : vector<16x1xf32> to vector<16x128xf32>
    %523 = arith.subf %506, %522 : vector<16x128xf32>
    %cst_235 = arith.constant 9.99999974E-6 : f32
    %524 = vector.broadcast %cst_235 : f32 to vector<16x1xf32>
    %525 = arith.addf %521, %524 : vector<16x1xf32>
    %526 = math.rsqrt %525 : vector<16x1xf32>
    %527 = vector.broadcast %526 : vector<16x1xf32> to vector<16x128xf32>
    %528 = arith.mulf %523, %527 : vector<16x128xf32>
    %529 = vector.broadcast %508 : vector<1x128xf32> to vector<16x128xf32>
    %530 = arith.mulf %528, %529 : vector<16x128xf32>
    %531 = vector.broadcast %510 : vector<1x128xf32> to vector<16x128xf32>
    %532 = arith.addf %530, %531 : vector<16x128xf32>
    %c0_236 = arith.constant 0 : index
    %c0_237 = arith.constant 0 : index
    %533 = vector.load %arg20[%c0_236, %c0_237] : memref<128x128xbf16, #tpu.memory_space<vmem>>, vector<128x128xbf16>
    %534 = arith.truncf %532 : vector<16x128xf32> to vector<16x128xbf16>
    %cst_238 = arith.constant dense<0.000000e+00> : vector<16x128xf32>
    %535 = tpu.matmul %534, %533, %cst_238 {dimension_numbers = #tpu.dot_dimension_numbers<[1], [0], [0], [1], [0, 0, 1, 1], [], []>} : vector<16x128xbf16>, vector<128x128xbf16>, vector<16x128xf32> -> vector<16x128xf32>
    %c0_239 = arith.constant 0 : index
    %c0_240 = arith.constant 0 : index
    %536 = vector.load %arg21[%c0_239, %c0_240] : memref<1x128xf32, #tpu.memory_space<vmem>>, vector<1x128xf32>
    %537 = vector.broadcast %536 : vector<1x128xf32> to vector<16x128xf32>
    %538 = arith.addf %535, %537 : vector<16x128xf32>
    %539 = math.tanh %538 : vector<16x128xf32>
    %c0_241 = arith.constant 0 : index
    %c0_242 = arith.constant 0 : index
    %540 = vector.load %arg22[%c0_241, %c0_242] : memref<128x128xbf16, #tpu.memory_space<vmem>>, vector<128x128xbf16>
    %541 = arith.truncf %539 : vector<16x128xf32> to vector<16x128xbf16>
    %cst_243 = arith.constant dense<0.000000e+00> : vector<16x128xf32>
    %542 = tpu.matmul %541, %540, %cst_243 {dimension_numbers = #tpu.dot_dimension_numbers<[1], [0], [0], [1], [0, 0, 1, 1], [], []>} : vector<16x128xbf16>, vector<128x128xbf16>, vector<16x128xf32> -> vector<16x128xf32>
    %c0_244 = arith.constant 0 : index
    %c0_245 = arith.constant 0 : index
    %543 = vector.load %arg23[%c0_244, %c0_245] : memref<16x128xf32, #tpu.memory_space<vmem>>, vector<16x128xf32>
    tpu.vector_store %arg23[%c0_244, %c0_245], %542 {strides = array<i32>} : memref<16x128xf32, #tpu.memory_space<vmem>>, vector<16x128xf32>,
    return
  }
  func.func @transform_0(%arg0: i32, %arg1: memref<16xi32, #tpu.memory_space<smem>>) -> (i32, i32) {
    %c0_i32 = arith.constant 0 : i32
    %c0_i32_0 = arith.constant 0 : i32
    %c0_i32_1 = arith.constant 0 : i32
    return %c0_i32, %c0_i32_0 : i32, i32
  }
  func.func @transform_1(%arg0: i32, %arg1: memref<16xi32, #tpu.memory_space<smem>>) -> (i32, i32, i32) {
    %c0_i32 = arith.constant 0 : i32
    %c0_i32_0 = arith.constant 0 : i32
    %c0_i32_1 = arith.constant 0 : i32
    %c0_i32_2 = arith.constant 0 : i32
    return %c0_i32, %c0_i32_0, %c0_i32_1 : i32, i32, i32
  }
  func.func @transform_2(%arg0: i32, %arg1: memref<16xi32, #tpu.memory_space<smem>>) -> (i32, i32, i32) {
    %c0_i32 = arith.constant 0 : i32
    %c0_i32_0 = arith.constant 0 : i32
    %c0_i32_1 = arith.constant 0 : i32
    %c0_i32_2 = arith.constant 0 : i32
    return %c0_i32, %c0_i32_0, %c0_i32_1 : i32, i32, i32
  }
  func.func @transform_3(%arg0: i32, %arg1: memref<16xi32, #tpu.memory_space<smem>>) -> (i32, i32) {
    %c0_i32 = arith.constant 0 : i32
    %c0_i32_0 = arith.constant 0 : i32
    %c0_i32_1 = arith.constant 0 : i32
    return %c0_i32, %c0_i32_0 : i32, i32
  }
  func.func @transform_4(%arg0: i32, %arg1: memref<16xi32, #tpu.memory_space<smem>>) -> (i32, i32) {
    %c0_i32 = arith.constant 0 : i32
    %c0_i32_0 = arith.constant 0 : i32
    %c0_i32_1 = arith.constant 0 : i32
    return %c0_i32, %c0_i32_0 : i32, i32
  }
  func.func @transform_5(%arg0: i32, %arg1: memref<16xi32, #tpu.memory_space<smem>>) -> (i32, i32) {
    %c0_i32 = arith.constant 0 : i32
    %c0_i32_0 = arith.constant 0 : i32
    %c0_i32_1 = arith.constant 0 : i32
    return %c0_i32, %c0_i32_0 : i32, i32
  }
  func.func @transform_6(%arg0: i32, %arg1: memref<16xi32, #tpu.memory_space<smem>>) -> (i32, i32, i32) {
    %c0_i32 = arith.constant 0 : i32
    %c0_i32_0 = arith.constant 0 : i32
    %c0_i32_1 = arith.constant 0 : i32
    %c0_i32_2 = arith.constant 0 : i32
    return %c0_i32, %c0_i32_0, %c0_i32_1 : i32, i32, i32
  }
  func.func @transform_7(%arg0: i32, %arg1: memref<16xi32, #tpu.memory_space<smem>>) -> (i32, i32, i32) {
    %c0_i32 = arith.constant 0 : i32
    %c0_i32_0 = arith.constant 0 : i32
    %c0_i32_1 = arith.constant 0 : i32
    %c0_i32_2 = arith.constant 0 : i32
    return %c0_i32, %c0_i32_0, %c0_i32_1 : i32, i32, i32
  }
  func.func @transform_8(%arg0: i32, %arg1: memref<16xi32, #tpu.memory_space<smem>>) -> (i32, i32, i32) {
    %c0_i32 = arith.constant 0 : i32
    %c0_i32_0 = arith.constant 0 : i32
    %c0_i32_1 = arith.constant 0 : i32
    %c0_i32_2 = arith.constant 0 : i32
    return %c0_i32, %c0_i32_0, %c0_i32_1 : i32, i32, i32
  }
  func.func @transform_9(%arg0: i32, %arg1: memref<16xi32, #tpu.memory_space<smem>>) -> (i32, i32, i32) {
    %c0_i32 = arith.constant 0 : i32
    %c0_i32_0 = arith.constant 0 : i32
    %c0_i32_1 = arith.constant 0 : i32
    %c0_i32_2 = arith.constant 0 : i32
    return %c0_i32, %c0_i32_0, %c0_i32_1 : i32, i32, i32
  }
  func.func @transform_10(%arg0: i32, %arg1: memref<16xi32, #tpu.memory_space<smem>>) -> (i32, i32, i32) {
    %c0_i32 = arith.constant 0 : i32
    %c0_i32_0 = arith.constant 0 : i32
    %c0_i32_1 = arith.constant 0 : i32
    %c0_i32_2 = arith.constant 0 : i32
    return %c0_i32, %c0_i32_0, %c0_i32_1 : i32, i32, i32
  }
  func.func @transform_11(%arg0: i32, %arg1: memref<16xi32, #tpu.memory_space<smem>>) -> (i32, i32, i32) {
    %c0_i32 = arith.constant 0 : i32
    %c0_i32_0 = arith.constant 0 : i32
    %c0_i32_1 = arith.constant 0 : i32
    %c0_i32_2 = arith.constant 0 : i32
    return %c0_i32, %c0_i32_0, %c0_i32_1 : i32, i32, i32
  }
  func.func @transform_12(%arg0: i32, %arg1: memref<16xi32, #tpu.memory_space<smem>>) -> (i32, i32, i32) {
    %c0_i32 = arith.constant 0 : i32
    %c0_i32_0 = arith.constant 0 : i32
    %c0_i32_1 = arith.constant 0 : i32
    %c0_i32_2 = arith.constant 0 : i32
    return %c0_i32, %c0_i32_0, %c0_i32_1 : i32, i32, i32
  }
  func.func @transform_13(%arg0: i32, %arg1: memref<16xi32, #tpu.memory_space<smem>>) -> (i32, i32, i32) {
    %c0_i32 = arith.constant 0 : i32
    %c0_i32_0 = arith.constant 0 : i32
    %c0_i32_1 = arith.constant 0 : i32
    %c0_i32_2 = arith.constant 0 : i32
    return %c0_i32, %c0_i32_0, %c0_i32_1 : i32, i32, i32
  }
  func.func @transform_14(%arg0: i32, %arg1: memref<16xi32, #tpu.memory_space<smem>>) -> (i32, i32, i32) {
    %c0_i32 = arith.constant 0 : i32
    %c0_i32_0 = arith.constant 0 : i32
    %c0_i32_1 = arith.constant 0 : i32
    %c0_i32_2 = arith.constant 0 : i32
    return %c0_i32, %c0_i32_0, %c0_i32_1 : i32, i32, i32
  }
  func.func @transform_15(%arg0: i32, %arg1: memref<16xi32, #tpu.memory_space<smem>>) -> (i32, i32, i32) {
    %c0_i32 = arith.constant 0 : i32
    %c0_i32_0 = arith.constant 0 : i32
    %c0_i32_1 = arith.constant 0 : i32
    %c0_i32_2 = arith.constant 0 : i32
    return %c0_i32, %c0_i32_0, %c0_i32_1 : i32, i32, i32
  }
  func.func @transform_16(%arg0: i32, %arg1: memref<16xi32, #tpu.memory_space<smem>>) -> (i32, i32, i32) {
    %c0_i32 = arith.constant 0 : i32
    %c0_i32_0 = arith.constant 0 : i32
    %c0_i32_1 = arith.constant 0 : i32
    %c0_i32_2 = arith.constant 0 : i32
    return %c0_i32, %c0_i32_0, %c0_i32_1 : i32, i32, i32
  }
  func.func @transform_17(%arg0: i32, %arg1: memref<16xi32, #tpu.memory_space<smem>>) -> (i32, i32, i32) {
    %c0_i32 = arith.constant 0 : i32
    %c0_i32_0 = arith.constant 0 : i32
    %c0_i32_1 = arith.constant 0 : i32
    %c0_i32_2 = arith.constant 0 : i32
    return %c0_i32, %c0_i32_0, %c0_i32_1 : i32, i32, i32
  }
  func.func @transform_18(%arg0: i32, %arg1: memref<16xi32, #tpu.memory_space<smem>>) -> (i32, i32) {
    %c0_i32 = arith.constant 0 : i32
    %c0_i32_0 = arith.constant 0 : i32
    %c0_i32_1 = arith.constant 0 : i32
    return %c0_i32, %c0_i32_0 : i32, i32
  }
  func.func @transform_19(%arg0: i32, %arg1: memref<16xi32, #tpu.memory_space<smem>>) -> (i32, i32) {
    %c0_i32 = arith.constant 0 : i32
    %c0_i32_0 = arith.constant 0 : i32
    %c0_i32_1 = arith.constant 0 : i32
    return %c0_i32, %c0_i32_0 : i32, i32
  }
  func.func @transform_20(%arg0: i32, %arg1: memref<16xi32, #tpu.memory_space<smem>>) -> (i32, i32) {
    %c0_i32 = arith.constant 0 : i32
    %c0_i32_0 = arith.constant 0 : i32
    %c0_i32_1 = arith.constant 0 : i32
    return %c0_i32, %c0_i32_0 : i32, i32
  }
  func.func @transform_21(%arg0: i32, %arg1: memref<16xi32, #tpu.memory_space<smem>>) -> (i32, i32) {
    %c0_i32 = arith.constant 0 : i32
    %c0_i32_0 = arith.constant 0 : i32
    %c0_i32_1 = arith.constant 0 : i32
    return %c0_i32, %c0_i32_0 : i32, i32
  }
}

</mosaic_0001>

<llo_original>
// kernel: text_only_forward.1
$region0: #{text_only_forward.1}
  #allocation0 [shape = 'u32[]', space=smem, size = 0x4, offset = 0x4, fixed_abs, tag = 'smem constant byte address 0x4 - core index']
  #allocation1 [shape = 'u32[144,128]{1,0:T(1,128)}', space=vmem, size = 0x12000, scoped, tag = 'internal scratch']
  #allocation2 [shape = 's32[1]{0}', space=sflag, size = 0x4, scoped, tag = 'scoped memory for text_only_forward.1']
  #allocation3 [shape = 'u8[512]{0}', space=smem, size = 0x200, scoped, tag = 'prefetched SMEM operand 0']
  %s0 = inlined_call_operand.vmem [shape: s32[16], index: 0, kind: input, shape index: {}]
  %s1 = inlined_call_operand.vmem [shape: f32[16,16], index: 1, kind: input, shape index: {}]
  %s2 = inlined_call_operand.vmem [shape: f32[100,1,128], index: 2, kind: input, shape index: {}]
  %s3 = inlined_call_operand.hbm [shape: f32[40,1,128], index: 3, kind: input, shape index: {}]
  %s4 = inlined_call_operand.hbm [shape: f32[1,128], index: 4, kind: input, shape index: {}]
  %s5 = inlined_call_operand.hbm [shape: f32[1,128], index: 5, kind: input, shape index: {}]
  %s6 = inlined_call_operand.hbm [shape: f32[1,128], index: 6, kind: input, shape index: {}]
  %s7 = inlined_call_operand.hbm [shape: bf16[2,128,384], index: 7, kind: input, shape index: {}]
  %s8 = inlined_call_operand.vmem [shape: f32[2,1,384], index: 8, kind: input, shape index: {}]
  %s9 = inlined_call_operand.hbm [shape: bf16[2,128,128], index: 9, kind: input, shape index: {}]
  %s10 = inlined_call_operand.hbm [shape: f32[2,1,128], index: 10, kind: input, shape index: {}]
  %s11 = inlined_call_operand.hbm [shape: f32[2,1,128], index: 11, kind: input, shape index: {}]
  %s12 = inlined_call_operand.hbm [shape: f32[2,1,128], index: 12, kind: input, shape index: {}]
  %s13 = inlined_call_operand.hbm [shape: bf16[2,128,256], index: 13, kind: input, shape index: {}]
  %s14 = inlined_call_operand.hbm [shape: f32[2,1,256], index: 14, kind: input, shape index: {}]
  %s15 = inlined_call_operand.hbm [shape: bf16[2,256,128], index: 15, kind: input, shape index: {}]
  %s16 = inlined_call_operand.hbm [shape: f32[2,1,128], index: 16, kind: input, shape index: {}]
  %s17 = inlined_call_operand.hbm [shape: f32[2,1,128], index: 17, kind: input, shape index: {}]
  %s18 = inlined_call_operand.hbm [shape: f32[2,1,128], index: 18, kind: input, shape index: {}]
  %s19 = inlined_call_operand.hbm [shape: bf16[128,128], index: 19, kind: input, shape index: {}]
  %s20 = inlined_call_operand.hbm [shape: f32[1,128], index: 20, kind: input, shape index: {}]
  %s21 = inlined_call_operand.hbm [shape: bf16[128,128], index: 21, kind: input, shape index: {}]
  %s22 = inlined_call_operand.vmem [shape: f32[16,128], index: 22, kind: output, shape index: {}]
  %s23 = sld [smem:[#allocation0]]
  $region166: #{text_only_forward.1} parent=0
    _
  %s25 = ssub.s32 1, %s23
  %s26 = scalar_select 0, %s25, %s23
  %s27 = sshll.u32 %s0, 4
  %s28 = int_to_ptr.vmem [resolvable:$true] %s27
  %30 = dma.vmem_to_smem %s28, 16, [#allocation3], [#allocation2]
  %31 = dma.done [#allocation2], 16
  %32 = sfence
  $region1: #{text_only_forward.1} parent=0
    #allocation4 [shape = 'u8[20480]{0}', space=vmem, size = 0x5000, scoped, tag = 'input window, operand 3, single buffered']
    #allocation5 [shape = 's32[1]{0}', space=sflag, size = 0x4, scoped, tag = 'scoped memory for text_only_forward.1']
    #allocation6 [shape = 'u8[512]{0}', space=vmem, size = 0x400, scoped, tag = 'input window, operand 4, single buffered']
    #allocation7 [shape = 's32[1]{0}', space=sflag, size = 0x4, scoped, tag = 'scoped memory for text_only_forward.1']
    #allocation8 [shape = 'u8[512]{0}', space=vmem, size = 0x400, scoped, tag = 'input window, operand 5, single buffered']
    #allocation9 [shape = 'u8[512]{0}', space=vmem, size = 0x400, scoped, tag = 'input window, operand 6, single buffered']
    #allocation10 [shape = 's32[1]{0}', space=sflag, size = 0x4, scoped, tag = 'scoped memory for text_only_forward.1']
    #allocation11 [shape = 'u8[196608]{0}', space=vmem, size = 0x30000, scoped, tag = 'input window, operand 7, single buffered']
    #allocation12 [shape = 'u8[65536]{0}', space=vmem, size = 0x10000, scoped, tag = 'input window, operand 9, single buffered']
    #allocation13 [shape = 's32[1]{0}', space=sflag, size = 0x4, scoped, tag = 'scoped memory for text_only_forward.1']
    #allocation14 [shape = 'u8[1024]{0}', space=vmem, size = 0x400, scoped, tag = 'input window, operand 10, single buffered']
    #allocation15 [shape = 'u8[1024]{0}', space=vmem, size = 0x400, scoped, tag = 'input window, operand 11, single buffered']
    #allocation16 [shape = 's32[1]{0}', space=sflag, size = 0x4, scoped, tag = 'scoped memory for text_only_forward.1']
    #allocation17 [shape = 'u8[1024]{0}', space=vmem, size = 0x400, scoped, tag = 'input window, operand 12, single buffered']
    #allocation18 [shape = 'u8[131072]{0}', space=vmem, size = 0x20000, scoped, tag = 'input window, operand 13, single buffered']
    #allocation19 [shape = 's32[1]{0}', space=sflag, size = 0x4, scoped, tag = 'scoped memory for text_only_forward.1']
    #allocation20 [shape = 'u8[2048]{0}', space=vmem, size = 0x800, scoped, tag = 'input window, operand 14, single buffered']
    #allocation21 [shape = 'u8[131072]{0}', space=vmem, size = 0x20000, scoped, tag = 'input window, operand 15, single buffered']
    #allocation22 [shape = 's32[1]{0}', space=sflag, size = 0x4, scoped, tag = 'scoped memory for text_only_forward.1']
    #allocation23 [shape = 'u8[1024]{0}', space=vmem, size = 0x400, scoped, tag = 'input window, operand 16, single buffered']
    #allocation24 [shape = 'u8[1024]{0}', space=vmem, size = 0x400, scoped, tag = 'input window, operand 17, single buffered']
    #allocation25 [shape = 's32[1]{0}', space=sflag, size = 0x4, scoped, tag = 'scoped memory for text_only_forward.1']
    #allocation26 [shape = 'u8[1024]{0}', space=vmem, size = 0x400, scoped, tag = 'input window, operand 18, single buffered']
    #allocation27 [shape = 'u8[32768]{0}', space=vmem, size = 0x8000, scoped, tag = 'input window, operand 19, single buffered']
    #allocation28 [shape = 's32[1]{0}', space=sflag, size = 0x4, scoped, tag = 'scoped memory for text_only_forward.1']
    #allocation29 [shape = 'u8[512]{0}', space=vmem, size = 0x400, scoped, tag = 'input window, operand 20, single buffered']
    #allocation30 [shape = 'u8[32768]{0}', space=vmem, size = 0x8000, scoped, tag = 'input window, operand 21, single buffered']
    #allocation31 [shape = 's32[1]{0}', space=sflag, size = 0x4, scoped, tag = 'scoped memory for text_only_forward.1']
    %33 = vsyncpa [#allocation5], 0
    %34 = vsyncpa [#allocation7], 0
    %35 = vsyncpa [#allocation10], 0
    %36 = vsyncpa [#allocation13], 0
    %37 = vsyncpa [#allocation16], 0
    %38 = vsyncpa [#allocation19], 0
    %39 = vsyncpa [#allocation22], 0
    %40 = vsyncpa [#allocation25], 0
    %41 = vsyncpa [#allocation28], 0
    %42 = vsyncpa [#allocation31], 0
    // Predicated region
    $region2: #{text_only_forward.1} parent=1 // pred_check
      _
    $region3: #{text_only_forward.1} parent=1 // pred_check_branch
      %44 = sbr.rel (0) target = $region5
    $region4: #{text_only_forward.1} parent=1 // pred_region
      _
    $region5: #{text_only_forward.1} parent=1 // pred_fallthru
      _
    // Predicated region
    $region6: #{text_only_forward.1} parent=1 // pred_check
      _
    $region7: #{text_only_forward.1} parent=1 // pred_check_branch
      %46 = sbr.rel (0) target = $region9
    $region8: #{text_only_forward.1} parent=1 // pred_region
      _
    $region9: #{text_only_forward.1} parent=1 // pred_fallthru
      _
    // Predicated region
    $region10: #{text_only_forward.1} parent=1 // pred_check
      _
    $region11: #{text_only_forward.1} parent=1 // pred_check_branch
      %48 = sbr.rel (0) target = $region13
    $region12: #{text_only_forward.1} parent=1 // pred_region
      %s50 = ssub.s32 640, 640
      %51 = vsyncadd [#allocation5], %s50
      %s52 = sshll.u32 [#allocation4], 4
      %s53 = int_to_ptr.vmem [resolvable:$true] %s52
      %58 = dma.hbm_to_vmem [thread:$0]  %s3, 640, %s53, [#allocation5], 16, 16, 1
    $region13: #{text_only_forward.1} parent=1 // pred_fallthru
      _
    // Predicated region
    $region14: #{text_only_forward.1} parent=1 // pred_check
      _
    $region15: #{text_only_forward.1} parent=1 // pred_check_branch
      %60 = sbr.rel (0) target = $region17
    $region16: #{text_only_forward.1} parent=1 // pred_region
      %s62 = ssub.s32 16, 16
      %63 = vsyncadd [#allocation7], %s62
      %s65 = sshll.u32 [#allocation6], 4
      %s66 = int_to_ptr.vmem [resolvable:$true] %s65
      %68 = dma.hbm_to_vmem [thread:$0]  %s4, 16, %s66, [#allocation7]
    $region17: #{text_only_forward.1} parent=1 // pred_fallthru
      _
    // Predicated region
    $region18: #{text_only_forward.1} parent=1 // pred_check
      _
    $region19: #{text_only_forward.1} parent=1 // pred_check_branch
      %70 = sbr.rel (0) target = $region21
    $region20: #{text_only_forward.1} parent=1 // pred_region
      %s72 = ssub.s32 16, 16
      %73 = vsyncadd [#allocation7], %s72
      %s75 = sshll.u32 [#allocation8], 4
      %s76 = int_to_ptr.vmem [resolvable:$true] %s75
      %78 = dma.hbm_to_vmem [thread:$0]  %s5, 16, %s76, [#allocation7]
    $region21: #{text_only_forward.1} parent=1 // pred_fallthru
      _
    // Predicated region
    $region22: #{text_only_forward.1} parent=1 // pred_check
      _
    $region23: #{text_only_forward.1} parent=1 // pred_check_branch
      %80 = sbr.rel (0) target = $region25
    $region24: #{text_only_forward.1} parent=1 // pred_region
      %s82 = ssub.s32 16, 16
      %83 = vsyncadd [#allocation10], %s82
      %s85 = sshll.u32 [#allocation9], 4
      %s86 = int_to_ptr.vmem [resolvable:$true] %s85
      %88 = dma.hbm_to_vmem [thread:$0]  %s6, 16, %s86, [#allocation10]
    $region25: #{text_only_forward.1} parent=1 // pred_fallthru
      _
    // Predicated region
    $region26: #{text_only_forward.1} parent=1 // pred_check
      _
    $region27: #{text_only_forward.1} parent=1 // pred_check_branch
      %90 = sbr.rel (0) target = $region29
    $region28: #{text_only_forward.1} parent=1 // pred_region
      %s92 = ssub.s32 6144, 6144
      %93 = vsyncadd [#allocation10], %s92
      %s94 = sshll.u32 [#allocation11], 4
      %s95 = int_to_ptr.vmem [resolvable:$true] %s94
      %100 = dma.hbm_to_vmem [thread:$0]  %s7, 6144, %s95, [#allocation10], 192, 192, 12
    $region29: #{text_only_forward.1} parent=1 // pred_fallthru
      _
    // Predicated region
    $region30: #{text_only_forward.1} parent=1 // pred_check
      _
    $region31: #{text_only_forward.1} parent=1 // pred_check_branch
      %102 = sbr.rel (0) target = $region33
    $region32: #{text_only_forward.1} parent=1 // pred_region
      _
    $region33: #{text_only_forward.1} parent=1 // pred_fallthru
      _
    // Predicated region
    $region34: #{text_only_forward.1} parent=1 // pred_check
      _
    $region35: #{text_only_forward.1} parent=1 // pred_check_branch
      %104 = sbr.rel (0) target = $region37
    $region36: #{text_only_forward.1} parent=1 // pred_region
      %s106 = ssub.s32 2048, 2048
      %107 = vsyncadd [#allocation13], %s106
      %s108 = sshll.u32 [#allocation12], 4
      %s109 = int_to_ptr.vmem [resolvable:$true] %s108
      %114 = dma.hbm_to_vmem [thread:$0]  %s9, 2048, %s109, [#allocation13], 64, 64, 4
    $region37: #{text_only_forward.1} parent=1 // pred_fallthru
      _
    // Predicated region
    $region38: #{text_only_forward.1} parent=1 // pred_check
      _
    $region39: #{text_only_forward.1} parent=1 // pred_check_branch
      %116 = sbr.rel (0) target = $region41
    $region40: #{text_only_forward.1} parent=1 // pred_region
      %s118 = ssub.s32 32, 32
      %119 = vsyncadd [#allocation13], %s118
      %s120 = sshll.u32 [#allocation14], 4
      %s121 = int_to_ptr.vmem [resolvable:$true] %s120
      %126 = dma.hbm_to_vmem [thread:$0]  %s10, 32, %s121, [#allocation13], 16, 16, 1
    $region41: #{text_only_forward.1} parent=1 // pred_fallthru
      _
    // Predicated region
    $region42: #{text_only_forward.1} parent=1 // pred_check
      _
    $region43: #{text_only_forward.1} parent=1 // pred_check_branch
      %128 = sbr.rel (0) target = $region45
    $region44: #{text_only_forward.1} parent=1 // pred_region
      %s130 = ssub.s32 32, 32
      %131 = vsyncadd [#allocation16], %s130
      %s132 = sshll.u32 [#allocation15], 4
      %s133 = int_to_ptr.vmem [resolvable:$true] %s132
      %138 = dma.hbm_to_vmem [thread:$0]  %s11, 32, %s133, [#allocation16], 16, 16, 1
    $region45: #{text_only_forward.1} parent=1 // pred_fallthru
      _
    // Predicated region
    $region46: #{text_only_forward.1} parent=1 // pred_check
      _
    $region47: #{text_only_forward.1} parent=1 // pred_check_branch
      %140 = sbr.rel (0) target = $region49
    $region48: #{text_only_forward.1} parent=1 // pred_region
      %s142 = ssub.s32 32, 32
      %143 = vsyncadd [#allocation16], %s142
      %s144 = sshll.u32 [#allocation17], 4
      %s145 = int_to_ptr.vmem [resolvable:$true] %s144
      %150 = dma.hbm_to_vmem [thread:$0]  %s12, 32, %s145, [#allocation16], 16, 16, 1
    $region49: #{text_only_forward.1} parent=1 // pred_fallthru
      _
    // Predicated region
    $region50: #{text_only_forward.1} parent=1 // pred_check
      _
    $region51: #{text_only_forward.1} parent=1 // pred_check_branch
      %152 = sbr.rel (0) target = $region53
    $region52: #{text_only_forward.1} parent=1 // pred_region
      %s154 = ssub.s32 4096, 4096
      %155 = vsyncadd [#allocation19], %s154
      %s156 = sshll.u32 [#allocation18], 4
      %s157 = int_to_ptr.vmem [resolvable:$true] %s156
      %162 = dma.hbm_to_vmem [thread:$0]  %s13, 4096, %s157, [#allocation19], 128, 128, 8
    $region53: #{text_only_forward.1} parent=1 // pred_fallthru
      _
    // Predicated region
    $region54: #{text_only_forward.1} parent=1 // pred_check
      _
    $region55: #{text_only_forward.1} parent=1 // pred_check_branch
      %164 = sbr.rel (0) target = $region57
    $region56: #{text_only_forward.1} parent=1 // pred_region
      %s166 = ssub.s32 64, 64
      %167 = vsyncadd [#allocation19], %s166
      %s168 = sshll.u32 [#allocation20], 4
      %s169 = int_to_ptr.vmem [resolvable:$true] %s168
      %174 = dma.hbm_to_vmem [thread:$0]  %s14, 64, %s169, [#allocation19], 32, 32, 2
    $region57: #{text_only_forward.1} parent=1 // pred_fallthru
      _
    // Predicated region
    $region58: #{text_only_forward.1} parent=1 // pred_check
      _
    $region59: #{text_only_forward.1} parent=1 // pred_check_branch
      %176 = sbr.rel (0) target = $region61
    $region60: #{text_only_forward.1} parent=1 // pred_region
      %s178 = ssub.s32 4096, 4096
      %179 = vsyncadd [#allocation22], %s178
      %s180 = sshll.u32 [#allocation21], 4
      %s181 = int_to_ptr.vmem [resolvable:$true] %s180
      %186 = dma.hbm_to_vmem [thread:$0]  %s15, 4096, %s181, [#allocation22], 64, 64, 4
    $region61: #{text_only_forward.1} parent=1 // pred_fallthru
      _
    // Predicated region
    $region62: #{text_only_forward.1} parent=1 // pred_check
      _
    $region63: #{text_only_forward.1} parent=1 // pred_check_branch
      %188 = sbr.rel (0) target = $region65
    $region64: #{text_only_forward.1} parent=1 // pred_region
      %s190 = ssub.s32 32, 32
      %191 = vsyncadd [#allocation22], %s190
      %s192 = sshll.u32 [#allocation23], 4
      %s193 = int_to_ptr.vmem [resolvable:$true] %s192
      %198 = dma.hbm_to_vmem [thread:$0]  %s16, 32, %s193, [#allocation22], 16, 16, 1
    $region65: #{text_only_forward.1} parent=1 // pred_fallthru
      _
    // Predicated region
    $region66: #{text_only_forward.1} parent=1 // pred_check
      _
    $region67: #{text_only_forward.1} parent=1 // pred_check_branch
      %200 = sbr.rel (0) target = $region69
    $region68: #{text_only_forward.1} parent=1 // pred_region
      %s202 = ssub.s32 32, 32
      %203 = vsyncadd [#allocation25], %s202
      %s204 = sshll.u32 [#allocation24], 4
      %s205 = int_to_ptr.vmem [resolvable:$true] %s204
      %210 = dma.hbm_to_vmem [thread:$0]  %s17, 32, %s205, [#allocation25], 16, 16, 1
    $region69: #{text_only_forward.1} parent=1 // pred_fallthru
      _
    // Predicated region
    $region70: #{text_only_forward.1} parent=1 // pred_check
      _
    $region71: #{text_only_forward.1} parent=1 // pred_check_branch
      %212 = sbr.rel (0) target = $region73
    $region72: #{text_only_forward.1} parent=1 // pred_region
      %s214 = ssub.s32 32, 32
      %215 = vsyncadd [#allocation25], %s214
      %s216 = sshll.u32 [#allocation26], 4
      %s217 = int_to_ptr.vmem [resolvable:$true] %s216
      %222 = dma.hbm_to_vmem [thread:$0]  %s18, 32, %s217, [#allocation25], 16, 16, 1
    $region73: #{text_only_forward.1} parent=1 // pred_fallthru
      _
    // Predicated region
    $region74: #{text_only_forward.1} parent=1 // pred_check
      _
    $region75: #{text_only_forward.1} parent=1 // pred_check_branch
      %224 = sbr.rel (0) target = $region77
    $region76: #{text_only_forward.1} parent=1 // pred_region
      %s226 = ssub.s32 1024, 1024
      %227 = vsyncadd [#allocation28], %s226
      %s228 = sshll.u32 [#allocation27], 4
      %s229 = int_to_ptr.vmem [resolvable:$true] %s228
      %234 = dma.hbm_to_vmem [thread:$0]  %s19, 1024, %s229, [#allocation28], 64, 64, 4
    $region77: #{text_only_forward.1} parent=1 // pred_fallthru
      _
    // Predicated region
    $region78: #{text_only_forward.1} parent=1 // pred_check
      _
    $region79: #{text_only_forward.1} parent=1 // pred_check_branch
      %236 = sbr.rel (0) target = $region81
    $region80: #{text_only_forward.1} parent=1 // pred_region
      %s238 = ssub.s32 16, 16
      %239 = vsyncadd [#allocation28], %s238
      %s241 = sshll.u32 [#allocation29], 4
      %s242 = int_to_ptr.vmem [resolvable:$true] %s241
      %244 = dma.hbm_to_vmem [thread:$0]  %s20, 16, %s242, [#allocation28]
    $region81: #{text_only_forward.1} parent=1 // pred_fallthru
      _
    // Predicated region
    $region82: #{text_only_forward.1} parent=1 // pred_check
      _
    $region83: #{text_only_forward.1} parent=1 // pred_check_branch
      %246 = sbr.rel (0) target = $region85
    $region84: #{text_only_forward.1} parent=1 // pred_region
      %s248 = ssub.s32 1024, 1024
      %249 = vsyncadd [#allocation31], %s248
      %s250 = sshll.u32 [#allocation30], 4
      %s251 = int_to_ptr.vmem [resolvable:$true] %s250
      %256 = dma.hbm_to_vmem [thread:$0]  %s21, 1024, %s251, [#allocation31], 64, 64, 4
    $region85: #{text_only_forward.1} parent=1 // pred_fallthru
      _
    // Predicated region
    $region86: #{text_only_forward.1} parent=1 // pred_check
      _
    $region87: #{text_only_forward.1} parent=1 // pred_check_branch
      %258 = sbr.rel (0) target = $region89
    $region88: #{text_only_forward.1} parent=1 // pred_region
      %259 = dma.done [#allocation5], 640
    $region89: #{text_only_forward.1} parent=1 // pred_fallthru
      _
    // Predicated region
    $region90: #{text_only_forward.1} parent=1 // pred_check
      _
    $region91: #{text_only_forward.1} parent=1 // pred_check_branch
      %261 = sbr.rel (0) target = $region93
    $region92: #{text_only_forward.1} parent=1 // pred_region
      %262 = dma.done [#allocation7], 16
    $region93: #{text_only_forward.1} parent=1 // pred_fallthru
      _
    // Predicated region
    $region94: #{text_only_forward.1} parent=1 // pred_check
      _
    $region95: #{text_only_forward.1} parent=1 // pred_check_branch
      %264 = sbr.rel (0) target = $region97
    $region96: #{text_only_forward.1} parent=1 // pred_region
      %265 = dma.done [#allocation7], 16
    $region97: #{text_only_forward.1} parent=1 // pred_fallthru
      _
    // Predicated region
    $region98: #{text_only_forward.1} parent=1 // pred_check
      _
    $region99: #{text_only_forward.1} parent=1 // pred_check_branch
      %267 = sbr.rel (0) target = $region101
    $region100: #{text_only_forward.1} parent=1 // pred_region
      %268 = dma.done [#allocation10], 16
    $region101: #{text_only_forward.1} parent=1 // pred_fallthru
      _
    // Predicated region
    $region102: #{text_only_forward.1} parent=1 // pred_check
      _
    $region103: #{text_only_forward.1} parent=1 // pred_check_branch
      %270 = sbr.rel (0) target = $region105
    $region104: #{text_only_forward.1} parent=1 // pred_region
      %271 = dma.done [#allocation10], 6144
    $region105: #{text_only_forward.1} parent=1 // pred_fallthru
      _
    // Predicated region
    $region106: #{text_only_forward.1} parent=1 // pred_check
      _
    $region107: #{text_only_forward.1} parent=1 // pred_check_branch
      %273 = sbr.rel (0) target = $region109
    $region108: #{text_only_forward.1} parent=1 // pred_region
      %274 = dma.done [#allocation13], 2048
    $region109: #{text_only_forward.1} parent=1 // pred_fallthru
      _
    // Predicated region
    $region110: #{text_only_forward.1} parent=1 // pred_check
      _
    $region111: #{text_only_forward.1} parent=1 // pred_check_branch
      %276 = sbr.rel (0) target = $region113
    $region112: #{text_only_forward.1} parent=1 // pred_region
      %277 = dma.done [#allocation13], 32
    $region113: #{text_only_forward.1} parent=1 // pred_fallthru
      _
    // Predicated region
    $region114: #{text_only_forward.1} parent=1 // pred_check
      _
    $region115: #{text_only_forward.1} parent=1 // pred_check_branch
      %279 = sbr.rel (0) target = $region117
    $region116: #{text_only_forward.1} parent=1 // pred_region
      %280 = dma.done [#allocation16], 32
    $region117: #{text_only_forward.1} parent=1 // pred_fallthru
      _
    // Predicated region
    $region118: #{text_only_forward.1} parent=1 // pred_check
      _
    $region119: #{text_only_forward.1} parent=1 // pred_check_branch
      %282 = sbr.rel (0) target = $region121
    $region120: #{text_only_forward.1} parent=1 // pred_region
      %283 = dma.done [#allocation16], 32
    $region121: #{text_only_forward.1} parent=1 // pred_fallthru
      _
    // Predicated region
    $region122: #{text_only_forward.1} parent=1 // pred_check
      _
    $region123: #{text_only_forward.1} parent=1 // pred_check_branch
      %285 = sbr.rel (0) target = $region125
    $region124: #{text_only_forward.1} parent=1 // pred_region
      %286 = dma.done [#allocation19], 4096
    $region125: #{text_only_forward.1} parent=1 // pred_fallthru
      _
    // Predicated region
    $region126: #{text_only_forward.1} parent=1 // pred_check
      _
    $region127: #{text_only_forward.1} parent=1 // pred_check_branch
      %288 = sbr.rel (0) target = $region129
    $region128: #{text_only_forward.1} parent=1 // pred_region
      %289 = dma.done [#allocation19], 64
    $region129: #{text_only_forward.1} parent=1 // pred_fallthru
      _
    // Predicated region
    $region130: #{text_only_forward.1} parent=1 // pred_check
      _
    $region131: #{text_only_forward.1} parent=1 // pred_check_branch
      %291 = sbr.rel (0) target = $region133
    $region132: #{text_only_forward.1} parent=1 // pred_region
      %292 = dma.done [#allocation22], 4096
    $region133: #{text_only_forward.1} parent=1 // pred_fallthru
      _
    // Predicated region
    $region134: #{text_only_forward.1} parent=1 // pred_check
      _
    $region135: #{text_only_forward.1} parent=1 // pred_check_branch
      %294 = sbr.rel (0) target = $region137
    $region136: #{text_only_forward.1} parent=1 // pred_region
      %295 = dma.done [#allocation22], 32
    $region137: #{text_only_forward.1} parent=1 // pred_fallthru
      _
    // Predicated region
    $region138: #{text_only_forward.1} parent=1 // pred_check
      _
    $region139: #{text_only_forward.1} parent=1 // pred_check_branch
      %297 = sbr.rel (0) target = $region141
    $region140: #{text_only_forward.1} parent=1 // pred_region
      %298 = dma.done [#allocation25], 32
    $region141: #{text_only_forward.1} parent=1 // pred_fallthru
      _
    // Predicated region
    $region142: #{text_only_forward.1} parent=1 // pred_check
      _
    $region143: #{text_only_forward.1} parent=1 // pred_check_branch
      %300 = sbr.rel (0) target = $region145
    $region144: #{text_only_forward.1} parent=1 // pred_region
      %301 = dma.done [#allocation25], 32
    $region145: #{text_only_forward.1} parent=1 // pred_fallthru
      _
    // Predicated region
    $region146: #{text_only_forward.1} parent=1 // pred_check
      _
    $region147: #{text_only_forward.1} parent=1 // pred_check_branch
      %303 = sbr.rel (0) target = $region149
    $region148: #{text_only_forward.1} parent=1 // pred_region
      %304 = dma.done [#allocation28], 1024
    $region149: #{text_only_forward.1} parent=1 // pred_fallthru
      _
    // Predicated region
    $region150: #{text_only_forward.1} parent=1 // pred_check
      _
    $region151: #{text_only_forward.1} parent=1 // pred_check_branch
      %306 = sbr.rel (0) target = $region153
    $region152: #{text_only_forward.1} parent=1 // pred_region
      %307 = dma.done [#allocation28], 16
    $region153: #{text_only_forward.1} parent=1 // pred_fallthru
      _
    // Predicated region
    $region154: #{text_only_forward.1} parent=1 // pred_check
      _
    $region155: #{text_only_forward.1} parent=1 // pred_check_branch
      %309 = sbr.rel (0) target = $region157
    $region156: #{text_only_forward.1} parent=1 // pred_region
      %310 = dma.done [#allocation31], 1024
    $region157: #{text_only_forward.1} parent=1 // pred_fallthru
      _
    %v312 = vld [vmem:[#allocation6] sm:$0x1]
    %s313 = sld [smem:[#allocation3]]
    %p314 = scmp.ne.s32.totalorder %s313, 1
    %s315 = scalar_select %p314, 1, 0
    %s316 = smul.u32 %s315, %s315
    %s317 = sadd.s32 %s316, 1
    %s318 = scalar_lea.vmem %s2, %s313
    %v319 = vld [vmem:[%s318] sm:$0x1]
    %s320 = scalar_lea.vmem [#allocation4], %s317
    %v321 = vld [vmem:[%s320] sm:$0x1]
    %v322 = vadd.f32 %v319, %v321
    %v323 = vadd.f32 %v322, %v312
    %s324 = sld [smem:[#allocation3 + $0x1]]
    %p325 = scmp.ne.s32.totalorder %s324, 1
    %s326 = scalar_select %p325, 1, 0
    %s327 = sadd.s32 %s315, %s326
    %s328 = smul.u32 %s327, %s326
    %s329 = sadd.s32 %s328, 1
    %s330 = scalar_lea.vmem %s2, %s324
    %v331 = vld [vmem:[%s330] sm:$0x1]
    %s332 = scalar_lea.vmem [#allocation4], %s329
    %v333 = vld [vmem:[%s332] sm:$0x1]
    %v334 = vadd.f32 %v331, %v333
    %v335 = vadd.f32 %v334, %v312
    %s336 = sld [smem:[#allocation3 + $0x2]]
    %p337 = scmp.ne.s32.totalorder %s336, 1
    %s338 = scalar_select %p337, 1, 0
    %s339 = sadd.s32 %s327, %s338
    %s340 = smul.u32 %s339, %s338
    %s341 = sadd.s32 %s340, 1
    %s342 = scalar_lea.vmem %s2, %s336
    %v343 = vld [vmem:[%s342] sm:$0x1]
    %s344 = scalar_lea.vmem [#allocation4], %s341
    %v345 = vld [vmem:[%s344] sm:$0x1]
    %v346 = vadd.f32 %v343, %v345
    %v347 = vadd.f32 %v346, %v312
    %s348 = sld [smem:[#allocation3 + $0x3]]
    %p349 = scmp.ne.s32.totalorder %s348, 1
    %s350 = scalar_select %p349, 1, 0
    %s351 = sadd.s32 %s339, %s350
    %s352 = smul.u32 %s351, %s350
    %s353 = sadd.s32 %s352, 1
    %s354 = scalar_lea.vmem %s2, %s348
    %v355 = vld [vmem:[%s354] sm:$0x1]
    %s356 = scalar_lea.vmem [#allocation4], %s353
    %v357 = vld [vmem:[%s356] sm:$0x1]
    %v358 = vadd.f32 %v355, %v357
    %v359 = vadd.f32 %v358, %v312
    %s360 = sld [smem:[#allocation3 + $0x4]]
    %p361 = scmp.ne.s32.totalorder %s360, 1
    %s362 = scalar_select %p361, 1, 0
    %s363 = sadd.s32 %s351, %s362
    %s364 = smul.u32 %s363, %s362
    %s365 = sadd.s32 %s364, 1
    %s366 = scalar_lea.vmem %s2, %s360
    %v367 = vld [vmem:[%s366] sm:$0x1]
    %s368 = scalar_lea.vmem [#allocation4], %s365
    %v369 = vld [vmem:[%s368] sm:$0x1]
    %v370 = vadd.f32 %v367, %v369
    %v371 = vadd.f32 %v370, %v312
    %s372 = sld [smem:[#allocation3 + $0x5]]
    %p373 = scmp.ne.s32.totalorder %s372, 1
    %s374 = scalar_select %p373, 1, 0
    %s375 = sadd.s32 %s363, %s374
    %s376 = smul.u32 %s375, %s374
    %s377 = sadd.s32 %s376, 1
    %s378 = scalar_lea.vmem %s2, %s372
    %v379 = vld [vmem:[%s378] sm:$0x1]
    %s380 = scalar_lea.vmem [#allocation4], %s377
    %v381 = vld [vmem:[%s380] sm:$0x1]
    %v382 = vadd.f32 %v379, %v381
    %v383 = vadd.f32 %v382, %v312
    %s384 = sld [smem:[#allocation3 + $0x6]]
    %p385 = scmp.ne.s32.totalorder %s384, 1
    %s386 = scalar_select %p385, 1, 0
    %s387 = sadd.s32 %s375, %s386
    %s388 = smul.u32 %s387, %s386
    %s389 = sadd.s32 %s388, 1
    %s390 = scalar_lea.vmem %s2, %s384
    %v391 = vld [vmem:[%s390] sm:$0x1]
    %s392 = scalar_lea.vmem [#allocation4], %s389
    %v393 = vld [vmem:[%s392] sm:$0x1]
    %v394 = vadd.f32 %v391, %v393
    %v395 = vadd.f32 %v394, %v312
    %s396 = sld [smem:[#allocation3 + $0x7]]
    %p397 = scmp.ne.s32.totalorder %s396, 1
    %s398 = scalar_select %p397, 1, 0
    %s399 = sadd.s32 %s387, %s398
    %s400 = smul.u32 %s399, %s398
    %s401 = sadd.s32 %s400, 1
    %s402 = scalar_lea.vmem %s2, %s396
    %v403 = vld [vmem:[%s402] sm:$0x1]
    %s404 = scalar_lea.vmem [#allocation4], %s401
    %v405 = vld [vmem:[%s404] sm:$0x1]
    %v406 = vadd.f32 %v403, %v405
    %v407 = vadd.f32 %v406, %v312
    %s408 = sld [smem:[#allocation3 + $0x8]]
    %p409 = scmp.ne.s32.totalorder %s408, 1
    %s410 = scalar_select %p409, 1, 0
    %s411 = smul.u32 %s410, %s410
    %s412 = sadd.s32 %s411, 1
    %s413 = scalar_lea.vmem %s2, %s408
    %v414 = vld [vmem:[%s413] sm:$0x1]
    %s415 = scalar_lea.vmem [#allocation4], %s412
    %v416 = vld [vmem:[%s415] sm:$0x1]
    %v417 = vadd.f32 %v414, %v416
    %v418 = vadd.f32 %v417, %v312
    %s419 = sld [smem:[#allocation3 + $0x9]]
    %p420 = scmp.ne.s32.totalorder %s419, 1
    %s421 = scalar_select %p420, 1, 0
    %s422 = sadd.s32 %s410, %s421
    %s423 = smul.u32 %s422, %s421
    %s424 = sadd.s32 %s423, 1
    %s425 = scalar_lea.vmem %s2, %s419
    %v426 = vld [vmem:[%s425] sm:$0x1]
    %s427 = scalar_lea.vmem [#allocation4], %s424
    %v428 = vld [vmem:[%s427] sm:$0x1]
    %v429 = vadd.f32 %v426, %v428
    %v430 = vadd.f32 %v429, %v312
    %s431 = sld [smem:[#allocation3 + $0xa]]
    %p432 = scmp.ne.s32.totalorder %s431, 1
    %s433 = scalar_select %p432, 1, 0
    %s434 = sadd.s32 %s422, %s433
    %s435 = smul.u32 %s434, %s433
    %s436 = sadd.s32 %s435, 1
    %s437 = scalar_lea.vmem %s2, %s431
    %v438 = vld [vmem:[%s437] sm:$0x1]
    %s439 = scalar_lea.vmem [#allocation4], %s436
    %v440 = vld [vmem:[%s439] sm:$0x1]
    %v441 = vadd.f32 %v438, %v440
    %v442 = vadd.f32 %v441, %v312
    %s443 = sld [smem:[#allocation3 + $0xb]]
    %p444 = scmp.ne.s32.totalorder %s443, 1
    %s445 = scalar_select %p444, 1, 0
    %s446 = sadd.s32 %s434, %s445
    %s447 = smul.u32 %s446, %s445
    %s448 = sadd.s32 %s447, 1
    %s449 = scalar_lea.vmem %s2, %s443
    %v450 = vld [vmem:[%s449] sm:$0x1]
    %s451 = scalar_lea.vmem [#allocation4], %s448
    %v452 = vld [vmem:[%s451] sm:$0x1]
    %v453 = vadd.f32 %v450, %v452
    %v454 = vadd.f32 %v453, %v312
    %s455 = sld [smem:[#allocation3 + $0xc]]
    %p456 = scmp.ne.s32.totalorder %s455, 1
    %s457 = scalar_select %p456, 1, 0
    %s458 = sadd.s32 %s446, %s457
    %s459 = smul.u32 %s458, %s457
    %s460 = sadd.s32 %s459, 1
    %s461 = scalar_lea.vmem %s2, %s455
    %v462 = vld [vmem:[%s461] sm:$0x1]
    %s463 = scalar_lea.vmem [#allocation4], %s460
    %v464 = vld [vmem:[%s463] sm:$0x1]
    %v465 = vadd.f32 %v462, %v464
    %v466 = vadd.f32 %v465, %v312
    %s467 = sld [smem:[#allocation3 + $0xd]]
    %p468 = scmp.ne.s32.totalorder %s467, 1
    %s469 = scalar_select %p468, 1, 0
    %s470 = sadd.s32 %s458, %s469
    %s471 = smul.u32 %s470, %s469
    %s472 = sadd.s32 %s471, 1
    %s473 = scalar_lea.vmem %s2, %s467
    %v474 = vld [vmem:[%s473] sm:$0x1]
    %s475 = scalar_lea.vmem [#allocation4], %s472
    %v476 = vld [vmem:[%s475] sm:$0x1]
    %v477 = vadd.f32 %v474, %v476
    %v478 = vadd.f32 %v477, %v312
    %s479 = sld [smem:[#allocation3 + $0xe]]
    %p480 = scmp.ne.s32.totalorder %s479, 1
    %s481 = scalar_select %p480, 1, 0
    %s482 = sadd.s32 %s470, %s481
    %s483 = smul.u32 %s482, %s481
    %s484 = sadd.s32 %s483, 1
    %s485 = scalar_lea.vmem %s2, %s479
    %v486 = vld [vmem:[%s485] sm:$0x1]
    %s487 = scalar_lea.vmem [#allocation4], %s484
    %v488 = vld [vmem:[%s487] sm:$0x1]
    %v489 = vadd.f32 %v486, %v488
    %v490 = vadd.f32 %v489, %v312
    %s491 = sld [smem:[#allocation3 + $0xf]]
    %p492 = scmp.ne.s32.totalorder %s491, 1
    %s493 = scalar_select %p492, 1, 0
    %s494 = sadd.s32 %s482, %s493
    %s495 = smul.u32 %s494, %s493
    %s496 = sadd.s32 %s495, 1
    %s497 = scalar_lea.vmem %s2, %s491
    %v498 = vld [vmem:[%s497] sm:$0x1]
    %s499 = scalar_lea.vmem [#allocation4], %s496
    %v500 = vld [vmem:[%s499] sm:$0x1]
    %v501 = vadd.f32 %v498, %v500
    %v502 = vadd.f32 %v501, %v312
    %v504 = vlaneseq
    %v505 = vshrl.u32 %v504, 7
    %v506 = vsub.s32 0, %v505
    %v507 = vrot.slane %v335, %v506
    %v510 = vlaneseq
    %v511 = vshrl.u32 %v510, 7
    %v512 = vsub.s32 0, %v511
    %v513 = vrot.slane %v347, %v512
    %v516 = vlaneseq
    %v517 = vshrl.u32 %v516, 7
    %v518 = vsub.s32 0, %v517
    %v519 = vrot.slane %v359, %v518
    %v522 = vlaneseq
    %v523 = vshrl.u32 %v522, 7
    %v524 = vsub.s32 0, %v523
    %v525 = vrot.slane %v371, %v524
    %v528 = vlaneseq
    %v529 = vshrl.u32 %v528, 7
    %v530 = vsub.s32 0, %v529
    %v531 = vrot.slane %v383, %v530
    %v534 = vlaneseq
    %v535 = vshrl.u32 %v534, 7
    %v536 = vsub.s32 0, %v535
    %v537 = vrot.slane %v395, %v536
    %v540 = vlaneseq
    %v541 = vshrl.u32 %v540, 7
    %v542 = vsub.s32 0, %v541
    %v543 = vrot.slane %v407, %v542
    %v546 = vlaneseq
    %v547 = vshrl.u32 %v546, 7
    %v548 = vsub.s32 0, %v547
    %v549 = vrot.slane %v430, %v548
    %v552 = vlaneseq
    %v553 = vshrl.u32 %v552, 7
    %v554 = vsub.s32 0, %v553
    %v555 = vrot.slane %v442, %v554
    %v558 = vlaneseq
    %v559 = vshrl.u32 %v558, 7
    %v560 = vsub.s32 0, %v559
    %v561 = vrot.slane %v454, %v560
    %v564 = vlaneseq
    %v565 = vshrl.u32 %v564, 7
    %v566 = vsub.s32 0, %v565
    %v567 = vrot.slane %v466, %v566
    %v570 = vlaneseq
    %v571 = vshrl.u32 %v570, 7
    %v572 = vsub.s32 0, %v571
    %v573 = vrot.slane %v478, %v572
    %v576 = vlaneseq
    %v577 = vshrl.u32 %v576, 7
    %v578 = vsub.s32 0, %v577
    %v579 = vrot.slane %v490, %v578
    %v582 = vlaneseq
    %v583 = vshrl.u32 %v582, 7
    %v584 = vsub.s32 0, %v583
    %v585 = vrot.slane %v502, %v584
    %vm587 = vcmask 1040384
    %v588 = vsel %vm587, %v323, %v507
    %vm589 = vcmask 1041408
    %v590 = vsel %vm589, %v588, %v513
    %vm591 = vcmask 1042432
    %v592 = vsel %vm591, %v590, %v519
    %vm593 = vcmask 1043456
    %v594 = vsel %vm593, %v592, %v525
    %vm595 = vcmask 1044480
    %v596 = vsel %vm595, %v594, %v531
    %vm597 = vcmask 1045504
    %v598 = vsel %vm597, %v596, %v537
    %vm599 = vcmask 1046528
    %v600 = vsel %vm599, %v598, %v543
    %v601 = vsel %vm587, %v418, %v549
    %v602 = vsel %vm589, %v601, %v555
    %v603 = vsel %vm591, %v602, %v561
    %v604 = vsel %vm593, %v603, %v567
    %v605 = vsel %vm595, %v604, %v573
    %v606 = vsel %vm597, %v605, %v579
    %v607 = vsel %vm599, %v606, %v585
    %v608 = vld [vmem:[#allocation8] sm:$0x1]
    %v609 = vld [vmem:[#allocation9] sm:$0x1]
    %610 = vadd.xlane.f32.xlu0 %v600
    %v611 = vpop.xlane.xlu0 %610
    %612 = vadd.xlane.f32.xlu0 %v607
    %v613 = vpop.xlane.xlu0 %612
    %v614 = vrcp.pop 128.0
    %v615 = vmul.f32 %v611, %v614
    %v616 = vmul.f32 %v613, %v614
    %v617 = vsub.f32 %v600, %v615
    %v618 = vsub.f32 %v607, %v616
    %v619 = vmul.f32 %v617, %v617
    %v620 = vmul.f32 %v618, %v618
    %621 = vadd.xlane.f32.xlu0 %v619
    %v622 = vpop.xlane.xlu0 %621
    %623 = vadd.xlane.f32.xlu0 %v620
    %v624 = vpop.xlane.xlu0 %623
    %v625 = vmul.f32 %v622, %v614
    %v626 = vmul.f32 %v624, %v614
    %v627 = vadd.f32 %v625, 1e-05
    %v628 = vadd.f32 %v626, 1e-05
    %v629 = vrsqrt.pop %v627
    %v630 = vrsqrt.pop %v628
    %v631 = vmul.f32 %v617, %v629
    %v632 = vmul.f32 %v618, %v630
    %v634 = vlaneseq
    %v635 = vshrl.u32 %v634, 7
    %v636 = vsub.s32 0, %v635
    %v637 = vrot.slane %v608, %v636
    %v639 = vmul.f32 %v631, %v637
    %v640 = vmul.f32 %v632, %v637
    %v642 = vlaneseq
    %v643 = vshrl.u32 %v642, 7
    %v644 = vsub.s32 0, %v643
    %v645 = vrot.slane %v609, %v644
    %v647 = vadd.f32 %v639, %v645
    %v648 = vadd.f32 %v640, %v645
    %v649 = vld [vmem:[%s1] sm:$0xff]
    %v650 = vld [vmem:[%s1 + $0x8] sm:$0xff]
    %v651 = vld [vmem:[#allocation11] sm:$0xff]
    %v652 = vld [vmem:[#allocation11 + $0x8] sm:$0xf]
    %v653 = vld [vmem:[#allocation11 + $0xc] sm:$0xff]
    %v654 = vld [vmem:[#allocation11 + $0x14] sm:$0xf]
    %v655 = vld [vmem:[#allocation11 + $0x18] sm:$0xff]
    %v656 = vld [vmem:[#allocation11 + $0x20] sm:$0xf]
    %v657 = vld [vmem:[#allocation11 + $0x24] sm:$0xff]
    %v658 = vld [vmem:[#allocation11 + $0x2c] sm:$0xf]
    %v659 = vld [vmem:[#allocation11 + $0x30] sm:$0xff]
    %v660 = vld [vmem:[#allocation11 + $0x38] sm:$0xf]
    %v661 = vld [vmem:[#allocation11 + $0x3c] sm:$0xff]
    %v662 = vld [vmem:[#allocation11 + $0x44] sm:$0xf]
    %v663 = vld [vmem:[#allocation11 + $0x48] sm:$0xff]
    %v664 = vld [vmem:[#allocation11 + $0x50] sm:$0xf]
    %v665 = vld [vmem:[#allocation11 + $0x54] sm:$0xff]
    %v666 = vld [vmem:[#allocation11 + $0x5c] sm:$0xf]
    %v667 = vld [vmem:[#allocation11 + $0x60] sm:$0xff]
    %v668 = vld [vmem:[#allocation11 + $0x68] sm:$0xf]
    %v669 = vld [vmem:[#allocation11 + $0x6c] sm:$0xff]
    %v670 = vld [vmem:[#allocation11 + $0x74] sm:$0xf]
    %v671 = vld [vmem:[#allocation11 + $0x78] sm:$0xff]
    %v672 = vld [vmem:[#allocation11 + $0x80] sm:$0xf]
    %v673 = vld [vmem:[#allocation11 + $0x84] sm:$0xff]
    %v674 = vld [vmem:[#allocation11 + $0x8c] sm:$0xf]
    %v675 = vld [vmem:[#allocation11 + $0x90] sm:$0xff]
    %v676 = vld [vmem:[#allocation11 + $0x98] sm:$0xf]
    %v677 = vld [vmem:[#allocation11 + $0x9c] sm:$0xff]
    %v678 = vld [vmem:[#allocation11 + $0xa4] sm:$0xf]
    %v679 = vld [vmem:[#allocation11 + $0xa8] sm:$0xff]
    %v680 = vld [vmem:[#allocation11 + $0xb0] sm:$0xf]
    %v681 = vld [vmem:[#allocation11 + $0xb4] sm:$0xff]
    %v682 = vld [vmem:[#allocation11 + $0xbc] sm:$0xf]
    %v683 = vpack.c.bf16 %v648, %v647
    %v684 = vld [vmem:[%s8] sm:$0x7]
    %v686 = vlaneseq
    %v687 = vshrl.u32 %v686, 7
    %v688 = vsub.s32 0, %v687
    %v689 = vrot.slane %v684, %v688
    %v690 = vlaneseq
    %v691 = vshrl.u32 %v690, 7
    %v692 = vsub.s32 1, %v691
    %v693 = vrot.slane %v684, %v692
    %v694 = vlaneseq
    %v695 = vshrl.u32 %v694, 7
    %v696 = vsub.s32 2, %v695
    %v697 = vrot.slane %v684, %v696
    %v733 = vunpack.c.l.b16 %v651
    %v734 = vunpack.c.h.b16 %v651
    %v735 = vunpack.c.l.b16 %v652
    %v736 = vunpack.c.l.b16 %v653
    %v737 = vunpack.c.h.b16 %v653
    %v738 = vunpack.c.l.b16 %v654
    %v739 = vunpack.c.l.b16 %v655
    %v740 = vunpack.c.h.b16 %v655
    %v741 = vunpack.c.l.b16 %v656
    %v742 = vunpack.c.l.b16 %v657
    %v743 = vunpack.c.h.b16 %v657
    %v744 = vunpack.c.l.b16 %v658
    %v745 = vunpack.c.l.b16 %v659
    %v746 = vunpack.c.h.b16 %v659
    %v747 = vunpack.c.l.b16 %v660
    %v748 = vunpack.c.l.b16 %v661
    %v749 = vunpack.c.h.b16 %v661
    %v750 = vunpack.c.l.b16 %v662
    %v751 = vunpack.c.l.b16 %v663
    %v752 = vunpack.c.h.b16 %v663
    %v753 = vunpack.c.l.b16 %v664
    %v754 = vunpack.c.l.b16 %v665
    %v755 = vunpack.c.h.b16 %v665
    %v756 = vunpack.c.l.b16 %v666
    %v757 = vunpack.c.l.b16 %v667
    %v758 = vunpack.c.h.b16 %v667
    %v759 = vunpack.c.l.b16 %v668
    %v760 = vunpack.c.l.b16 %v669
    %v761 = vunpack.c.h.b16 %v669
    %v762 = vunpack.c.l.b16 %v670
    %v763 = vunpack.c.l.b16 %v671
    %v764 = vunpack.c.h.b16 %v671
    %v765 = vunpack.c.l.b16 %v672
    %v766 = vunpack.c.l.b16 %v673
    %v767 = vunpack.c.h.b16 %v673
    %v768 = vunpack.c.l.b16 %v674
    %v769 = vunpack.c.l.b16 %v675
    %v770 = vunpack.c.h.b16 %v675
    %v771 = vunpack.c.l.b16 %v676
    %v772 = vunpack.c.l.b16 %v677
    %v773 = vunpack.c.h.b16 %v677
    %v774 = vunpack.c.l.b16 %v678
    %v775 = vunpack.c.l.b16 %v679
    %v776 = vunpack.c.h.b16 %v679
    %v777 = vunpack.c.l.b16 %v680
    %v778 = vunpack.c.l.b16 %v681
    %v779 = vunpack.c.h.b16 %v681
    %v780 = vunpack.c.l.b16 %v682
    %v781 = vpack.c.b16 %v736, %v733
    %v782 = vpack.c.b16 %v737, %v734
    %v783 = vpack.c.b16 %v738, %v735
    %v784 = vpack.c.b16 %v742, %v739
    %v785 = vpack.c.b16 %v743, %v740
    %v786 = vpack.c.b16 %v744, %v741
    %v787 = vpack.c.b16 %v748, %v745
    %v788 = vpack.c.b16 %v749, %v746
    %v789 = vpack.c.b16 %v750, %v747
    %v790 = vpack.c.b16 %v754, %v751
    %v791 = vpack.c.b16 %v755, %v752
    %v792 = vpack.c.b16 %v756, %v753
    %v793 = vpack.c.b16 %v760, %v757
    %v794 = vpack.c.b16 %v761, %v758
    %v795 = vpack.c.b16 %v762, %v759
    %v796 = vpack.c.b16 %v766, %v763
    %v797 = vpack.c.b16 %v767, %v764
    %v798 = vpack.c.b16 %v768, %v765
    %v799 = vpack.c.b16 %v772, %v769
    %v800 = vpack.c.b16 %v773, %v770
    %v801 = vpack.c.b16 %v774, %v771
    %v802 = vpack.c.b16 %v778, %v775
    %v803 = vpack.c.b16 %v779, %v776
    %v804 = vpack.c.b16 %v780, %v777
    %829 = vmatprep.subr.bf16.mxu0 %v782
    %830 = vmatpush1.bf16.msra.mxu0 %v781
    %831 = vmatprep.subr.bf16.mxu0 %v785
    %832 = vmatpush1.bf16.msra.mxu0 %v784
    %833 = vmatprep.subr.bf16.mxu0 %v788
    %834 = vmatpush1.bf16.msra.mxu0 %v787
    %835 = vmatprep.subr.bf16.mxu0 %v791
    %836 = vmatpush1.bf16.msra.mxu0 %v790
    %837 = vmatprep.subr.bf16.mxu0 %v794
    %838 = vmatpush1.bf16.msra.mxu0 %v793
    %839 = vmatprep.subr.bf16.mxu0 %v797
    %840 = vmatpush1.bf16.msra.mxu0 %v796
    %841 = vmatprep.subr.bf16.mxu0 %v800
    %842 = vmatpush1.bf16.msra.mxu0 %v799
    %843 = vmatprep.subr.bf16.mxu0 %v803
    %844 = vmatpush1.bf16.msra.mxu0 %v802
    %845 = vmatprep.subr.bf16.mxu0 0
    %846 = vmatpush1.bf16.msra.mxu0 0
    %847 = vmatprep.subr.bf16.mxu0 0
    %848 = vmatpush1.bf16.msra.mxu0 0
    %849 = vmatprep.subr.bf16.mxu0 0
    %850 = vmatpush1.bf16.msra.mxu0 0
    %851 = vmatprep.subr.bf16.mxu0 0
    %852 = vmatpush1.bf16.msra.mxu0 0
    %853 = vmatprep.subr.bf16.mxu0 0
    %854 = vmatpush1.bf16.msra.mxu0 0
    %855 = vmatprep.subr.bf16.mxu0 0
    %856 = vmatpush1.bf16.msra.mxu0 0
    %857 = vmatprep.subr.bf16.mxu0 0
    %858 = vmatpush1.bf16.msra.mxu0 0
    %859 = vmatprep.subr.bf16.mxu0 0
    %860 = vmatpush1.bf16.msra.mxu0 0
    %861 = vmatprep.mubr.bf16.mxu0 0
    %862 = vmatmul.mubr.bf16.gmra.mrb[0].mxu0 %v683
    %v863 = vpop.f32.mrb[0].mxu0
    %v864 = vadd.f32 %v689, %v863
    %v865 = vpop.f32.mrb[0].mxu0
    %v866 = vadd.f32 %v693, %v865
    %v867 = vpop.f32.mrb[0].mxu0
    %v868 = vadd.f32 %v689, %v867
    %v869 = vpop.f32.mrb[0].mxu0
    %v870 = vadd.f32 %v693, %v869
    %871 = vdwg.mxu0
    %872 = vmatprep.subr.bf16.mxu0 0
    %873 = vmatpush1.bf16.msra.mxu0 %v783
    %874 = vmatprep.subr.bf16.mxu0 0
    %875 = vmatpush1.bf16.msra.mxu0 %v786
    %876 = vmatprep.subr.bf16.mxu0 0
    %877 = vmatpush1.bf16.msra.mxu0 %v789
    %878 = vmatprep.subr.bf16.mxu0 0
    %879 = vmatpush1.bf16.msra.mxu0 %v792
    %880 = vmatprep.subr.bf16.mxu0 0
    %881 = vmatpush1.bf16.msra.mxu0 %v795
    %882 = vmatprep.subr.bf16.mxu0 0
    %883 = vmatpush1.bf16.msra.mxu0 %v798
    %884 = vmatprep.subr.bf16.mxu0 0
    %885 = vmatpush1.bf16.msra.mxu0 %v801
    %886 = vmatprep.subr.bf16.mxu0 0
    %887 = vmatpush1.bf16.msra.mxu0 %v804
    %888 = vmatprep.subr.bf16.mxu0 0
    %889 = vmatpush1.bf16.msra.mxu0 0
    %890 = vmatprep.subr.bf16.mxu0 0
    %891 = vmatpush1.bf16.msra.mxu0 0
    %892 = vmatprep.subr.bf16.mxu0 0
    %893 = vmatpush1.bf16.msra.mxu0 0
    %894 = vmatprep.subr.bf16.mxu0 0
    %895 = vmatpush1.bf16.msra.mxu0 0
    %896 = vmatprep.subr.bf16.mxu0 0
    %897 = vmatpush1.bf16.msra.mxu0 0
    %898 = vmatprep.subr.bf16.mxu0 0
    %899 = vmatpush1.bf16.msra.mxu0 0
    %900 = vmatprep.subr.bf16.mxu0 0
    %901 = vmatpush1.bf16.msra.mxu0 0
    %902 = vmatprep.subr.bf16.mxu0 0
    %903 = vmatpush1.bf16.msra.mxu0 0
    %904 = vmatprep.mubr.bf16.mxu0 0
    %905 = vmatmul.mubr.bf16.gmra.mrb[0].mxu0 %v683
    %v906 = vpop.f32.mrb[0].mxu0
    %v907 = vadd.f32 %v697, %v906
    %v908 = vpop.f32.mrb[0].mxu0
    %v909 = vpop.f32.mrb[0].mxu0
    %v910 = vadd.f32 %v697, %v909
    %v911 = vpop.f32.mrb[0].mxu0
    %912 = vdwg.mxu0
    %v913 = vpack.c.bf16 %v868, %v864
    %v914 = vpack.c.bf16 %v870, %v866
    %v915 = vpack.c.bf16 %v910, %v907
    %v916 = vld [vmem:[#allocation12] sm:$0xf]
    %v917 = vld [vmem:[#allocation12 + $0x4] sm:$0xf]
    %v918 = vld [vmem:[#allocation12 + $0x8] sm:$0xf]
    %v919 = vld [vmem:[#allocation12 + $0xc] sm:$0xf]
    %v920 = vld [vmem:[#allocation12 + $0x10] sm:$0xf]
    %v921 = vld [vmem:[#allocation12 + $0x14] sm:$0xf]
    %v922 = vld [vmem:[#allocation12 + $0x18] sm:$0xf]
    %v923 = vld [vmem:[#allocation12 + $0x1c] sm:$0xf]
    %v924 = vld [vmem:[#allocation12 + $0x20] sm:$0xf]
    %v925 = vld [vmem:[#allocation12 + $0x24] sm:$0xf]
    %v926 = vld [vmem:[#allocation12 + $0x28] sm:$0xf]
    %v927 = vld [vmem:[#allocation12 + $0x2c] sm:$0xf]
    %v928 = vld [vmem:[#allocation12 + $0x30] sm:$0xf]
    %v929 = vld [vmem:[#allocation12 + $0x34] sm:$0xf]
    %v930 = vld [vmem:[#allocation12 + $0x38] sm:$0xf]
    %v931 = vld [vmem:[#allocation12 + $0x3c] sm:$0xf]
    %vm932 = vcmask 523264
    %v934 = vsel %vm932, %v913, 0
    %v937 = vsel %vm932, %v914, 0
    %939 = vmatprep.subr.bf16.mxu0 0
    %940 = vmatpush1.bf16.xpose.msra.mxu0 %v937
    %941 = vmatprep.subr.bf16.mxu0 0
    %942 = vmatpush1.bf16.xpose.msra.mxu0 0
    %943 = vmatprep.subr.bf16.mxu0 0
    %944 = vmatpush1.bf16.xpose.msra.mxu0 0
    %945 = vmatprep.subr.bf16.mxu0 0
    %946 = vmatpush1.bf16.xpose.msra.mxu0 0
    %947 = vmatprep.subr.bf16.mxu0 0
    %948 = vmatpush1.bf16.xpose.msra.mxu0 0
    %949 = vmatprep.subr.bf16.mxu0 0
    %950 = vmatpush1.bf16.xpose.msra.mxu0 0
    %951 = vmatprep.subr.bf16.mxu0 0
    %952 = vmatpush1.bf16.xpose.msra.mxu0 0
    %953 = vmatprep.subr.bf16.mxu0 0
    %954 = vmatpush1.bf16.xpose.msra.mxu0 0
    %955 = vmatprep.subr.bf16.mxu0 0
    %956 = vmatpush1.bf16.xpose.msra.mxu0 0
    %957 = vmatprep.subr.bf16.mxu0 0
    %958 = vmatpush1.bf16.xpose.msra.mxu0 0
    %959 = vmatprep.subr.bf16.mxu0 0
    %960 = vmatpush1.bf16.xpose.msra.mxu0 0
    %961 = vmatprep.subr.bf16.mxu0 0
    %962 = vmatpush1.bf16.xpose.msra.mxu0 0
    %963 = vmatprep.subr.bf16.mxu0 0
    %964 = vmatpush1.bf16.xpose.msra.mxu0 0
    %965 = vmatprep.subr.bf16.mxu0 0
    %966 = vmatpush1.bf16.xpose.msra.mxu0 0
    %967 = vmatprep.subr.bf16.mxu0 0
    %968 = vmatpush1.bf16.xpose.msra.mxu0 0
    %969 = vmatprep.subr.bf16.mxu0 0
    %970 = vmatpush1.bf16.xpose.msra.mxu0 0
    %971 = vmatprep.mubr.bf16.mxu0 0
    %972 = vmatmul.mubr.bf16.gmra.mrb[0].mxu0 %v934
    %v973 = vpop.f32.mrb[0].mxu0
    %v974 = vadd.f32 %v649, %v973
    %v975 = vpop.f32.mrb[0].mxu0
    %v976 = vpop.f32.mrb[0].mxu0
    %v977 = vadd.f32 %v650, %v976
    %v978 = vpop.f32.mrb[0].mxu0
    %979 = vdwg.mxu0
    %vm980 = vcmask 130048
    %v981 = vsel %vm980, %v974, -inf
    %982 = vmax.xlane.f32.xlu0 %v981
    %v983 = vpop.xlane.xlu0 %982
    %v984 = vsel %vm980, %v977, -inf
    %985 = vmax.xlane.f32.xlu0 %v984
    %v986 = vpop.xlane.xlu0 %985
    %v987 = vsub.f32 %v974, %v983
    %v988 = vsub.f32 %v977, %v986
    %v989 = vmul.f32 %v987, 1.442695
    %v990 = vpow.pop %v989
    %v991 = vmul.f32 %v988, 1.442695
    %v992 = vpow.pop %v991
    %v993 = vsel %vm980, %v990, 0.0
    %994 = vadd.xlane.f32.xlu0 %v993
    %v995 = vpop.xlane.xlu0 %994
    %v996 = vsel %vm980, %v992, 0.0
    %997 = vadd.xlane.f32.xlu0 %v996
    %v998 = vpop.xlane.xlu0 %997
    %v999 = vrcp.pop %v995
    %v1000 = vrcp.pop %v998
    %v1001 = vmul.f32 %v990, %v999
    %v1002 = vmul.f32 %v992, %v1000
    %v1003 = vpack.c.bf16 %v1002, %v1001
    %v1005 = vsel %vm980, %v1003, 0
    %1007 = vmatprep.subr.bf16.mxu0 0
    %1008 = vmatpush1.bf16.msra.mxu0 %v915
    %1009 = vmatprep.subr.bf16.mxu0 0
    %1010 = vmatpush1.bf16.msra.mxu0 0
    %1011 = vmatprep.subr.bf16.mxu0 0
    %1012 = vmatpush1.bf16.msra.mxu0 0
    %1013 = vmatprep.subr.bf16.mxu0 0
    %1014 = vmatpush1.bf16.msra.mxu0 0
    %1015 = vmatprep.subr.bf16.mxu0 0
    %1016 = vmatpush1.bf16.msra.mxu0 0
    %1017 = vmatprep.subr.bf16.mxu0 0
    %1018 = vmatpush1.bf16.msra.mxu0 0
    %1019 = vmatprep.subr.bf16.mxu0 0
    %1020 = vmatpush1.bf16.msra.mxu0 0
    %1021 = vmatprep.subr.bf16.mxu0 0
    %1022 = vmatpush1.bf16.msra.mxu0 0
    %1023 = vmatprep.subr.bf16.mxu0 0
    %1024 = vmatpush1.bf16.msra.mxu0 0
    %1025 = vmatprep.subr.bf16.mxu0 0
    %1026 = vmatpush1.bf16.msra.mxu0 0
    %1027 = vmatprep.subr.bf16.mxu0 0
    %1028 = vmatpush1.bf16.msra.mxu0 0
    %1029 = vmatprep.subr.bf16.mxu0 0
    %1030 = vmatpush1.bf16.msra.mxu0 0
    %1031 = vmatprep.subr.bf16.mxu0 0
    %1032 = vmatpush1.bf16.msra.mxu0 0
    %1033 = vmatprep.subr.bf16.mxu0 0
    %1034 = vmatpush1.bf16.msra.mxu0 0
    %1035 = vmatprep.subr.bf16.mxu0 0
    %1036 = vmatpush1.bf16.msra.mxu0 0
    %1037 = vmatprep.subr.bf16.mxu0 0
    %1038 = vmatpush1.bf16.msra.mxu0 0
    %1039 = vmatprep.mubr.bf16.mxu0 0
    %1040 = vmatmul.mubr.bf16.gmra.mrb[0].mxu0 %v1005
    %v1041 = vpop.f32.mrb[0].mxu0
    %v1042 = vadd.f32 0.0, %v1041
    %v1043 = vpop.f32.mrb[0].mxu0
    %v1044 = vpop.f32.mrb[0].mxu0
    %v1045 = vadd.f32 0.0, %v1044
    %v1046 = vpop.f32.mrb[0].mxu0
    %1047 = vdwg.mxu0
    %v1048 = vpack.c.bf16 %v1045, %v1042
    %1050 = vrot.lane.b32.xlu0 %v913, 64
    %v1051 = vpop.permute.xlu0 %1050
    %1053 = vrot.lane.b32.xlu0 %v914, 64
    %v1054 = vpop.permute.xlu0 %1053
    %v1056 = vsel %vm932, %v1051, 0
    %v1059 = vsel %vm932, %v1054, 0
    %1061 = vmatprep.subr.bf16.mxu0 0
    %1062 = vmatpush1.bf16.xpose.msra.mxu0 %v1059
    %1063 = vmatprep.subr.bf16.mxu0 0
    %1064 = vmatpush1.bf16.xpose.msra.mxu0 0
    %1065 = vmatprep.subr.bf16.mxu0 0
    %1066 = vmatpush1.bf16.xpose.msra.mxu0 0
    %1067 = vmatprep.subr.bf16.mxu0 0
    %1068 = vmatpush1.bf16.xpose.msra.mxu0 0
    %1069 = vmatprep.subr.bf16.mxu0 0
    %1070 = vmatpush1.bf16.xpose.msra.mxu0 0
    %1071 = vmatprep.subr.bf16.mxu0 0
    %1072 = vmatpush1.bf16.xpose.msra.mxu0 0
    %1073 = vmatprep.subr.bf16.mxu0 0
    %1074 = vmatpush1.bf16.xpose.msra.mxu0 0
    %1075 = vmatprep.subr.bf16.mxu0 0
    %1076 = vmatpush1.bf16.xpose.msra.mxu0 0
    %1077 = vmatprep.subr.bf16.mxu0 0
    %1078 = vmatpush1.bf16.xpose.msra.mxu0 0
    %1079 = vmatprep.subr.bf16.mxu0 0
    %1080 = vmatpush1.bf16.xpose.msra.mxu0 0
    %1081 = vmatprep.subr.bf16.mxu0 0
    %1082 = vmatpush1.bf16.xpose.msra.mxu0 0
    %1083 = vmatprep.subr.bf16.mxu0 0
    %1084 = vmatpush1.bf16.xpose.msra.mxu0 0
    %1085 = vmatprep.subr.bf16.mxu0 0
    %1086 = vmatpush1.bf16.xpose.msra.mxu0 0
    %1087 = vmatprep.subr.bf16.mxu0 0
    %1088 = vmatpush1.bf16.xpose.msra.mxu0 0
    %1089 = vmatprep.subr.bf16.mxu0 0
    %1090 = vmatpush1.bf16.xpose.msra.mxu0 0
    %1091 = vmatprep.subr.bf16.mxu0 0
    %1092 = vmatpush1.bf16.xpose.msra.mxu0 0
    %1093 = vmatprep.mubr.bf16.mxu0 0
    %1094 = vmatmul.mubr.bf16.gmra.mrb[0].mxu0 %v1056
    %v1095 = vpop.f32.mrb[0].mxu0
    %v1096 = vadd.f32 %v649, %v1095
    %v1097 = vpop.f32.mrb[0].mxu0
    %v1098 = vpop.f32.mrb[0].mxu0
    %v1099 = vadd.f32 %v650, %v1098
    %v1100 = vpop.f32.mrb[0].mxu0
    %1101 = vdwg.mxu0
    %v1102 = vsel %vm980, %v1096, -inf
    %1103 = vmax.xlane.f32.xlu0 %v1102
    %v1104 = vpop.xlane.xlu0 %1103
    %v1105 = vsel %vm980, %v1099, -inf
    %1106 = vmax.xlane.f32.xlu0 %v1105
    %v1107 = vpop.xlane.xlu0 %1106
    %v1108 = vsub.f32 %v1096, %v1104
    %v1109 = vsub.f32 %v1099, %v1107
    %v1110 = vmul.f32 %v1108, 1.442695
    %v1111 = vpow.pop %v1110
    %v1112 = vmul.f32 %v1109, 1.442695
    %v1113 = vpow.pop %v1112
    %v1114 = vsel %vm980, %v1111, 0.0
    %1115 = vadd.xlane.f32.xlu0 %v1114
    %v1116 = vpop.xlane.xlu0 %1115
    %v1117 = vsel %vm980, %v1113, 0.0
    %1118 = vadd.xlane.f32.xlu0 %v1117
    %v1119 = vpop.xlane.xlu0 %1118
    %v1120 = vrcp.pop %v1116
    %v1121 = vrcp.pop %v1119
    %v1122 = vmul.f32 %v1111, %v1120
    %v1123 = vmul.f32 %v1113, %v1121
    %v1124 = vpack.c.bf16 %v1123, %v1122
    %1126 = vrot.lane.b32.xlu0 %v915, 64
    %v1127 = vpop.permute.xlu0 %1126
    %v1130 = vsel %vm980, %v1124, 0
    %1132 = vmatprep.subr.bf16.mxu0 0
    %1133 = vmatpush1.bf16.msra.mxu0 %v1127
    %1134 = vmatprep.subr.bf16.mxu0 0
    %1135 = vmatpush1.bf16.msra.mxu0 0
    %1136 = vmatprep.subr.bf16.mxu0 0
    %1137 = vmatpush1.bf16.msra.mxu0 0
    %1138 = vmatprep.subr.bf16.mxu0 0
    %1139 = vmatpush1.bf16.msra.mxu0 0
    %1140 = vmatprep.subr.bf16.mxu0 0
    %1141 = vmatpush1.bf16.msra.mxu0 0
    %1142 = vmatprep.subr.bf16.mxu0 0
    %1143 = vmatpush1.bf16.msra.mxu0 0
    %1144 = vmatprep.subr.bf16.mxu0 0
    %1145 = vmatpush1.bf16.msra.mxu0 0
    %1146 = vmatprep.subr.bf16.mxu0 0
    %1147 = vmatpush1.bf16.msra.mxu0 0
    %1148 = vmatprep.subr.bf16.mxu0 0
    %1149 = vmatpush1.bf16.msra.mxu0 0
    %1150 = vmatprep.subr.bf16.mxu0 0
    %1151 = vmatpush1.bf16.msra.mxu0 0
    %1152 = vmatprep.subr.bf16.mxu0 0
    %1153 = vmatpush1.bf16.msra.mxu0 0
    %1154 = vmatprep.subr.bf16.mxu0 0
    %1155 = vmatpush1.bf16.msra.mxu0 0
    %1156 = vmatprep.subr.bf16.mxu0 0
    %1157 = vmatpush1.bf16.msra.mxu0 0
    %1158 = vmatprep.subr.bf16.mxu0 0
    %1159 = vmatpush1.bf16.msra.mxu0 0
    %1160 = vmatprep.subr.bf16.mxu0 0
    %1161 = vmatpush1.bf16.msra.mxu0 0
    %1162 = vmatprep.subr.bf16.mxu0 0
    %1163 = vmatpush1.bf16.msra.mxu0 0
    %1164 = vmatprep.mubr.bf16.mxu0 0
    %1165 = vmatmul.mubr.bf16.gmra.mrb[0].mxu0 %v1130
    %v1166 = vpop.f32.mrb[0].mxu0
    %v1167 = vadd.f32 0.0, %v1166
    %v1168 = vpop.f32.mrb[0].mxu0
    %v1169 = vpop.f32.mrb[0].mxu0
    %v1170 = vadd.f32 0.0, %v1169
    %v1171 = vpop.f32.mrb[0].mxu0
    %1172 = vdwg.mxu0
    %v1173 = vpack.c.bf16 %v1170, %v1167
    %v1182 = vunpack.c.l.b16 %v924
    %v1183 = vunpack.c.l.b16 %v925
    %v1184 = vunpack.c.l.b16 %v926
    %v1185 = vunpack.c.l.b16 %v927
    %v1186 = vunpack.c.l.b16 %v928
    %v1187 = vunpack.c.l.b16 %v929
    %v1188 = vunpack.c.l.b16 %v930
    %v1189 = vunpack.c.l.b16 %v931
    %v1190 = vpack.c.b16 %v1183, %v1182
    %v1191 = vpack.c.b16 %v1185, %v1184
    %v1192 = vpack.c.b16 %v1187, %v1186
    %v1193 = vpack.c.b16 %v1189, %v1188
    %v1199 = vsel %vm932, %v1173, 0
    %1201 = vmatprep.subr.bf16.mxu0 0
    %1202 = vmatpush1.bf16.msra.mxu0 %v1190
    %1203 = vmatprep.subr.bf16.mxu0 0
    %1204 = vmatpush1.bf16.msra.mxu0 %v1191
    %1205 = vmatprep.subr.bf16.mxu0 0
    %1206 = vmatpush1.bf16.msra.mxu0 %v1192
    %1207 = vmatprep.subr.bf16.mxu0 0
    %1208 = vmatpush1.bf16.msra.mxu0 %v1193
    %1209 = vmatprep.subr.bf16.mxu0 0
    %1210 = vmatpush1.bf16.msra.mxu0 0
    %1211 = vmatprep.subr.bf16.mxu0 0
    %1212 = vmatpush1.bf16.msra.mxu0 0
    %1213 = vmatprep.subr.bf16.mxu0 0
    %1214 = vmatpush1.bf16.msra.mxu0 0
    %1215 = vmatprep.subr.bf16.mxu0 0
    %1216 = vmatpush1.bf16.msra.mxu0 0
    %1217 = vmatprep.subr.bf16.mxu0 0
    %1218 = vmatpush1.bf16.msra.mxu0 0
    %1219 = vmatprep.subr.bf16.mxu0 0
    %1220 = vmatpush1.bf16.msra.mxu0 0
    %1221 = vmatprep.subr.bf16.mxu0 0
    %1222 = vmatpush1.bf16.msra.mxu0 0
    %1223 = vmatprep.subr.bf16.mxu0 0
    %1224 = vmatpush1.bf16.msra.mxu0 0
    %1225 = vmatprep.subr.bf16.mxu0 0
    %1226 = vmatpush1.bf16.msra.mxu0 0
    %1227 = vmatprep.subr.bf16.mxu0 0
    %1228 = vmatpush1.bf16.msra.mxu0 0
    %1229 = vmatprep.subr.bf16.mxu0 0
    %1230 = vmatpush1.bf16.msra.mxu0 0
    %1231 = vmatprep.subr.bf16.mxu0 0
    %1232 = vmatpush1.bf16.msra.mxu0 0
    %1233 = vmatprep.mubr.bf16.mxu0 0
    %1234 = vmatmul.mubr.bf16.gmra.mrb[0].mxu0 %v1199
    %v1235 = vpop.f32.mrb[0].mxu0
    %v1236 = vadd.f32 0.0, %v1235
    %v1237 = vpop.f32.mrb[0].mxu0
    %v1238 = vpop.f32.mrb[0].mxu0
    %v1239 = vadd.f32 0.0, %v1238
    %v1240 = vpop.f32.mrb[0].mxu0
    %1241 = vdwg.mxu0
    %v1250 = vunpack.c.l.b16 %v916
    %v1251 = vunpack.c.l.b16 %v917
    %v1252 = vunpack.c.l.b16 %v918
    %v1253 = vunpack.c.l.b16 %v919
    %v1254 = vunpack.c.l.b16 %v920
    %v1255 = vunpack.c.l.b16 %v921
    %v1256 = vunpack.c.l.b16 %v922
    %v1257 = vunpack.c.l.b16 %v923
    %v1258 = vpack.c.b16 %v1251, %v1250
    %v1259 = vpack.c.b16 %v1253, %v1252
    %v1260 = vpack.c.b16 %v1255, %v1254
    %v1261 = vpack.c.b16 %v1257, %v1256
    %v1267 = vsel %vm932, %v1048, 0
    %1269 = vmatprep.subr.bf16.mxu0 0
    %1270 = vmatpush1.bf16.msra.mxu0 %v1258
    %1271 = vmatprep.subr.bf16.mxu0 0
    %1272 = vmatpush1.bf16.msra.mxu0 %v1259
    %1273 = vmatprep.subr.bf16.mxu0 0
    %1274 = vmatpush1.bf16.msra.mxu0 %v1260
    %1275 = vmatprep.subr.bf16.mxu0 0
    %1276 = vmatpush1.bf16.msra.mxu0 %v1261
    %1277 = vmatprep.subr.bf16.mxu0 0
    %1278 = vmatpush1.bf16.msra.mxu0 0
    %1279 = vmatprep.subr.bf16.mxu0 0
    %1280 = vmatpush1.bf16.msra.mxu0 0
    %1281 = vmatprep.subr.bf16.mxu0 0
    %1282 = vmatpush1.bf16.msra.mxu0 0
    %1283 = vmatprep.subr.bf16.mxu0 0
    %1284 = vmatpush1.bf16.msra.mxu0 0
    %1285 = vmatprep.subr.bf16.mxu0 0
    %1286 = vmatpush1.bf16.msra.mxu0 0
    %1287 = vmatprep.subr.bf16.mxu0 0
    %1288 = vmatpush1.bf16.msra.mxu0 0
    %1289 = vmatprep.subr.bf16.mxu0 0
    %1290 = vmatpush1.bf16.msra.mxu0 0
    %1291 = vmatprep.subr.bf16.mxu0 0
    %1292 = vmatpush1.bf16.msra.mxu0 0
    %1293 = vmatprep.subr.bf16.mxu0 0
    %1294 = vmatpush1.bf16.msra.mxu0 0
    %1295 = vmatprep.subr.bf16.mxu0 0
    %1296 = vmatpush1.bf16.msra.mxu0 0
    %1297 = vmatprep.subr.bf16.mxu0 0
    %1298 = vmatpush1.bf16.msra.mxu0 0
    %1299 = vmatprep.subr.bf16.mxu0 0
    %1300 = vmatpush1.bf16.msra.mxu0 0
    %1301 = vmatprep.mubr.bf16.mxu0 0
    %1302 = vmatmul.mubr.bf16.gmra.mrb[0].mxu0 %v1267
    %v1303 = vpop.f32.mrb[0].mxu0
    %v1304 = vadd.f32 %v1236, %v1303
    %v1305 = vpop.f32.mrb[0].mxu0
    %v1306 = vpop.f32.mrb[0].mxu0
    %v1307 = vadd.f32 %v1239, %v1306
    %v1308 = vpop.f32.mrb[0].mxu0
    %1309 = vdwg.mxu0
    %v1310 = vld [vmem:[#allocation14] sm:$0x1]
    %v1312 = vlaneseq
    %v1313 = vshrl.u32 %v1312, 7
    %v1314 = vsub.s32 0, %v1313
    %v1315 = vrot.slane %v1310, %v1314
    %v1317 = vadd.f32 %v1304, %v1315
    %v1318 = vadd.f32 %v1307, %v1315
    %v1319 = vadd.f32 %v1317, %v647
    %v1320 = vadd.f32 %v1318, %v648
    %v1321 = vld [vmem:[#allocation15] sm:$0x1]
    %v1322 = vld [vmem:[#allocation17] sm:$0x1]
    %1323 = vadd.xlane.f32.xlu0 %v1319
    %v1324 = vpop.xlane.xlu0 %1323
    %1325 = vadd.xlane.f32.xlu0 %v1320
    %v1326 = vpop.xlane.xlu0 %1325
    %v1327 = vmul.f32 %v1324, %v614
    %v1328 = vmul.f32 %v1326, %v614
    %v1329 = vsub.f32 %v1319, %v1327
    %v1330 = vsub.f32 %v1320, %v1328
    %v1331 = vmul.f32 %v1329, %v1329
    %v1332 = vmul.f32 %v1330, %v1330
    %1333 = vadd.xlane.f32.xlu0 %v1331
    %v1334 = vpop.xlane.xlu0 %1333
    %1335 = vadd.xlane.f32.xlu0 %v1332
    %v1336 = vpop.xlane.xlu0 %1335
    %v1337 = vmul.f32 %v1334, %v614
    %v1338 = vmul.f32 %v1336, %v614
    %v1339 = vadd.f32 %v1337, 1e-05
    %v1340 = vadd.f32 %v1338, 1e-05
    %v1341 = vrsqrt.pop %v1339
    %v1342 = vrsqrt.pop %v1340
    %v1343 = vmul.f32 %v1329, %v1341
    %v1344 = vmul.f32 %v1330, %v1342
    %v1346 = vlaneseq
    %v1347 = vshrl.u32 %v1346, 7
    %v1348 = vsub.s32 0, %v1347
    %v1349 = vrot.slane %v1321, %v1348
    %v1351 = vmul.f32 %v1343, %v1349
    %v1352 = vmul.f32 %v1344, %v1349
    %v1354 = vlaneseq
    %v1355 = vshrl.u32 %v1354, 7
    %v1356 = vsub.s32 0, %v1355
    %v1357 = vrot.slane %v1322, %v1356
    %v1359 = vadd.f32 %v1351, %v1357
    %v1360 = vadd.f32 %v1352, %v1357
    %v1361 = vld [vmem:[#allocation18] sm:$0xff]
    %v1362 = vld [vmem:[#allocation18 + $0x8] sm:$0xff]
    %v1363 = vld [vmem:[#allocation18 + $0x10] sm:$0xff]
    %v1364 = vld [vmem:[#allocation18 + $0x18] sm:$0xff]
    %v1365 = vld [vmem:[#allocation18 + $0x20] sm:$0xff]
    %v1366 = vld [vmem:[#allocation18 + $0x28] sm:$0xff]
    %v1367 = vld [vmem:[#allocation18 + $0x30] sm:$0xff]
    %v1368 = vld [vmem:[#allocation18 + $0x38] sm:$0xff]
    %v1369 = vld [vmem:[#allocation18 + $0x40] sm:$0xff]
    %v1370 = vld [vmem:[#allocation18 + $0x48] sm:$0xff]
    %v1371 = vld [vmem:[#allocation18 + $0x50] sm:$0xff]
    %v1372 = vld [vmem:[#allocation18 + $0x58] sm:$0xff]
    %v1373 = vld [vmem:[#allocation18 + $0x60] sm:$0xff]
    %v1374 = vld [vmem:[#allocation18 + $0x68] sm:$0xff]
    %v1375 = vld [vmem:[#allocation18 + $0x70] sm:$0xff]
    %v1376 = vld [vmem:[#allocation18 + $0x78] sm:$0xff]
    %v1377 = vpack.c.bf16 %v1360, %v1359
    %v1378 = vld [vmem:[#allocation20] sm:$0x3]
    %v1380 = vlaneseq
    %v1381 = vshrl.u32 %v1380, 7
    %v1382 = vsub.s32 0, %v1381
    %v1383 = vrot.slane %v1378, %v1382
    %v1384 = vlaneseq
    %v1385 = vshrl.u32 %v1384, 7
    %v1386 = vsub.s32 1, %v1385
    %v1387 = vrot.slane %v1378, %v1386
    %v1406 = vunpack.c.l.b16 %v1361
    %v1407 = vunpack.c.h.b16 %v1361
    %v1408 = vunpack.c.l.b16 %v1362
    %v1409 = vunpack.c.h.b16 %v1362
    %v1410 = vunpack.c.l.b16 %v1363
    %v1411 = vunpack.c.h.b16 %v1363
    %v1412 = vunpack.c.l.b16 %v1364
    %v1413 = vunpack.c.h.b16 %v1364
    %v1414 = vunpack.c.l.b16 %v1365
    %v1415 = vunpack.c.h.b16 %v1365
    %v1416 = vunpack.c.l.b16 %v1366
    %v1417 = vunpack.c.h.b16 %v1366
    %v1418 = vunpack.c.l.b16 %v1367
    %v1419 = vunpack.c.h.b16 %v1367
    %v1420 = vunpack.c.l.b16 %v1368
    %v1421 = vunpack.c.h.b16 %v1368
    %v1422 = vunpack.c.l.b16 %v1369
    %v1423 = vunpack.c.h.b16 %v1369
    %v1424 = vunpack.c.l.b16 %v1370
    %v1425 = vunpack.c.h.b16 %v1370
    %v1426 = vunpack.c.l.b16 %v1371
    %v1427 = vunpack.c.h.b16 %v1371
    %v1428 = vunpack.c.l.b16 %v1372
    %v1429 = vunpack.c.h.b16 %v1372
    %v1430 = vunpack.c.l.b16 %v1373
    %v1431 = vunpack.c.h.b16 %v1373
    %v1432 = vunpack.c.l.b16 %v1374
    %v1433 = vunpack.c.h.b16 %v1374
    %v1434 = vunpack.c.l.b16 %v1375
    %v1435 = vunpack.c.h.b16 %v1375
    %v1436 = vunpack.c.l.b16 %v1376
    %v1437 = vunpack.c.h.b16 %v1376
    %v1438 = vpack.c.b16 %v1408, %v1406
    %v1439 = vpack.c.b16 %v1409, %v1407
    %v1440 = vpack.c.b16 %v1412, %v1410
    %v1441 = vpack.c.b16 %v1413, %v1411
    %v1442 = vpack.c.b16 %v1416, %v1414
    %v1443 = vpack.c.b16 %v1417, %v1415
    %v1444 = vpack.c.b16 %v1420, %v1418
    %v1445 = vpack.c.b16 %v1421, %v1419
    %v1446 = vpack.c.b16 %v1424, %v1422
    %v1447 = vpack.c.b16 %v1425, %v1423
    %v1448 = vpack.c.b16 %v1428, %v1426
    %v1449 = vpack.c.b16 %v1429, %v1427
    %v1450 = vpack.c.b16 %v1432, %v1430
    %v1451 = vpack.c.b16 %v1433, %v1431
    %v1452 = vpack.c.b16 %v1436, %v1434
    %v1453 = vpack.c.b16 %v1437, %v1435
    %1470 = vmatprep.subr.bf16.mxu0 %v1439
    %1471 = vmatpush1.bf16.msra.mxu0 %v1438
    %1472 = vmatprep.subr.bf16.mxu0 %v1441
    %1473 = vmatpush1.bf16.msra.mxu0 %v1440
    %1474 = vmatprep.subr.bf16.mxu0 %v1443
    %1475 = vmatpush1.bf16.msra.mxu0 %v1442
    %1476 = vmatprep.subr.bf16.mxu0 %v1445
    %1477 = vmatpush1.bf16.msra.mxu0 %v1444
    %1478 = vmatprep.subr.bf16.mxu0 %v1447
    %1479 = vmatpush1.bf16.msra.mxu0 %v1446
    %1480 = vmatprep.subr.bf16.mxu0 %v1449
    %1481 = vmatpush1.bf16.msra.mxu0 %v1448
    %1482 = vmatprep.subr.bf16.mxu0 %v1451
    %1483 = vmatpush1.bf16.msra.mxu0 %v1450
    %1484 = vmatprep.subr.bf16.mxu0 %v1453
    %1485 = vmatpush1.bf16.msra.mxu0 %v1452
    %1486 = vmatprep.subr.bf16.mxu0 0
    %1487 = vmatpush1.bf16.msra.mxu0 0
    %1488 = vmatprep.subr.bf16.mxu0 0
    %1489 = vmatpush1.bf16.msra.mxu0 0
    %1490 = vmatprep.subr.bf16.mxu0 0
    %1491 = vmatpush1.bf16.msra.mxu0 0
    %1492 = vmatprep.subr.bf16.mxu0 0
    %1493 = vmatpush1.bf16.msra.mxu0 0
    %1494 = vmatprep.subr.bf16.mxu0 0
    %1495 = vmatpush1.bf16.msra.mxu0 0
    %1496 = vmatprep.subr.bf16.mxu0 0
    %1497 = vmatpush1.bf16.msra.mxu0 0
    %1498 = vmatprep.subr.bf16.mxu0 0
    %1499 = vmatpush1.bf16.msra.mxu0 0
    %1500 = vmatprep.subr.bf16.mxu0 0
    %1501 = vmatpush1.bf16.msra.mxu0 0
    %1502 = vmatprep.mubr.bf16.mxu0 0
    %1503 = vmatmul.mubr.bf16.gmra.mrb[0].mxu0 %v1377
    %v1504 = vpop.f32.mrb[0].mxu0
    %v1505 = vadd.f32 %v1383, %v1504
    %v1506 = vpop.f32.mrb[0].mxu0
    %v1507 = vadd.f32 %v1387, %v1506
    %v1508 = vpop.f32.mrb[0].mxu0
    %v1509 = vadd.f32 %v1383, %v1508
    %v1510 = vpop.f32.mrb[0].mxu0
    %v1511 = vadd.f32 %v1387, %v1510
    %1512 = vdwg.mxu0
    %v1513 = vmul.f32 %v1505, 0.5
    %v1514 = vmul.f32 %v1507, 0.5
    %v1515 = vmul.f32 %v1509, 0.5
    %v1516 = vmul.f32 %v1511, 0.5
    %v1517 = vmul.f32 %v1505, 0.044715
    %v1518 = vmul.f32 %v1507, 0.044715
    %v1519 = vmul.f32 %v1509, 0.044715
    %v1520 = vmul.f32 %v1511, 0.044715
    %v1521 = vmul.f32 %v1517, %v1505
    %v1522 = vmul.f32 %v1518, %v1507
    %v1523 = vmul.f32 %v1519, %v1509
    %v1524 = vmul.f32 %v1520, %v1511
    %v1525 = vmul.f32 %v1521, %v1505
    %v1526 = vmul.f32 %v1522, %v1507
    %v1527 = vmul.f32 %v1523, %v1509
    %v1528 = vmul.f32 %v1524, %v1511
    %v1529 = vadd.f32 %v1505, %v1525
    %v1530 = vadd.f32 %v1507, %v1526
    %v1531 = vadd.f32 %v1509, %v1527
    %v1532 = vadd.f32 %v1511, %v1528
    %v1533 = vmul.f32 %v1529, 0.7978846
    %v1534 = vmul.f32 %v1530, 0.7978846
    %v1535 = vmul.f32 %v1531, 0.7978846
    %v1536 = vmul.f32 %v1532, 0.7978846
    %v1537 = vtanh.pop %v1533
    %v1538 = vtanh.pop %v1534
    %v1539 = vtanh.pop %v1535
    %v1540 = vtanh.pop %v1536
    %v1541 = vadd.f32 %v1537, 1.0
    %v1542 = vadd.f32 %v1538, 1.0
    %v1543 = vadd.f32 %v1539, 1.0
    %v1544 = vadd.f32 %v1540, 1.0
    %v1545 = vmul.f32 %v1513, %v1541
    %v1546 = vmul.f32 %v1514, %v1542
    %v1547 = vmul.f32 %v1515, %v1543
    %v1548 = vmul.f32 %v1516, %v1544
    %v1549 = vld [vmem:[#allocation21] sm:$0xf]
    %v1550 = vld [vmem:[#allocation21 + $0x4] sm:$0xf]
    %v1551 = vld [vmem:[#allocation21 + $0x8] sm:$0xf]
    %v1552 = vld [vmem:[#allocation21 + $0xc] sm:$0xf]
    %v1553 = vld [vmem:[#allocation21 + $0x10] sm:$0xf]
    %v1554 = vld [vmem:[#allocation21 + $0x14] sm:$0xf]
    %v1555 = vld [vmem:[#allocation21 + $0x18] sm:$0xf]
    %v1556 = vld [vmem:[#allocation21 + $0x1c] sm:$0xf]
    %v1557 = vld [vmem:[#allocation21 + $0x20] sm:$0xf]
    %v1558 = vld [vmem:[#allocation21 + $0x24] sm:$0xf]
    %v1559 = vld [vmem:[#allocation21 + $0x28] sm:$0xf]
    %v1560 = vld [vmem:[#allocation21 + $0x2c] sm:$0xf]
    %v1561 = vld [vmem:[#allocation21 + $0x30] sm:$0xf]
    %v1562 = vld [vmem:[#allocation21 + $0x34] sm:$0xf]
    %v1563 = vld [vmem:[#allocation21 + $0x38] sm:$0xf]
    %v1564 = vld [vmem:[#allocation21 + $0x3c] sm:$0xf]
    %v1565 = vld [vmem:[#allocation21 + $0x40] sm:$0xf]
    %v1566 = vld [vmem:[#allocation21 + $0x44] sm:$0xf]
    %v1567 = vld [vmem:[#allocation21 + $0x48] sm:$0xf]
    %v1568 = vld [vmem:[#allocation21 + $0x4c] sm:$0xf]
    %v1569 = vld [vmem:[#allocation21 + $0x50] sm:$0xf]
    %v1570 = vld [vmem:[#allocation21 + $0x54] sm:$0xf]
    %v1571 = vld [vmem:[#allocation21 + $0x58] sm:$0xf]
    %v1572 = vld [vmem:[#allocation21 + $0x5c] sm:$0xf]
    %v1573 = vld [vmem:[#allocation21 + $0x60] sm:$0xf]
    %v1574 = vld [vmem:[#allocation21 + $0x64] sm:$0xf]
    %v1575 = vld [vmem:[#allocation21 + $0x68] sm:$0xf]
    %v1576 = vld [vmem:[#allocation21 + $0x6c] sm:$0xf]
    %v1577 = vld [vmem:[#allocation21 + $0x70] sm:$0xf]
    %v1578 = vld [vmem:[#allocation21 + $0x74] sm:$0xf]
    %v1579 = vld [vmem:[#allocation21 + $0x78] sm:$0xf]
    %v1580 = vld [vmem:[#allocation21 + $0x7c] sm:$0xf]
    %v1581 = vpack.c.bf16 %v1547, %v1545
    %v1582 = vpack.c.bf16 %v1548, %v1546
    %v1583 = vld [vmem:[#allocation23] sm:$0x1]
    %v1585 = vlaneseq
    %v1586 = vshrl.u32 %v1585, 7
    %v1587 = vsub.s32 0, %v1586
    %v1588 = vrot.slane %v1583, %v1587
    %v1622 = vunpack.c.l.b16 %v1549
    %v1623 = vunpack.c.l.b16 %v1550
    %v1624 = vunpack.c.l.b16 %v1551
    %v1625 = vunpack.c.l.b16 %v1552
    %v1626 = vunpack.c.l.b16 %v1553
    %v1627 = vunpack.c.l.b16 %v1554
    %v1628 = vunpack.c.l.b16 %v1555
    %v1629 = vunpack.c.l.b16 %v1556
    %v1630 = vunpack.c.l.b16 %v1557
    %v1631 = vunpack.c.l.b16 %v1558
    %v1632 = vunpack.c.l.b16 %v1559
    %v1633 = vunpack.c.l.b16 %v1560
    %v1634 = vunpack.c.l.b16 %v1561
    %v1635 = vunpack.c.l.b16 %v1562
    %v1636 = vunpack.c.l.b16 %v1563
    %v1637 = vunpack.c.l.b16 %v1564
    %v1638 = vunpack.c.l.b16 %v1565
    %v1639 = vunpack.c.l.b16 %v1566
    %v1640 = vunpack.c.l.b16 %v1567
    %v1641 = vunpack.c.l.b16 %v1568
    %v1642 = vunpack.c.l.b16 %v1569
    %v1643 = vunpack.c.l.b16 %v1570
    %v1644 = vunpack.c.l.b16 %v1571
    %v1645 = vunpack.c.l.b16 %v1572
    %v1646 = vunpack.c.l.b16 %v1573
    %v1647 = vunpack.c.l.b16 %v1574
    %v1648 = vunpack.c.l.b16 %v1575
    %v1649 = vunpack.c.l.b16 %v1576
    %v1650 = vunpack.c.l.b16 %v1577
    %v1651 = vunpack.c.l.b16 %v1578
    %v1652 = vunpack.c.l.b16 %v1579
    %v1653 = vunpack.c.l.b16 %v1580
    %v1654 = vpack.c.b16 %v1623, %v1622
    %v1655 = vpack.c.b16 %v1625, %v1624
    %v1656 = vpack.c.b16 %v1627, %v1626
    %v1657 = vpack.c.b16 %v1629, %v1628
    %v1658 = vpack.c.b16 %v1631, %v1630
    %v1659 = vpack.c.b16 %v1633, %v1632
    %v1660 = vpack.c.b16 %v1635, %v1634
    %v1661 = vpack.c.b16 %v1637, %v1636
    %v1662 = vpack.c.b16 %v1639, %v1638
    %v1663 = vpack.c.b16 %v1641, %v1640
    %v1664 = vpack.c.b16 %v1643, %v1642
    %v1665 = vpack.c.b16 %v1645, %v1644
    %v1666 = vpack.c.b16 %v1647, %v1646
    %v1667 = vpack.c.b16 %v1649, %v1648
    %v1668 = vpack.c.b16 %v1651, %v1650
    %v1669 = vpack.c.b16 %v1653, %v1652
    %1686 = vmatprep.subr.bf16.mxu0 0
    %1687 = vmatpush1.bf16.msra.mxu0 %v1654
    %1688 = vmatprep.subr.bf16.mxu0 0
    %1689 = vmatpush1.bf16.msra.mxu0 %v1655
    %1690 = vmatprep.subr.bf16.mxu0 0
    %1691 = vmatpush1.bf16.msra.mxu0 %v1656
    %1692 = vmatprep.subr.bf16.mxu0 0
    %1693 = vmatpush1.bf16.msra.mxu0 %v1657
    %1694 = vmatprep.subr.bf16.mxu0 0
    %1695 = vmatpush1.bf16.msra.mxu0 %v1658
    %1696 = vmatprep.subr.bf16.mxu0 0
    %1697 = vmatpush1.bf16.msra.mxu0 %v1659
    %1698 = vmatprep.subr.bf16.mxu0 0
    %1699 = vmatpush1.bf16.msra.mxu0 %v1660
    %1700 = vmatprep.subr.bf16.mxu0 0
    %1701 = vmatpush1.bf16.msra.mxu0 %v1661
    %1702 = vmatprep.subr.bf16.mxu0 0
    %1703 = vmatpush1.bf16.msra.mxu0 %v1662
    %1704 = vmatprep.subr.bf16.mxu0 0
    %1705 = vmatpush1.bf16.msra.mxu0 %v1663
    %1706 = vmatprep.subr.bf16.mxu0 0
    %1707 = vmatpush1.bf16.msra.mxu0 %v1664
    %1708 = vmatprep.subr.bf16.mxu0 0
    %1709 = vmatpush1.bf16.msra.mxu0 %v1665
    %1710 = vmatprep.subr.bf16.mxu0 0
    %1711 = vmatpush1.bf16.msra.mxu0 %v1666
    %1712 = vmatprep.subr.bf16.mxu0 0
    %1713 = vmatpush1.bf16.msra.mxu0 %v1667
    %1714 = vmatprep.subr.bf16.mxu0 0
    %1715 = vmatpush1.bf16.msra.mxu0 %v1668
    %1716 = vmatprep.subr.bf16.mxu0 0
    %1717 = vmatpush1.bf16.msra.mxu0 %v1669
    %1718 = vmatprep.mubr.bf16.mxu0 %v1582
    %1719 = vmatmul.mubr.bf16.gmra.mrb[0].mxu0 %v1581
    %v1720 = vpop.f32.mrb[0].mxu0
    %v1721 = vadd.f32 %v1588, %v1720
    %v1722 = vpop.f32.mrb[0].mxu0
    %v1723 = vpop.f32.mrb[0].mxu0
    %v1724 = vadd.f32 %v1588, %v1723
    %v1725 = vpop.f32.mrb[0].mxu0
    %1726 = vdwg.mxu0
    %v1727 = vadd.f32 %v1721, %v1359
    %v1728 = vadd.f32 %v1724, %v1360
    %v1729 = vld [vmem:[#allocation24] sm:$0x1]
    %v1730 = vld [vmem:[#allocation26] sm:$0x1]
    %1731 = vadd.xlane.f32.xlu0 %v1727
    %v1732 = vpop.xlane.xlu0 %1731
    %1733 = vadd.xlane.f32.xlu0 %v1728
    %v1734 = vpop.xlane.xlu0 %1733
    %v1735 = vmul.f32 %v1732, %v614
    %v1736 = vmul.f32 %v1734, %v614
    %v1737 = vsub.f32 %v1727, %v1735
    %v1738 = vsub.f32 %v1728, %v1736
    %v1739 = vmul.f32 %v1737, %v1737
    %v1740 = vmul.f32 %v1738, %v1738
    %1741 = vadd.xlane.f32.xlu0 %v1739
    %v1742 = vpop.xlane.xlu0 %1741
    %1743 = vadd.xlane.f32.xlu0 %v1740
    %v1744 = vpop.xlane.xlu0 %1743
    %v1745 = vmul.f32 %v1742, %v614
    %v1746 = vmul.f32 %v1744, %v614
    %v1747 = vadd.f32 %v1745, 1e-05
    %v1748 = vadd.f32 %v1746, 1e-05
    %v1749 = vrsqrt.pop %v1747
    %v1750 = vrsqrt.pop %v1748
    %v1751 = vmul.f32 %v1737, %v1749
    %v1752 = vmul.f32 %v1738, %v1750
    %v1754 = vlaneseq
    %v1755 = vshrl.u32 %v1754, 7
    %v1756 = vsub.s32 0, %v1755
    %v1757 = vrot.slane %v1729, %v1756
    %v1759 = vmul.f32 %v1751, %v1757
    %v1760 = vmul.f32 %v1752, %v1757
    %v1762 = vlaneseq
    %v1763 = vshrl.u32 %v1762, 7
    %v1764 = vsub.s32 0, %v1763
    %v1765 = vrot.slane %v1730, %v1764
    %v1767 = vadd.f32 %v1759, %v1765
    %v1768 = vadd.f32 %v1760, %v1765
    %s1769 = scalar_lea.vmem [#allocation11], 192
    %v1770 = vld [vmem:[%s1769] sm:$0xff]
    %v1771 = vld [vmem:[%s1769 + $0x8] sm:$0xf]
    %v1772 = vld [vmem:[%s1769 + $0xc] sm:$0xff]
    %v1773 = vld [vmem:[%s1769 + $0x14] sm:$0xf]
    %v1774 = vld [vmem:[%s1769 + $0x18] sm:$0xff]
    %v1775 = vld [vmem:[%s1769 + $0x20] sm:$0xf]
    %v1776 = vld [vmem:[%s1769 + $0x24] sm:$0xff]
    %v1777 = vld [vmem:[%s1769 + $0x2c] sm:$0xf]
    %v1778 = vld [vmem:[%s1769 + $0x30] sm:$0xff]
    %v1779 = vld [vmem:[%s1769 + $0x38] sm:$0xf]
    %v1780 = vld [vmem:[%s1769 + $0x3c] sm:$0xff]
    %v1781 = vld [vmem:[%s1769 + $0x44] sm:$0xf]
    %v1782 = vld [vmem:[%s1769 + $0x48] sm:$0xff]
    %v1783 = vld [vmem:[%s1769 + $0x50] sm:$0xf]
    %v1784 = vld [vmem:[%s1769 + $0x54] sm:$0xff]
    %v1785 = vld [vmem:[%s1769 + $0x5c] sm:$0xf]
    %v1786 = vld [vmem:[%s1769 + $0x60] sm:$0xff]
    %v1787 = vld [vmem:[%s1769 + $0x68] sm:$0xf]
    %v1788 = vld [vmem:[%s1769 + $0x6c] sm:$0xff]
    %v1789 = vld [vmem:[%s1769 + $0x74] sm:$0xf]
    %v1790 = vld [vmem:[%s1769 + $0x78] sm:$0xff]
    %v1791 = vld [vmem:[%s1769 + $0x80] sm:$0xf]
    %v1792 = vld [vmem:[%s1769 + $0x84] sm:$0xff]
    %v1793 = vld [vmem:[%s1769 + $0x8c] sm:$0xf]
    %v1794 = vld [vmem:[%s1769 + $0x90] sm:$0xff]
    %v1795 = vld [vmem:[%s1769 + $0x98] sm:$0xf]
    %v1796 = vld [vmem:[%s1769 + $0x9c] sm:$0xff]
    %v1797 = vld [vmem:[%s1769 + $0xa4] sm:$0xf]
    %v1798 = vld [vmem:[%s1769 + $0xa8] sm:$0xff]
    %v1799 = vld [vmem:[%s1769 + $0xb0] sm:$0xf]
    %v1800 = vld [vmem:[%s1769 + $0xb4] sm:$0xff]
    %v1801 = vld [vmem:[%s1769 + $0xbc] sm:$0xf]
    %v1802 = vpack.c.bf16 %v1768, %v1767
    %s1803 = scalar_lea.vmem %s8, 3
    %v1804 = vld [vmem:[%s1803] sm:$0x7]
    %v1806 = vlaneseq
    %v1807 = vshrl.u32 %v1806, 7
    %v1808 = vsub.s32 0, %v1807
    %v1809 = vrot.slane %v1804, %v1808
    %v1810 = vlaneseq
    %v1811 = vshrl.u32 %v1810, 7
    %v1812 = vsub.s32 1, %v1811
    %v1813 = vrot.slane %v1804, %v1812
    %v1814 = vlaneseq
    %v1815 = vshrl.u32 %v1814, 7
    %v1816 = vsub.s32 2, %v1815
    %v1817 = vrot.slane %v1804, %v1816
    %v1853 = vunpack.c.l.b16 %v1770
    %v1854 = vunpack.c.h.b16 %v1770
    %v1855 = vunpack.c.l.b16 %v1771
    %v1856 = vunpack.c.l.b16 %v1772
    %v1857 = vunpack.c.h.b16 %v1772
    %v1858 = vunpack.c.l.b16 %v1773
    %v1859 = vunpack.c.l.b16 %v1774
    %v1860 = vunpack.c.h.b16 %v1774
    %v1861 = vunpack.c.l.b16 %v1775
    %v1862 = vunpack.c.l.b16 %v1776
    %v1863 = vunpack.c.h.b16 %v1776
    %v1864 = vunpack.c.l.b16 %v1777
    %v1865 = vunpack.c.l.b16 %v1778
    %v1866 = vunpack.c.h.b16 %v1778
    %v1867 = vunpack.c.l.b16 %v1779
    %v1868 = vunpack.c.l.b16 %v1780
    %v1869 = vunpack.c.h.b16 %v1780
    %v1870 = vunpack.c.l.b16 %v1781
    %v1871 = vunpack.c.l.b16 %v1782
    %v1872 = vunpack.c.h.b16 %v1782
    %v1873 = vunpack.c.l.b16 %v1783
    %v1874 = vunpack.c.l.b16 %v1784
    %v1875 = vunpack.c.h.b16 %v1784
    %v1876 = vunpack.c.l.b16 %v1785
    %v1877 = vunpack.c.l.b16 %v1786
    %v1878 = vunpack.c.h.b16 %v1786
    %v1879 = vunpack.c.l.b16 %v1787
    %v1880 = vunpack.c.l.b16 %v1788
    %v1881 = vunpack.c.h.b16 %v1788
    %v1882 = vunpack.c.l.b16 %v1789
    %v1883 = vunpack.c.l.b16 %v1790
    %v1884 = vunpack.c.h.b16 %v1790
    %v1885 = vunpack.c.l.b16 %v1791
    %v1886 = vunpack.c.l.b16 %v1792
    %v1887 = vunpack.c.h.b16 %v1792
    %v1888 = vunpack.c.l.b16 %v1793
    %v1889 = vunpack.c.l.b16 %v1794
    %v1890 = vunpack.c.h.b16 %v1794
    %v1891 = vunpack.c.l.b16 %v1795
    %v1892 = vunpack.c.l.b16 %v1796
    %v1893 = vunpack.c.h.b16 %v1796
    %v1894 = vunpack.c.l.b16 %v1797
    %v1895 = vunpack.c.l.b16 %v1798
    %v1896 = vunpack.c.h.b16 %v1798
    %v1897 = vunpack.c.l.b16 %v1799
    %v1898 = vunpack.c.l.b16 %v1800
    %v1899 = vunpack.c.h.b16 %v1800
    %v1900 = vunpack.c.l.b16 %v1801
    %v1901 = vpack.c.b16 %v1856, %v1853
    %v1902 = vpack.c.b16 %v1857, %v1854
    %v1903 = vpack.c.b16 %v1858, %v1855
    %v1904 = vpack.c.b16 %v1862, %v1859
    %v1905 = vpack.c.b16 %v1863, %v1860
    %v1906 = vpack.c.b16 %v1864, %v1861
    %v1907 = vpack.c.b16 %v1868, %v1865
    %v1908 = vpack.c.b16 %v1869, %v1866
    %v1909 = vpack.c.b16 %v1870, %v1867
    %v1910 = vpack.c.b16 %v1874, %v1871
    %v1911 = vpack.c.b16 %v1875, %v1872
    %v1912 = vpack.c.b16 %v1876, %v1873
    %v1913 = vpack.c.b16 %v1880, %v1877
    %v1914 = vpack.c.b16 %v1881, %v1878
    %v1915 = vpack.c.b16 %v1882, %v1879
    %v1916 = vpack.c.b16 %v1886, %v1883
    %v1917 = vpack.c.b16 %v1887, %v1884
    %v1918 = vpack.c.b16 %v1888, %v1885
    %v1919 = vpack.c.b16 %v1892, %v1889
    %v1920 = vpack.c.b16 %v1893, %v1890
    %v1921 = vpack.c.b16 %v1894, %v1891
    %v1922 = vpack.c.b16 %v1898, %v1895
    %v1923 = vpack.c.b16 %v1899, %v1896
    %v1924 = vpack.c.b16 %v1900, %v1897
    %1949 = vmatprep.subr.bf16.mxu0 %v1902
    %1950 = vmatpush1.bf16.msra.mxu0 %v1901
    %1951 = vmatprep.subr.bf16.mxu0 %v1905
    %1952 = vmatpush1.bf16.msra.mxu0 %v1904
    %1953 = vmatprep.subr.bf16.mxu0 %v1908
    %1954 = vmatpush1.bf16.msra.mxu0 %v1907
    %1955 = vmatprep.subr.bf16.mxu0 %v1911
    %1956 = vmatpush1.bf16.msra.mxu0 %v1910
    %1957 = vmatprep.subr.bf16.mxu0 %v1914
    %1958 = vmatpush1.bf16.msra.mxu0 %v1913
    %1959 = vmatprep.subr.bf16.mxu0 %v1917
    %1960 = vmatpush1.bf16.msra.mxu0 %v1916
    %1961 = vmatprep.subr.bf16.mxu0 %v1920
    %1962 = vmatpush1.bf16.msra.mxu0 %v1919
    %1963 = vmatprep.subr.bf16.mxu0 %v1923
    %1964 = vmatpush1.bf16.msra.mxu0 %v1922
    %1965 = vmatprep.subr.bf16.mxu0 0
    %1966 = vmatpush1.bf16.msra.mxu0 0
    %1967 = vmatprep.subr.bf16.mxu0 0
    %1968 = vmatpush1.bf16.msra.mxu0 0
    %1969 = vmatprep.subr.bf16.mxu0 0
    %1970 = vmatpush1.bf16.msra.mxu0 0
    %1971 = vmatprep.subr.bf16.mxu0 0
    %1972 = vmatpush1.bf16.msra.mxu0 0
    %1973 = vmatprep.subr.bf16.mxu0 0
    %1974 = vmatpush1.bf16.msra.mxu0 0
    %1975 = vmatprep.subr.bf16.mxu0 0
    %1976 = vmatpush1.bf16.msra.mxu0 0
    %1977 = vmatprep.subr.bf16.mxu0 0
    %1978 = vmatpush1.bf16.msra.mxu0 0
    %1979 = vmatprep.subr.bf16.mxu0 0
    %1980 = vmatpush1.bf16.msra.mxu0 0
    %1981 = vmatprep.mubr.bf16.mxu0 0
    %1982 = vmatmul.mubr.bf16.gmra.mrb[0].mxu0 %v1802
    %v1983 = vpop.f32.mrb[0].mxu0
    %v1984 = vadd.f32 %v1809, %v1983
    %v1985 = vpop.f32.mrb[0].mxu0
    %v1986 = vadd.f32 %v1813, %v1985
    %v1987 = vpop.f32.mrb[0].mxu0
    %v1988 = vadd.f32 %v1809, %v1987
    %v1989 = vpop.f32.mrb[0].mxu0
    %v1990 = vadd.f32 %v1813, %v1989
    %1991 = vdwg.mxu0
    %1992 = vmatprep.subr.bf16.mxu0 0
    %1993 = vmatpush1.bf16.msra.mxu0 %v1903
    %1994 = vmatprep.subr.bf16.mxu0 0
    %1995 = vmatpush1.bf16.msra.mxu0 %v1906
    %1996 = vmatprep.subr.bf16.mxu0 0
    %1997 = vmatpush1.bf16.msra.mxu0 %v1909
    %1998 = vmatprep.subr.bf16.mxu0 0
    %1999 = vmatpush1.bf16.msra.mxu0 %v1912
    %2000 = vmatprep.subr.bf16.mxu0 0
    %2001 = vmatpush1.bf16.msra.mxu0 %v1915
    %2002 = vmatprep.subr.bf16.mxu0 0
    %2003 = vmatpush1.bf16.msra.mxu0 %v1918
    %2004 = vmatprep.subr.bf16.mxu0 0
    %2005 = vmatpush1.bf16.msra.mxu0 %v1921
    %2006 = vmatprep.subr.bf16.mxu0 0
    %2007 = vmatpush1.bf16.msra.mxu0 %v1924
    %2008 = vmatprep.subr.bf16.mxu0 0
    %2009 = vmatpush1.bf16.msra.mxu0 0
    %2010 = vmatprep.subr.bf16.mxu0 0
    %2011 = vmatpush1.bf16.msra.mxu0 0
    %2012 = vmatprep.subr.bf16.mxu0 0
    %2013 = vmatpush1.bf16.msra.mxu0 0
    %2014 = vmatprep.subr.bf16.mxu0 0
    %2015 = vmatpush1.bf16.msra.mxu0 0
    %2016 = vmatprep.subr.bf16.mxu0 0
    %2017 = vmatpush1.bf16.msra.mxu0 0
    %2018 = vmatprep.subr.bf16.mxu0 0
    %2019 = vmatpush1.bf16.msra.mxu0 0
    %2020 = vmatprep.subr.bf16.mxu0 0
    %2021 = vmatpush1.bf16.msra.mxu0 0
    %2022 = vmatprep.subr.bf16.mxu0 0
    %2023 = vmatpush1.bf16.msra.mxu0 0
    %2024 = vmatprep.mubr.bf16.mxu0 0
    %2025 = vmatmul.mubr.bf16.gmra.mrb[0].mxu0 %v1802
    %v2026 = vpop.f32.mrb[0].mxu0
    %v2027 = vadd.f32 %v1817, %v2026
    %v2028 = vpop.f32.mrb[0].mxu0
    %v2029 = vpop.f32.mrb[0].mxu0
    %v2030 = vadd.f32 %v1817, %v2029
    %v2031 = vpop.f32.mrb[0].mxu0
    %2032 = vdwg.mxu0
    %v2033 = vpack.c.bf16 %v1988, %v1984
    %v2034 = vpack.c.bf16 %v1990, %v1986
    %v2035 = vpack.c.bf16 %v2030, %v2027
    %s2036 = scalar_lea.vmem [#allocation12], 64
    %v2037 = vld [vmem:[%s2036] sm:$0xf]
    %v2038 = vld [vmem:[%s2036 + $0x4] sm:$0xf]
    %v2039 = vld [vmem:[%s2036 + $0x8] sm:$0xf]
    %v2040 = vld [vmem:[%s2036 + $0xc] sm:$0xf]
    %v2041 = vld [vmem:[%s2036 + $0x10] sm:$0xf]
    %v2042 = vld [vmem:[%s2036 + $0x14] sm:$0xf]
    %v2043 = vld [vmem:[%s2036 + $0x18] sm:$0xf]
    %v2044 = vld [vmem:[%s2036 + $0x1c] sm:$0xf]
    %v2045 = vld [vmem:[%s2036 + $0x20] sm:$0xf]
    %v2046 = vld [vmem:[%s2036 + $0x24] sm:$0xf]
    %v2047 = vld [vmem:[%s2036 + $0x28] sm:$0xf]
    %v2048 = vld [vmem:[%s2036 + $0x2c] sm:$0xf]
    %v2049 = vld [vmem:[%s2036 + $0x30] sm:$0xf]
    %v2050 = vld [vmem:[%s2036 + $0x34] sm:$0xf]
    %v2051 = vld [vmem:[%s2036 + $0x38] sm:$0xf]
    %v2052 = vld [vmem:[%s2036 + $0x3c] sm:$0xf]
    %v2054 = vsel %vm932, %v2033, 0
    %v2057 = vsel %vm932, %v2034, 0
    %2059 = vmatprep.subr.bf16.mxu0 0
    %2060 = vmatpush1.bf16.xpose.msra.mxu0 %v2057
    %2061 = vmatprep.subr.bf16.mxu0 0
    %2062 = vmatpush1.bf16.xpose.msra.mxu0 0
    %2063 = vmatprep.subr.bf16.mxu0 0
    %2064 = vmatpush1.bf16.xpose.msra.mxu0 0
    %2065 = vmatprep.subr.bf16.mxu0 0
    %2066 = vmatpush1.bf16.xpose.msra.mxu0 0
    %2067 = vmatprep.subr.bf16.mxu0 0
    %2068 = vmatpush1.bf16.xpose.msra.mxu0 0
    %2069 = vmatprep.subr.bf16.mxu0 0
    %2070 = vmatpush1.bf16.xpose.msra.mxu0 0
    %2071 = vmatprep.subr.bf16.mxu0 0
    %2072 = vmatpush1.bf16.xpose.msra.mxu0 0
    %2073 = vmatprep.subr.bf16.mxu0 0
    %2074 = vmatpush1.bf16.xpose.msra.mxu0 0
    %2075 = vmatprep.subr.bf16.mxu0 0
    %2076 = vmatpush1.bf16.xpose.msra.mxu0 0
    %2077 = vmatprep.subr.bf16.mxu0 0
    %2078 = vmatpush1.bf16.xpose.msra.mxu0 0
    %2079 = vmatprep.subr.bf16.mxu0 0
    %2080 = vmatpush1.bf16.xpose.msra.mxu0 0
    %2081 = vmatprep.subr.bf16.mxu0 0
    %2082 = vmatpush1.bf16.xpose.msra.mxu0 0
    %2083 = vmatprep.subr.bf16.mxu0 0
    %2084 = vmatpush1.bf16.xpose.msra.mxu0 0
    %2085 = vmatprep.subr.bf16.mxu0 0
    %2086 = vmatpush1.bf16.xpose.msra.mxu0 0
    %2087 = vmatprep.subr.bf16.mxu0 0
    %2088 = vmatpush1.bf16.xpose.msra.mxu0 0
    %2089 = vmatprep.subr.bf16.mxu0 0
    %2090 = vmatpush1.bf16.xpose.msra.mxu0 0
    %2091 = vmatprep.mubr.bf16.mxu0 0
    %2092 = vmatmul.mubr.bf16.gmra.mrb[0].mxu0 %v2054
    %v2093 = vpop.f32.mrb[0].mxu0
    %v2094 = vadd.f32 %v649, %v2093
    %v2095 = vpop.f32.mrb[0].mxu0
    %v2096 = vpop.f32.mrb[0].mxu0
    %v2097 = vadd.f32 %v650, %v2096
    %v2098 = vpop.f32.mrb[0].mxu0
    %2099 = vdwg.mxu0
    %v2100 = vsel %vm980, %v2094, -inf
    %2101 = vmax.xlane.f32.xlu0 %v2100
    %v2102 = vpop.xlane.xlu0 %2101
    %v2103 = vsel %vm980, %v2097, -inf
    %2104 = vmax.xlane.f32.xlu0 %v2103
    %v2105 = vpop.xlane.xlu0 %2104
    %v2106 = vsub.f32 %v2094, %v2102
    %v2107 = vsub.f32 %v2097, %v2105
    %v2108 = vmul.f32 %v2106, 1.442695
    %v2109 = vpow.pop %v2108
    %v2110 = vmul.f32 %v2107, 1.442695
    %v2111 = vpow.pop %v2110
    %v2112 = vsel %vm980, %v2109, 0.0
    %2113 = vadd.xlane.f32.xlu0 %v2112
    %v2114 = vpop.xlane.xlu0 %2113
    %v2115 = vsel %vm980, %v2111, 0.0
    %2116 = vadd.xlane.f32.xlu0 %v2115
    %v2117 = vpop.xlane.xlu0 %2116
    %v2118 = vrcp.pop %v2114
    %v2119 = vrcp.pop %v2117
    %v2120 = vmul.f32 %v2109, %v2118
    %v2121 = vmul.f32 %v2111, %v2119
    %v2122 = vpack.c.bf16 %v2121, %v2120
    %v2124 = vsel %vm980, %v2122, 0
    %2126 = vmatprep.subr.bf16.mxu0 0
    %2127 = vmatpush1.bf16.msra.mxu0 %v2035
    %2128 = vmatprep.subr.bf16.mxu0 0
    %2129 = vmatpush1.bf16.msra.mxu0 0
    %2130 = vmatprep.subr.bf16.mxu0 0
    %2131 = vmatpush1.bf16.msra.mxu0 0
    %2132 = vmatprep.subr.bf16.mxu0 0
    %2133 = vmatpush1.bf16.msra.mxu0 0
    %2134 = vmatprep.subr.bf16.mxu0 0
    %2135 = vmatpush1.bf16.msra.mxu0 0
    %2136 = vmatprep.subr.bf16.mxu0 0
    %2137 = vmatpush1.bf16.msra.mxu0 0
    %2138 = vmatprep.subr.bf16.mxu0 0
    %2139 = vmatpush1.bf16.msra.mxu0 0
    %2140 = vmatprep.subr.bf16.mxu0 0
    %2141 = vmatpush1.bf16.msra.mxu0 0
    %2142 = vmatprep.subr.bf16.mxu0 0
    %2143 = vmatpush1.bf16.msra.mxu0 0
    %2144 = vmatprep.subr.bf16.mxu0 0
    %2145 = vmatpush1.bf16.msra.mxu0 0
    %2146 = vmatprep.subr.bf16.mxu0 0
    %2147 = vmatpush1.bf16.msra.mxu0 0
    %2148 = vmatprep.subr.bf16.mxu0 0
    %2149 = vmatpush1.bf16.msra.mxu0 0
    %2150 = vmatprep.subr.bf16.mxu0 0
    %2151 = vmatpush1.bf16.msra.mxu0 0
    %2152 = vmatprep.subr.bf16.mxu0 0
    %2153 = vmatpush1.bf16.msra.mxu0 0
    %2154 = vmatprep.subr.bf16.mxu0 0
    %2155 = vmatpush1.bf16.msra.mxu0 0
    %2156 = vmatprep.subr.bf16.mxu0 0
    %2157 = vmatpush1.bf16.msra.mxu0 0
    %2158 = vmatprep.mubr.bf16.mxu0 0
    %2159 = vmatmul.mubr.bf16.gmra.mrb[0].mxu0 %v2124
    %v2160 = vpop.f32.mrb[0].mxu0
    %v2161 = vadd.f32 0.0, %v2160
    %v2162 = vpop.f32.mrb[0].mxu0
    %v2163 = vpop.f32.mrb[0].mxu0
    %v2164 = vadd.f32 0.0, %v2163
    %v2165 = vpop.f32.mrb[0].mxu0
    %2166 = vdwg.mxu0
    %v2167 = vpack.c.bf16 %v2164, %v2161
    %2169 = vrot.lane.b32.xlu0 %v2033, 64
    %v2170 = vpop.permute.xlu0 %2169
    %2172 = vrot.lane.b32.xlu0 %v2034, 64
    %v2173 = vpop.permute.xlu0 %2172
    %v2175 = vsel %vm932, %v2170, 0
    %v2178 = vsel %vm932, %v2173, 0
    %2180 = vmatprep.subr.bf16.mxu0 0
    %2181 = vmatpush1.bf16.xpose.msra.mxu0 %v2178
    %2182 = vmatprep.subr.bf16.mxu0 0
    %2183 = vmatpush1.bf16.xpose.msra.mxu0 0
    %2184 = vmatprep.subr.bf16.mxu0 0
    %2185 = vmatpush1.bf16.xpose.msra.mxu0 0
    %2186 = vmatprep.subr.bf16.mxu0 0
    %2187 = vmatpush1.bf16.xpose.msra.mxu0 0
    %2188 = vmatprep.subr.bf16.mxu0 0
    %2189 = vmatpush1.bf16.xpose.msra.mxu0 0
    %2190 = vmatprep.subr.bf16.mxu0 0
    %2191 = vmatpush1.bf16.xpose.msra.mxu0 0
    %2192 = vmatprep.subr.bf16.mxu0 0
    %2193 = vmatpush1.bf16.xpose.msra.mxu0 0
    %2194 = vmatprep.subr.bf16.mxu0 0
    %2195 = vmatpush1.bf16.xpose.msra.mxu0 0
    %2196 = vmatprep.subr.bf16.mxu0 0
    %2197 = vmatpush1.bf16.xpose.msra.mxu0 0
    %2198 = vmatprep.subr.bf16.mxu0 0
    %2199 = vmatpush1.bf16.xpose.msra.mxu0 0
    %2200 = vmatprep.subr.bf16.mxu0 0
    %2201 = vmatpush1.bf16.xpose.msra.mxu0 0
    %2202 = vmatprep.subr.bf16.mxu0 0
    %2203 = vmatpush1.bf16.xpose.msra.mxu0 0
    %2204 = vmatprep.subr.bf16.mxu0 0
    %2205 = vmatpush1.bf16.xpose.msra.mxu0 0
    %2206 = vmatprep.subr.bf16.mxu0 0
    %2207 = vmatpush1.bf16.xpose.msra.mxu0 0
    %2208 = vmatprep.subr.bf16.mxu0 0
    %2209 = vmatpush1.bf16.xpose.msra.mxu0 0
    %2210 = vmatprep.subr.bf16.mxu0 0
    %2211 = vmatpush1.bf16.xpose.msra.mxu0 0
    %2212 = vmatprep.mubr.bf16.mxu0 0
    %2213 = vmatmul.mubr.bf16.gmra.mrb[0].mxu0 %v2175
    %v2214 = vpop.f32.mrb[0].mxu0
    %v2215 = vadd.f32 %v649, %v2214
    %v2216 = vpop.f32.mrb[0].mxu0
    %v2217 = vpop.f32.mrb[0].mxu0
    %v2218 = vadd.f32 %v650, %v2217
    %v2219 = vpop.f32.mrb[0].mxu0
    %2220 = vdwg.mxu0
    %v2221 = vsel %vm980, %v2215, -inf
    %2222 = vmax.xlane.f32.xlu0 %v2221
    %v2223 = vpop.xlane.xlu0 %2222
    %v2224 = vsel %vm980, %v2218, -inf
    %2225 = vmax.xlane.f32.xlu0 %v2224
    %v2226 = vpop.xlane.xlu0 %2225
    %v2227 = vsub.f32 %v2215, %v2223
    %v2228 = vsub.f32 %v2218, %v2226
    %v2229 = vmul.f32 %v2227, 1.442695
    %v2230 = vpow.pop %v2229
    %v2231 = vmul.f32 %v2228, 1.442695
    %v2232 = vpow.pop %v2231
    %v2233 = vsel %vm980, %v2230, 0.0
    %2234 = vadd.xlane.f32.xlu0 %v2233
    %v2235 = vpop.xlane.xlu0 %2234
    %v2236 = vsel %vm980, %v2232, 0.0
    %2237 = vadd.xlane.f32.xlu0 %v2236
    %v2238 = vpop.xlane.xlu0 %2237
    %v2239 = vrcp.pop %v2235
    %v2240 = vrcp.pop %v2238
    %v2241 = vmul.f32 %v2230, %v2239
    %v2242 = vmul.f32 %v2232, %v2240
    %v2243 = vpack.c.bf16 %v2242, %v2241
    %2245 = vrot.lane.b32.xlu0 %v2035, 64
    %v2246 = vpop.permute.xlu0 %2245
    %v2249 = vsel %vm980, %v2243, 0
    %2251 = vmatprep.subr.bf16.mxu0 0
    %2252 = vmatpush1.bf16.msra.mxu0 %v2246
    %2253 = vmatprep.subr.bf16.mxu0 0
    %2254 = vmatpush1.bf16.msra.mxu0 0
    %2255 = vmatprep.subr.bf16.mxu0 0
    %2256 = vmatpush1.bf16.msra.mxu0 0
    %2257 = vmatprep.subr.bf16.mxu0 0
    %2258 = vmatpush1.bf16.msra.mxu0 0
    %2259 = vmatprep.subr.bf16.mxu0 0
    %2260 = vmatpush1.bf16.msra.mxu0 0
    %2261 = vmatprep.subr.bf16.mxu0 0
    %2262 = vmatpush1.bf16.msra.mxu0 0
    %2263 = vmatprep.subr.bf16.mxu0 0
    %2264 = vmatpush1.bf16.msra.mxu0 0
    %2265 = vmatprep.subr.bf16.mxu0 0
    %2266 = vmatpush1.bf16.msra.mxu0 0
    %2267 = vmatprep.subr.bf16.mxu0 0
    %2268 = vmatpush1.bf16.msra.mxu0 0
    %2269 = vmatprep.subr.bf16.mxu0 0
    %2270 = vmatpush1.bf16.msra.mxu0 0
    %2271 = vmatprep.subr.bf16.mxu0 0
    %2272 = vmatpush1.bf16.msra.mxu0 0
    %2273 = vmatprep.subr.bf16.mxu0 0
    %2274 = vmatpush1.bf16.msra.mxu0 0
    %2275 = vmatprep.subr.bf16.mxu0 0
    %2276 = vmatpush1.bf16.msra.mxu0 0
    %2277 = vmatprep.subr.bf16.mxu0 0
    %2278 = vmatpush1.bf16.msra.mxu0 0
    %2279 = vmatprep.subr.bf16.mxu0 0
    %2280 = vmatpush1.bf16.msra.mxu0 0
    %2281 = vmatprep.subr.bf16.mxu0 0
    %2282 = vmatpush1.bf16.msra.mxu0 0
    %2283 = vmatprep.mubr.bf16.mxu0 0
    %2284 = vmatmul.mubr.bf16.gmra.mrb[0].mxu0 %v2249
    %v2285 = vpop.f32.mrb[0].mxu0
    %v2286 = vadd.f32 0.0, %v2285
    %v2287 = vpop.f32.mrb[0].mxu0
    %v2288 = vpop.f32.mrb[0].mxu0
    %v2289 = vadd.f32 0.0, %v2288
    %v2290 = vpop.f32.mrb[0].mxu0
    %2291 = vdwg.mxu0
    %v2292 = vpack.c.bf16 %v2289, %v2286
    %v2301 = vunpack.c.l.b16 %v2045
    %v2302 = vunpack.c.l.b16 %v2046
    %v2303 = vunpack.c.l.b16 %v2047
    %v2304 = vunpack.c.l.b16 %v2048
    %v2305 = vunpack.c.l.b16 %v2049
    %v2306 = vunpack.c.l.b16 %v2050
    %v2307 = vunpack.c.l.b16 %v2051
    %v2308 = vunpack.c.l.b16 %v2052
    %v2309 = vpack.c.b16 %v2302, %v2301
    %v2310 = vpack.c.b16 %v2304, %v2303
    %v2311 = vpack.c.b16 %v2306, %v2305
    %v2312 = vpack.c.b16 %v2308, %v2307
    %v2318 = vsel %vm932, %v2292, 0
    %2320 = vmatprep.subr.bf16.mxu0 0
    %2321 = vmatpush1.bf16.msra.mxu0 %v2309
    %2322 = vmatprep.subr.bf16.mxu0 0
    %2323 = vmatpush1.bf16.msra.mxu0 %v2310
    %2324 = vmatprep.subr.bf16.mxu0 0
    %2325 = vmatpush1.bf16.msra.mxu0 %v2311
    %2326 = vmatprep.subr.bf16.mxu0 0
    %2327 = vmatpush1.bf16.msra.mxu0 %v2312
    %2328 = vmatprep.subr.bf16.mxu0 0
    %2329 = vmatpush1.bf16.msra.mxu0 0
    %2330 = vmatprep.subr.bf16.mxu0 0
    %2331 = vmatpush1.bf16.msra.mxu0 0
    %2332 = vmatprep.subr.bf16.mxu0 0
    %2333 = vmatpush1.bf16.msra.mxu0 0
    %2334 = vmatprep.subr.bf16.mxu0 0
    %2335 = vmatpush1.bf16.msra.mxu0 0
    %2336 = vmatprep.subr.bf16.mxu0 0
    %2337 = vmatpush1.bf16.msra.mxu0 0
    %2338 = vmatprep.subr.bf16.mxu0 0
    %2339 = vmatpush1.bf16.msra.mxu0 0
    %2340 = vmatprep.subr.bf16.mxu0 0
    %2341 = vmatpush1.bf16.msra.mxu0 0
    %2342 = vmatprep.subr.bf16.mxu0 0
    %2343 = vmatpush1.bf16.msra.mxu0 0
    %2344 = vmatprep.subr.bf16.mxu0 0
    %2345 = vmatpush1.bf16.msra.mxu0 0
    %2346 = vmatprep.subr.bf16.mxu0 0
    %2347 = vmatpush1.bf16.msra.mxu0 0
    %2348 = vmatprep.subr.bf16.mxu0 0
    %2349 = vmatpush1.bf16.msra.mxu0 0
    %2350 = vmatprep.subr.bf16.mxu0 0
    %2351 = vmatpush1.bf16.msra.mxu0 0
    %2352 = vmatprep.mubr.bf16.mxu0 0
    %2353 = vmatmul.mubr.bf16.gmra.mrb[0].mxu0 %v2318
    %v2354 = vpop.f32.mrb[0].mxu0
    %v2355 = vadd.f32 0.0, %v2354
    %v2356 = vpop.f32.mrb[0].mxu0
    %v2357 = vpop.f32.mrb[0].mxu0
    %v2358 = vadd.f32 0.0, %v2357
    %v2359 = vpop.f32.mrb[0].mxu0
    %2360 = vdwg.mxu0
    %v2369 = vunpack.c.l.b16 %v2037
    %v2370 = vunpack.c.l.b16 %v2038
    %v2371 = vunpack.c.l.b16 %v2039
    %v2372 = vunpack.c.l.b16 %v2040
    %v2373 = vunpack.c.l.b16 %v2041
    %v2374 = vunpack.c.l.b16 %v2042
    %v2375 = vunpack.c.l.b16 %v2043
    %v2376 = vunpack.c.l.b16 %v2044
    %v2377 = vpack.c.b16 %v2370, %v2369
    %v2378 = vpack.c.b16 %v2372, %v2371
    %v2379 = vpack.c.b16 %v2374, %v2373
    %v2380 = vpack.c.b16 %v2376, %v2375
    %v2386 = vsel %vm932, %v2167, 0
    %2388 = vmatprep.subr.bf16.mxu0 0
    %2389 = vmatpush1.bf16.msra.mxu0 %v2377
    %2390 = vmatprep.subr.bf16.mxu0 0
    %2391 = vmatpush1.bf16.msra.mxu0 %v2378
    %2392 = vmatprep.subr.bf16.mxu0 0
    %2393 = vmatpush1.bf16.msra.mxu0 %v2379
    %2394 = vmatprep.subr.bf16.mxu0 0
    %2395 = vmatpush1.bf16.msra.mxu0 %v2380
    %2396 = vmatprep.subr.bf16.mxu0 0
    %2397 = vmatpush1.bf16.msra.mxu0 0
    %2398 = vmatprep.subr.bf16.mxu0 0
    %2399 = vmatpush1.bf16.msra.mxu0 0
    %2400 = vmatprep.subr.bf16.mxu0 0
    %2401 = vmatpush1.bf16.msra.mxu0 0
    %2402 = vmatprep.subr.bf16.mxu0 0
    %2403 = vmatpush1.bf16.msra.mxu0 0
    %2404 = vmatprep.subr.bf16.mxu0 0
    %2405 = vmatpush1.bf16.msra.mxu0 0
    %2406 = vmatprep.subr.bf16.mxu0 0
    %2407 = vmatpush1.bf16.msra.mxu0 0
    %2408 = vmatprep.subr.bf16.mxu0 0
    %2409 = vmatpush1.bf16.msra.mxu0 0
    %2410 = vmatprep.subr.bf16.mxu0 0
    %2411 = vmatpush1.bf16.msra.mxu0 0
    %2412 = vmatprep.subr.bf16.mxu0 0
    %2413 = vmatpush1.bf16.msra.mxu0 0
    %2414 = vmatprep.subr.bf16.mxu0 0
    %2415 = vmatpush1.bf16.msra.mxu0 0
    %2416 = vmatprep.subr.bf16.mxu0 0
    %2417 = vmatpush1.bf16.msra.mxu0 0
    %2418 = vmatprep.subr.bf16.mxu0 0
    %2419 = vmatpush1.bf16.msra.mxu0 0
    %2420 = vmatprep.mubr.bf16.mxu0 0
    %2421 = vmatmul.mubr.bf16.gmra.mrb[0].mxu0 %v2386
    %v2422 = vpop.f32.mrb[0].mxu0
    %v2423 = vadd.f32 %v2355, %v2422
    %v2424 = vpop.f32.mrb[0].mxu0
    %v2425 = vpop.f32.mrb[0].mxu0
    %v2426 = vadd.f32 %v2358, %v2425
    %v2427 = vpop.f32.mrb[0].mxu0
    %2428 = vdwg.mxu0
    %s2429 = scalar_lea.vmem [#allocation14], 1
    %v2430 = vld [vmem:[%s2429] sm:$0x1]
    %v2432 = vlaneseq
    %v2433 = vshrl.u32 %v2432, 7
    %v2434 = vsub.s32 0, %v2433
    %v2435 = vrot.slane %v2430, %v2434
    %v2437 = vadd.f32 %v2423, %v2435
    %v2438 = vadd.f32 %v2426, %v2435
    %v2439 = vadd.f32 %v2437, %v1767
    %v2440 = vadd.f32 %v2438, %v1768
    %s2441 = scalar_lea.vmem [#allocation15], 1
    %v2442 = vld [vmem:[%s2441] sm:$0x1]
    %s2443 = scalar_lea.vmem [#allocation17], 1
    %v2444 = vld [vmem:[%s2443] sm:$0x1]
    %2445 = vadd.xlane.f32.xlu0 %v2439
    %v2446 = vpop.xlane.xlu0 %2445
    %2447 = vadd.xlane.f32.xlu0 %v2440
    %v2448 = vpop.xlane.xlu0 %2447
    %v2449 = vmul.f32 %v2446, %v614
    %v2450 = vmul.f32 %v2448, %v614
    %v2451 = vsub.f32 %v2439, %v2449
    %v2452 = vsub.f32 %v2440, %v2450
    %v2453 = vmul.f32 %v2451, %v2451
    %v2454 = vmul.f32 %v2452, %v2452
    %2455 = vadd.xlane.f32.xlu0 %v2453
    %v2456 = vpop.xlane.xlu0 %2455
    %2457 = vadd.xlane.f32.xlu0 %v2454
    %v2458 = vpop.xlane.xlu0 %2457
    %v2459 = vmul.f32 %v2456, %v614
    %v2460 = vmul.f32 %v2458, %v614
    %v2461 = vadd.f32 %v2459, 1e-05
    %v2462 = vadd.f32 %v2460, 1e-05
    %v2463 = vrsqrt.pop %v2461
    %v2464 = vrsqrt.pop %v2462
    %v2465 = vmul.f32 %v2451, %v2463
    %v2466 = vmul.f32 %v2452, %v2464
    %v2468 = vlaneseq
    %v2469 = vshrl.u32 %v2468, 7
    %v2470 = vsub.s32 0, %v2469
    %v2471 = vrot.slane %v2442, %v2470
    %v2473 = vmul.f32 %v2465, %v2471
    %v2474 = vmul.f32 %v2466, %v2471
    %v2476 = vlaneseq
    %v2477 = vshrl.u32 %v2476, 7
    %v2478 = vsub.s32 0, %v2477
    %v2479 = vrot.slane %v2444, %v2478
    %v2481 = vadd.f32 %v2473, %v2479
    %v2482 = vadd.f32 %v2474, %v2479
    %s2483 = scalar_lea.vmem [#allocation18], 128
    %v2484 = vld [vmem:[%s2483] sm:$0xff]
    %v2485 = vld [vmem:[%s2483 + $0x8] sm:$0xff]
    %v2486 = vld [vmem:[%s2483 + $0x10] sm:$0xff]
    %v2487 = vld [vmem:[%s2483 + $0x18] sm:$0xff]
    %v2488 = vld [vmem:[%s2483 + $0x20] sm:$0xff]
    %v2489 = vld [vmem:[%s2483 + $0x28] sm:$0xff]
    %v2490 = vld [vmem:[%s2483 + $0x30] sm:$0xff]
    %v2491 = vld [vmem:[%s2483 + $0x38] sm:$0xff]
    %v2492 = vld [vmem:[%s2483 + $0x40] sm:$0xff]
    %v2493 = vld [vmem:[%s2483 + $0x48] sm:$0xff]
    %v2494 = vld [vmem:[%s2483 + $0x50] sm:$0xff]
    %v2495 = vld [vmem:[%s2483 + $0x58] sm:$0xff]
    %v2496 = vld [vmem:[%s2483 + $0x60] sm:$0xff]
    %v2497 = vld [vmem:[%s2483 + $0x68] sm:$0xff]
    %v2498 = vld [vmem:[%s2483 + $0x70] sm:$0xff]
    %v2499 = vld [vmem:[%s2483 + $0x78] sm:$0xff]
    %v2500 = vpack.c.bf16 %v2482, %v2481
    %s2501 = scalar_lea.vmem [#allocation20], 2
    %v2502 = vld [vmem:[%s2501] sm:$0x3]
    %v2504 = vlaneseq
    %v2505 = vshrl.u32 %v2504, 7
    %v2506 = vsub.s32 0, %v2505
    %v2507 = vrot.slane %v2502, %v2506
    %v2508 = vlaneseq
    %v2509 = vshrl.u32 %v2508, 7
    %v2510 = vsub.s32 1, %v2509
    %v2511 = vrot.slane %v2502, %v2510
    %v2530 = vunpack.c.l.b16 %v2484
    %v2531 = vunpack.c.h.b16 %v2484
    %v2532 = vunpack.c.l.b16 %v2485
    %v2533 = vunpack.c.h.b16 %v2485
    %v2534 = vunpack.c.l.b16 %v2486
    %v2535 = vunpack.c.h.b16 %v2486
    %v2536 = vunpack.c.l.b16 %v2487
    %v2537 = vunpack.c.h.b16 %v2487
    %v2538 = vunpack.c.l.b16 %v2488
    %v2539 = vunpack.c.h.b16 %v2488
    %v2540 = vunpack.c.l.b16 %v2489
    %v2541 = vunpack.c.h.b16 %v2489
    %v2542 = vunpack.c.l.b16 %v2490
    %v2543 = vunpack.c.h.b16 %v2490
    %v2544 = vunpack.c.l.b16 %v2491
    %v2545 = vunpack.c.h.b16 %v2491
    %v2546 = vunpack.c.l.b16 %v2492
    %v2547 = vunpack.c.h.b16 %v2492
    %v2548 = vunpack.c.l.b16 %v2493
    %v2549 = vunpack.c.h.b16 %v2493
    %v2550 = vunpack.c.l.b16 %v2494
    %v2551 = vunpack.c.h.b16 %v2494
    %v2552 = vunpack.c.l.b16 %v2495
    %v2553 = vunpack.c.h.b16 %v2495
    %v2554 = vunpack.c.l.b16 %v2496
    %v2555 = vunpack.c.h.b16 %v2496
    %v2556 = vunpack.c.l.b16 %v2497
    %v2557 = vunpack.c.h.b16 %v2497
    %v2558 = vunpack.c.l.b16 %v2498
    %v2559 = vunpack.c.h.b16 %v2498
    %v2560 = vunpack.c.l.b16 %v2499
    %v2561 = vunpack.c.h.b16 %v2499
    %v2562 = vpack.c.b16 %v2532, %v2530
    %v2563 = vpack.c.b16 %v2533, %v2531
    %v2564 = vpack.c.b16 %v2536, %v2534
    %v2565 = vpack.c.b16 %v2537, %v2535
    %v2566 = vpack.c.b16 %v2540, %v2538
    %v2567 = vpack.c.b16 %v2541, %v2539
    %v2568 = vpack.c.b16 %v2544, %v2542
    %v2569 = vpack.c.b16 %v2545, %v2543
    %v2570 = vpack.c.b16 %v2548, %v2546
    %v2571 = vpack.c.b16 %v2549, %v2547
    %v2572 = vpack.c.b16 %v2552, %v2550
    %v2573 = vpack.c.b16 %v2553, %v2551
    %v2574 = vpack.c.b16 %v2556, %v2554
    %v2575 = vpack.c.b16 %v2557, %v2555
    %v2576 = vpack.c.b16 %v2560, %v2558
    %v2577 = vpack.c.b16 %v2561, %v2559
    %2594 = vmatprep.subr.bf16.mxu0 %v2563
    %2595 = vmatpush1.bf16.msra.mxu0 %v2562
    %2596 = vmatprep.subr.bf16.mxu0 %v2565
    %2597 = vmatpush1.bf16.msra.mxu0 %v2564
    %2598 = vmatprep.subr.bf16.mxu0 %v2567
    %2599 = vmatpush1.bf16.msra.mxu0 %v2566
    %2600 = vmatprep.subr.bf16.mxu0 %v2569
    %2601 = vmatpush1.bf16.msra.mxu0 %v2568
    %2602 = vmatprep.subr.bf16.mxu0 %v2571
    %2603 = vmatpush1.bf16.msra.mxu0 %v2570
    %2604 = vmatprep.subr.bf16.mxu0 %v2573
    %2605 = vmatpush1.bf16.msra.mxu0 %v2572
    %2606 = vmatprep.subr.bf16.mxu0 %v2575
    %2607 = vmatpush1.bf16.msra.mxu0 %v2574
    %2608 = vmatprep.subr.bf16.mxu0 %v2577
    %2609 = vmatpush1.bf16.msra.mxu0 %v2576
    %2610 = vmatprep.subr.bf16.mxu0 0
    %2611 = vmatpush1.bf16.msra.mxu0 0
    %2612 = vmatprep.subr.bf16.mxu0 0
    %2613 = vmatpush1.bf16.msra.mxu0 0
    %2614 = vmatprep.subr.bf16.mxu0 0
    %2615 = vmatpush1.bf16.msra.mxu0 0
    %2616 = vmatprep.subr.bf16.mxu0 0
    %2617 = vmatpush1.bf16.msra.mxu0 0
    %2618 = vmatprep.subr.bf16.mxu0 0
    %2619 = vmatpush1.bf16.msra.mxu0 0
    %2620 = vmatprep.subr.bf16.mxu0 0
    %2621 = vmatpush1.bf16.msra.mxu0 0
    %2622 = vmatprep.subr.bf16.mxu0 0
    %2623 = vmatpush1.bf16.msra.mxu0 0
    %2624 = vmatprep.subr.bf16.mxu0 0
    %2625 = vmatpush1.bf16.msra.mxu0 0
    %2626 = vmatprep.mubr.bf16.mxu0 0
    %2627 = vmatmul.mubr.bf16.gmra.mrb[0].mxu0 %v2500
    %v2628 = vpop.f32.mrb[0].mxu0
    %v2629 = vadd.f32 %v2507, %v2628
    %v2630 = vpop.f32.mrb[0].mxu0
    %v2631 = vadd.f32 %v2511, %v2630
    %v2632 = vpop.f32.mrb[0].mxu0
    %v2633 = vadd.f32 %v2507, %v2632
    %v2634 = vpop.f32.mrb[0].mxu0
    %v2635 = vadd.f32 %v2511, %v2634
    %2636 = vdwg.mxu0
    %v2637 = vmul.f32 %v2629, 0.5
    %v2638 = vmul.f32 %v2631, 0.5
    %v2639 = vmul.f32 %v2633, 0.5
    %v2640 = vmul.f32 %v2635, 0.5
    %v2641 = vmul.f32 %v2629, 0.044715
    %v2642 = vmul.f32 %v2631, 0.044715
    %v2643 = vmul.f32 %v2633, 0.044715
    %v2644 = vmul.f32 %v2635, 0.044715
    %v2645 = vmul.f32 %v2641, %v2629
    %v2646 = vmul.f32 %v2642, %v2631
    %v2647 = vmul.f32 %v2643, %v2633
    %v2648 = vmul.f32 %v2644, %v2635
    %v2649 = vmul.f32 %v2645, %v2629
    %v2650 = vmul.f32 %v2646, %v2631
    %v2651 = vmul.f32 %v2647, %v2633
    %v2652 = vmul.f32 %v2648, %v2635
    %v2653 = vadd.f32 %v2629, %v2649
    %v2654 = vadd.f32 %v2631, %v2650
    %v2655 = vadd.f32 %v2633, %v2651
    %v2656 = vadd.f32 %v2635, %v2652
    %v2657 = vmul.f32 %v2653, 0.7978846
    %v2658 = vmul.f32 %v2654, 0.7978846
    %v2659 = vmul.f32 %v2655, 0.7978846
    %v2660 = vmul.f32 %v2656, 0.7978846
    %v2661 = vtanh.pop %v2657
    %v2662 = vtanh.pop %v2658
    %v2663 = vtanh.pop %v2659
    %v2664 = vtanh.pop %v2660
    %v2665 = vadd.f32 %v2661, 1.0
    %v2666 = vadd.f32 %v2662, 1.0
    %v2667 = vadd.f32 %v2663, 1.0
    %v2668 = vadd.f32 %v2664, 1.0
    %v2669 = vmul.f32 %v2637, %v2665
    %v2670 = vmul.f32 %v2638, %v2666
    %v2671 = vmul.f32 %v2639, %v2667
    %v2672 = vmul.f32 %v2640, %v2668
    %s2673 = scalar_lea.vmem [#allocation21], 128
    %v2674 = vld [vmem:[%s2673] sm:$0xf]
    %v2675 = vld [vmem:[%s2673 + $0x4] sm:$0xf]
    %v2676 = vld [vmem:[%s2673 + $0x8] sm:$0xf]
    %v2677 = vld [vmem:[%s2673 + $0xc] sm:$0xf]
    %v2678 = vld [vmem:[%s2673 + $0x10] sm:$0xf]
    %v2679 = vld [vmem:[%s2673 + $0x14] sm:$0xf]
    %v2680 = vld [vmem:[%s2673 + $0x18] sm:$0xf]
    %v2681 = vld [vmem:[%s2673 + $0x1c] sm:$0xf]
    %v2682 = vld [vmem:[%s2673 + $0x20] sm:$0xf]
    %v2683 = vld [vmem:[%s2673 + $0x24] sm:$0xf]
    %v2684 = vld [vmem:[%s2673 + $0x28] sm:$0xf]
    %v2685 = vld [vmem:[%s2673 + $0x2c] sm:$0xf]
    %v2686 = vld [vmem:[%s2673 + $0x30] sm:$0xf]
    %v2687 = vld [vmem:[%s2673 + $0x34] sm:$0xf]
    %v2688 = vld [vmem:[%s2673 + $0x38] sm:$0xf]
    %v2689 = vld [vmem:[%s2673 + $0x3c] sm:$0xf]
    %v2690 = vld [vmem:[%s2673 + $0x40] sm:$0xf]
    %v2691 = vld [vmem:[%s2673 + $0x44] sm:$0xf]
    %v2692 = vld [vmem:[%s2673 + $0x48] sm:$0xf]
    %v2693 = vld [vmem:[%s2673 + $0x4c] sm:$0xf]
    %v2694 = vld [vmem:[%s2673 + $0x50] sm:$0xf]
    %v2695 = vld [vmem:[%s2673 + $0x54] sm:$0xf]
    %v2696 = vld [vmem:[%s2673 + $0x58] sm:$0xf]
    %v2697 = vld [vmem:[%s2673 + $0x5c] sm:$0xf]
    %v2698 = vld [vmem:[%s2673 + $0x60] sm:$0xf]
    %v2699 = vld [vmem:[%s2673 + $0x64] sm:$0xf]
    %v2700 = vld [vmem:[%s2673 + $0x68] sm:$0xf]
    %v2701 = vld [vmem:[%s2673 + $0x6c] sm:$0xf]
    %v2702 = vld [vmem:[%s2673 + $0x70] sm:$0xf]
    %v2703 = vld [vmem:[%s2673 + $0x74] sm:$0xf]
    %v2704 = vld [vmem:[%s2673 + $0x78] sm:$0xf]
    %v2705 = vld [vmem:[%s2673 + $0x7c] sm:$0xf]
    %v2706 = vpack.c.bf16 %v2671, %v2669
    %v2707 = vpack.c.bf16 %v2672, %v2670
    %s2708 = scalar_lea.vmem [#allocation23], 1
    %v2709 = vld [vmem:[%s2708] sm:$0x1]
    %v2711 = vlaneseq
    %v2712 = vshrl.u32 %v2711, 7
    %v2713 = vsub.s32 0, %v2712
    %v2714 = vrot.slane %v2709, %v2713
    %v2748 = vunpack.c.l.b16 %v2674
    %v2749 = vunpack.c.l.b16 %v2675
    %v2750 = vunpack.c.l.b16 %v2676
    %v2751 = vunpack.c.l.b16 %v2677
    %v2752 = vunpack.c.l.b16 %v2678
    %v2753 = vunpack.c.l.b16 %v2679
    %v2754 = vunpack.c.l.b16 %v2680
    %v2755 = vunpack.c.l.b16 %v2681
    %v2756 = vunpack.c.l.b16 %v2682
    %v2757 = vunpack.c.l.b16 %v2683
    %v2758 = vunpack.c.l.b16 %v2684
    %v2759 = vunpack.c.l.b16 %v2685
    %v2760 = vunpack.c.l.b16 %v2686
    %v2761 = vunpack.c.l.b16 %v2687
    %v2762 = vunpack.c.l.b16 %v2688
    %v2763 = vunpack.c.l.b16 %v2689
    %v2764 = vunpack.c.l.b16 %v2690
    %v2765 = vunpack.c.l.b16 %v2691
    %v2766 = vunpack.c.l.b16 %v2692
    %v2767 = vunpack.c.l.b16 %v2693
    %v2768 = vunpack.c.l.b16 %v2694
    %v2769 = vunpack.c.l.b16 %v2695
    %v2770 = vunpack.c.l.b16 %v2696
    %v2771 = vunpack.c.l.b16 %v2697
    %v2772 = vunpack.c.l.b16 %v2698
    %v2773 = vunpack.c.l.b16 %v2699
    %v2774 = vunpack.c.l.b16 %v2700
    %v2775 = vunpack.c.l.b16 %v2701
    %v2776 = vunpack.c.l.b16 %v2702
    %v2777 = vunpack.c.l.b16 %v2703
    %v2778 = vunpack.c.l.b16 %v2704
    %v2779 = vunpack.c.l.b16 %v2705
    %v2780 = vpack.c.b16 %v2749, %v2748
    %v2781 = vpack.c.b16 %v2751, %v2750
    %v2782 = vpack.c.b16 %v2753, %v2752
    %v2783 = vpack.c.b16 %v2755, %v2754
    %v2784 = vpack.c.b16 %v2757, %v2756
    %v2785 = vpack.c.b16 %v2759, %v2758
    %v2786 = vpack.c.b16 %v2761, %v2760
    %v2787 = vpack.c.b16 %v2763, %v2762
    %v2788 = vpack.c.b16 %v2765, %v2764
    %v2789 = vpack.c.b16 %v2767, %v2766
    %v2790 = vpack.c.b16 %v2769, %v2768
    %v2791 = vpack.c.b16 %v2771, %v2770
    %v2792 = vpack.c.b16 %v2773, %v2772
    %v2793 = vpack.c.b16 %v2775, %v2774
    %v2794 = vpack.c.b16 %v2777, %v2776
    %v2795 = vpack.c.b16 %v2779, %v2778
    %2812 = vmatprep.subr.bf16.mxu0 0
    %2813 = vmatpush1.bf16.msra.mxu0 %v2780
    %2814 = vmatprep.subr.bf16.mxu0 0
    %2815 = vmatpush1.bf16.msra.mxu0 %v2781
    %2816 = vmatprep.subr.bf16.mxu0 0
    %2817 = vmatpush1.bf16.msra.mxu0 %v2782
    %2818 = vmatprep.subr.bf16.mxu0 0
    %2819 = vmatpush1.bf16.msra.mxu0 %v2783
    %2820 = vmatprep.subr.bf16.mxu0 0
    %2821 = vmatpush1.bf16.msra.mxu0 %v2784
    %2822 = vmatprep.subr.bf16.mxu0 0
    %2823 = vmatpush1.bf16.msra.mxu0 %v2785
    %2824 = vmatprep.subr.bf16.mxu0 0
    %2825 = vmatpush1.bf16.msra.mxu0 %v2786
    %2826 = vmatprep.subr.bf16.mxu0 0
    %2827 = vmatpush1.bf16.msra.mxu0 %v2787
    %2828 = vmatprep.subr.bf16.mxu0 0
    %2829 = vmatpush1.bf16.msra.mxu0 %v2788
    %2830 = vmatprep.subr.bf16.mxu0 0
    %2831 = vmatpush1.bf16.msra.mxu0 %v2789
    %2832 = vmatprep.subr.bf16.mxu0 0
    %2833 = vmatpush1.bf16.msra.mxu0 %v2790
    %2834 = vmatprep.subr.bf16.mxu0 0
    %2835 = vmatpush1.bf16.msra.mxu0 %v2791
    %2836 = vmatprep.subr.bf16.mxu0 0
    %2837 = vmatpush1.bf16.msra.mxu0 %v2792
    %2838 = vmatprep.subr.bf16.mxu0 0
    %2839 = vmatpush1.bf16.msra.mxu0 %v2793
    %2840 = vmatprep.subr.bf16.mxu0 0
    %2841 = vmatpush1.bf16.msra.mxu0 %v2794
    %2842 = vmatprep.subr.bf16.mxu0 0
    %2843 = vmatpush1.bf16.msra.mxu0 %v2795
    %2844 = vmatprep.mubr.bf16.mxu0 %v2707
    %2845 = vmatmul.mubr.bf16.gmra.mrb[0].mxu0 %v2706
    %v2846 = vpop.f32.mrb[0].mxu0
    %v2847 = vadd.f32 %v2714, %v2846
    %v2848 = vpop.f32.mrb[0].mxu0
    %v2849 = vpop.f32.mrb[0].mxu0
    %v2850 = vadd.f32 %v2714, %v2849
    %v2851 = vpop.f32.mrb[0].mxu0
    %2852 = vdwg.mxu0
    %v2853 = vadd.f32 %v2847, %v2481
    %v2854 = vadd.f32 %v2850, %v2482
    %s2855 = scalar_lea.vmem [#allocation24], 1
    %v2856 = vld [vmem:[%s2855] sm:$0x1]
    %s2857 = scalar_lea.vmem [#allocation26], 1
    %v2858 = vld [vmem:[%s2857] sm:$0x1]
    %2859 = vadd.xlane.f32.xlu0 %v2853
    %v2860 = vpop.xlane.xlu0 %2859
    %2861 = vadd.xlane.f32.xlu0 %v2854
    %v2862 = vpop.xlane.xlu0 %2861
    %v2863 = vmul.f32 %v2860, %v614
    %v2864 = vmul.f32 %v2862, %v614
    %v2865 = vsub.f32 %v2853, %v2863
    %v2866 = vsub.f32 %v2854, %v2864
    %v2867 = vmul.f32 %v2865, %v2865
    %v2868 = vmul.f32 %v2866, %v2866
    %2869 = vadd.xlane.f32.xlu0 %v2867
    %v2870 = vpop.xlane.xlu0 %2869
    %2871 = vadd.xlane.f32.xlu0 %v2868
    %v2872 = vpop.xlane.xlu0 %2871
    %v2873 = vmul.f32 %v2870, %v614
    %v2874 = vmul.f32 %v2872, %v614
    %v2875 = vadd.f32 %v2873, 1e-05
    %v2876 = vadd.f32 %v2874, 1e-05
    %v2877 = vrsqrt.pop %v2875
    %v2878 = vrsqrt.pop %v2876
    %v2879 = vmul.f32 %v2865, %v2877
    %v2880 = vmul.f32 %v2866, %v2878
    %v2882 = vlaneseq
    %v2883 = vshrl.u32 %v2882, 7
    %v2884 = vsub.s32 0, %v2883
    %v2885 = vrot.slane %v2856, %v2884
    %v2887 = vmul.f32 %v2879, %v2885
    %v2888 = vmul.f32 %v2880, %v2885
    %v2890 = vlaneseq
    %v2891 = vshrl.u32 %v2890, 7
    %v2892 = vsub.s32 0, %v2891
    %v2893 = vrot.slane %v2858, %v2892
    %v2895 = vadd.f32 %v2887, %v2893
    %v2896 = vadd.f32 %v2888, %v2893
    %v2897 = vld [vmem:[#allocation27] sm:$0xf]
    %v2898 = vld [vmem:[#allocation27 + $0x4] sm:$0xf]
    %v2899 = vld [vmem:[#allocation27 + $0x8] sm:$0xf]
    %v2900 = vld [vmem:[#allocation27 + $0xc] sm:$0xf]
    %v2901 = vld [vmem:[#allocation27 + $0x10] sm:$0xf]
    %v2902 = vld [vmem:[#allocation27 + $0x14] sm:$0xf]
    %v2903 = vld [vmem:[#allocation27 + $0x18] sm:$0xf]
    %v2904 = vld [vmem:[#allocation27 + $0x1c] sm:$0xf]
    %v2905 = vld [vmem:[#allocation27 + $0x20] sm:$0xf]
    %v2906 = vld [vmem:[#allocation27 + $0x24] sm:$0xf]
    %v2907 = vld [vmem:[#allocation27 + $0x28] sm:$0xf]
    %v2908 = vld [vmem:[#allocation27 + $0x2c] sm:$0xf]
    %v2909 = vld [vmem:[#allocation27 + $0x30] sm:$0xf]
    %v2910 = vld [vmem:[#allocation27 + $0x34] sm:$0xf]
    %v2911 = vld [vmem:[#allocation27 + $0x38] sm:$0xf]
    %v2912 = vld [vmem:[#allocation27 + $0x3c] sm:$0xf]
    %v2913 = vpack.c.bf16 %v2896, %v2895
    %v2914 = vld [vmem:[#allocation29] sm:$0x1]
    %v2916 = vlaneseq
    %v2917 = vshrl.u32 %v2916, 7
    %v2918 = vsub.s32 0, %v2917
    %v2919 = vrot.slane %v2914, %v2918
    %v2937 = vunpack.c.l.b16 %v2897
    %v2938 = vunpack.c.l.b16 %v2898
    %v2939 = vunpack.c.l.b16 %v2899
    %v2940 = vunpack.c.l.b16 %v2900
    %v2941 = vunpack.c.l.b16 %v2901
    %v2942 = vunpack.c.l.b16 %v2902
    %v2943 = vunpack.c.l.b16 %v2903
    %v2944 = vunpack.c.l.b16 %v2904
    %v2945 = vunpack.c.l.b16 %v2905
    %v2946 = vunpack.c.l.b16 %v2906
    %v2947 = vunpack.c.l.b16 %v2907
    %v2948 = vunpack.c.l.b16 %v2908
    %v2949 = vunpack.c.l.b16 %v2909
    %v2950 = vunpack.c.l.b16 %v2910
    %v2951 = vunpack.c.l.b16 %v2911
    %v2952 = vunpack.c.l.b16 %v2912
    %v2953 = vpack.c.b16 %v2938, %v2937
    %v2954 = vpack.c.b16 %v2940, %v2939
    %v2955 = vpack.c.b16 %v2942, %v2941
    %v2956 = vpack.c.b16 %v2944, %v2943
    %v2957 = vpack.c.b16 %v2946, %v2945
    %v2958 = vpack.c.b16 %v2948, %v2947
    %v2959 = vpack.c.b16 %v2950, %v2949
    %v2960 = vpack.c.b16 %v2952, %v2951
    %2969 = vmatprep.subr.bf16.mxu0 0
    %2970 = vmatpush1.bf16.msra.mxu0 %v2953
    %2971 = vmatprep.subr.bf16.mxu0 0
    %2972 = vmatpush1.bf16.msra.mxu0 %v2954
    %2973 = vmatprep.subr.bf16.mxu0 0
    %2974 = vmatpush1.bf16.msra.mxu0 %v2955
    %2975 = vmatprep.subr.bf16.mxu0 0
    %2976 = vmatpush1.bf16.msra.mxu0 %v2956
    %2977 = vmatprep.subr.bf16.mxu0 0
    %2978 = vmatpush1.bf16.msra.mxu0 %v2957
    %2979 = vmatprep.subr.bf16.mxu0 0
    %2980 = vmatpush1.bf16.msra.mxu0 %v2958
    %2981 = vmatprep.subr.bf16.mxu0 0
    %2982 = vmatpush1.bf16.msra.mxu0 %v2959
    %2983 = vmatprep.subr.bf16.mxu0 0
    %2984 = vmatpush1.bf16.msra.mxu0 %v2960
    %2985 = vmatprep.subr.bf16.mxu0 0
    %2986 = vmatpush1.bf16.msra.mxu0 0
    %2987 = vmatprep.subr.bf16.mxu0 0
    %2988 = vmatpush1.bf16.msra.mxu0 0
    %2989 = vmatprep.subr.bf16.mxu0 0
    %2990 = vmatpush1.bf16.msra.mxu0 0
    %2991 = vmatprep.subr.bf16.mxu0 0
    %2992 = vmatpush1.bf16.msra.mxu0 0
    %2993 = vmatprep.subr.bf16.mxu0 0
    %2994 = vmatpush1.bf16.msra.mxu0 0
    %2995 = vmatprep.subr.bf16.mxu0 0
    %2996 = vmatpush1.bf16.msra.mxu0 0
    %2997 = vmatprep.subr.bf16.mxu0 0
    %2998 = vmatpush1.bf16.msra.mxu0 0
    %2999 = vmatprep.subr.bf16.mxu0 0
    %3000 = vmatpush1.bf16.msra.mxu0 0
    %3001 = vmatprep.mubr.bf16.mxu0 0
    %3002 = vmatmul.mubr.bf16.gmra.mrb[0].mxu0 %v2913
    %v3003 = vpop.f32.mrb[0].mxu0
    %v3004 = vadd.f32 %v2919, %v3003
    %v3005 = vpop.f32.mrb[0].mxu0
    %v3006 = vpop.f32.mrb[0].mxu0
    %v3007 = vadd.f32 %v2919, %v3006
    %v3008 = vpop.f32.mrb[0].mxu0
    %3009 = vdwg.mxu0
    %v3010 = vtanh.pop %v3004
    %v3011 = vtanh.pop %v3007
    %v3012 = vld [vmem:[#allocation30] sm:$0xf]
    %v3013 = vld [vmem:[#allocation30 + $0x4] sm:$0xf]
    %v3014 = vld [vmem:[#allocation30 + $0x8] sm:$0xf]
    %v3015 = vld [vmem:[#allocation30 + $0xc] sm:$0xf]
    %v3016 = vld [vmem:[#allocation30 + $0x10] sm:$0xf]
    %v3017 = vld [vmem:[#allocation30 + $0x14] sm:$0xf]
    %v3018 = vld [vmem:[#allocation30 + $0x18] sm:$0xf]
    %v3019 = vld [vmem:[#allocation30 + $0x1c] sm:$0xf]
    %v3020 = vld [vmem:[#allocation30 + $0x20] sm:$0xf]
    %v3021 = vld [vmem:[#allocation30 + $0x24] sm:$0xf]
    %v3022 = vld [vmem:[#allocation30 + $0x28] sm:$0xf]
    %v3023 = vld [vmem:[#allocation30 + $0x2c] sm:$0xf]
    %v3024 = vld [vmem:[#allocation30 + $0x30] sm:$0xf]
    %v3025 = vld [vmem:[#allocation30 + $0x34] sm:$0xf]
    %v3026 = vld [vmem:[#allocation30 + $0x38] sm:$0xf]
    %v3027 = vld [vmem:[#allocation30 + $0x3c] sm:$0xf]
    %v3028 = vpack.c.bf16 %v3011, %v3010
    %v3045 = vunpack.c.l.b16 %v3012
    %v3046 = vunpack.c.l.b16 %v3013
    %v3047 = vunpack.c.l.b16 %v3014
    %v3048 = vunpack.c.l.b16 %v3015
    %v3049 = vunpack.c.l.b16 %v3016
    %v3050 = vunpack.c.l.b16 %v3017
    %v3051 = vunpack.c.l.b16 %v3018
    %v3052 = vunpack.c.l.b16 %v3019
    %v3053 = vunpack.c.l.b16 %v3020
    %v3054 = vunpack.c.l.b16 %v3021
    %v3055 = vunpack.c.l.b16 %v3022
    %v3056 = vunpack.c.l.b16 %v3023
    %v3057 = vunpack.c.l.b16 %v3024
    %v3058 = vunpack.c.l.b16 %v3025
    %v3059 = vunpack.c.l.b16 %v3026
    %v3060 = vunpack.c.l.b16 %v3027
    %v3061 = vpack.c.b16 %v3046, %v3045
    %v3062 = vpack.c.b16 %v3048, %v3047
    %v3063 = vpack.c.b16 %v3050, %v3049
    %v3064 = vpack.c.b16 %v3052, %v3051
    %v3065 = vpack.c.b16 %v3054, %v3053
    %v3066 = vpack.c.b16 %v3056, %v3055
    %v3067 = vpack.c.b16 %v3058, %v3057
    %v3068 = vpack.c.b16 %v3060, %v3059
    %3077 = vmatprep.subr.bf16.mxu0 0
    %3078 = vmatpush1.bf16.msra.mxu0 %v3061
    %3079 = vmatprep.subr.bf16.mxu0 0
    %3080 = vmatpush1.bf16.msra.mxu0 %v3062
    %3081 = vmatprep.subr.bf16.mxu0 0
    %3082 = vmatpush1.bf16.msra.mxu0 %v3063
    %3083 = vmatprep.subr.bf16.mxu0 0
    %3084 = vmatpush1.bf16.msra.mxu0 %v3064
    %3085 = vmatprep.subr.bf16.mxu0 0
    %3086 = vmatpush1.bf16.msra.mxu0 %v3065
    %3087 = vmatprep.subr.bf16.mxu0 0
    %3088 = vmatpush1.bf16.msra.mxu0 %v3066
    %3089 = vmatprep.subr.bf16.mxu0 0
    %3090 = vmatpush1.bf16.msra.mxu0 %v3067
    %3091 = vmatprep.subr.bf16.mxu0 0
    %3092 = vmatpush1.bf16.msra.mxu0 %v3068
    %3093 = vmatprep.subr.bf16.mxu0 0
    %3094 = vmatpush1.bf16.msra.mxu0 0
    %3095 = vmatprep.subr.bf16.mxu0 0
    %3096 = vmatpush1.bf16.msra.mxu0 0
    %3097 = vmatprep.subr.bf16.mxu0 0
    %3098 = vmatpush1.bf16.msra.mxu0 0
    %3099 = vmatprep.subr.bf16.mxu0 0
    %3100 = vmatpush1.bf16.msra.mxu0 0
    %3101 = vmatprep.subr.bf16.mxu0 0
    %3102 = vmatpush1.bf16.msra.mxu0 0
    %3103 = vmatprep.subr.bf16.mxu0 0
    %3104 = vmatpush1.bf16.msra.mxu0 0
    %3105 = vmatprep.subr.bf16.mxu0 0
    %3106 = vmatpush1.bf16.msra.mxu0 0
    %3107 = vmatprep.subr.bf16.mxu0 0
    %3108 = vmatpush1.bf16.msra.mxu0 0
    %3109 = vmatprep.mubr.bf16.mxu0 0
    %3110 = vmatmul.mubr.bf16.gmra.mrb[0].mxu0 %v3028
    %v3111 = vpop.f32.mrb[0].mxu0
    %v3112 = vadd.f32 0.0, %v3111
    %v3113 = vpop.f32.mrb[0].mxu0
    %v3114 = vpop.f32.mrb[0].mxu0
    %v3115 = vadd.f32 0.0, %v3114
    %v3116 = vpop.f32.mrb[0].mxu0
    %3117 = vdwg.mxu0
    %3118 = vst [vmem:[%s22] sm:$0xff] %v3112
    %3119 = vst [vmem:[%s22 + $0x8] sm:$0xff] %v3115
    // Predicated region
    $region158: #{text_only_forward.1} parent=1 // pred_check
      _
    $region159: #{text_only_forward.1} parent=1 // pred_check_branch
      %3121 = sbr.rel (0) target = $region161
    $region160: #{text_only_forward.1} parent=1 // pred_region
      _
    $region161: #{text_only_forward.1} parent=1 // pred_fallthru
      _
    // Predicated region
    $region162: #{text_only_forward.1} parent=1 // pred_check
      _
    $region163: #{text_only_forward.1} parent=1 // pred_check_branch
      %3123 = sbr.rel (0) target = $region165
    $region164: #{text_only_forward.1} parent=1 // pred_region
      _
    $region165: #{text_only_forward.1} parent=1 // pred_fallthru
      _
    %3124 = vsyncpa [#allocation5], 1
    %3125 = vsyncpa [#allocation7], 1
    %3126 = vsyncpa [#allocation10], 1
    %3127 = vsyncpa [#allocation13], 1
    %3128 = vsyncpa [#allocation16], 1
    %3129 = vsyncpa [#allocation19], 1
    %3130 = vsyncpa [#allocation22], 1
    %3131 = vsyncpa [#allocation25], 1
    %3132 = vsyncpa [#allocation28], 1
    %3133 = vsyncpa [#allocation31], 1

</llo_original>
